<compile_context>
chip_gen: v7x
topology: tpu7x:2x2x1
jax: 0.10.0
libtpu: 0.0.40
codegen_flags: <defaults>
</compile_context>

<pallas_src>
from functools import partial

import jax
import jax.numpy as jnp
from jax.experimental import pallas as pl
from jax.experimental.pallas import tpu as pltpu

# ----------------------------- model config (small stand-in) -----------------------------

IMG = 32            # stand-in for CLIP's 224x224 preprocess target
PATCH = 8           # stand-in for patch size 14
GRID = IMG // PATCH
N_TOK = GRID * GRID + 1     # patches + class token (17)
S_PAD = 24          # token axis padded to a multiple of 8 (f32 sublane)
WIDTH = 256         # stand-in for ViT-L/14 visual width 1024
HEADS = 4           # head dim 64, same as the real model
HEAD_DIM = WIDTH // HEADS
LAYERS = 2          # stand-in for 24
OUT_DIM = 768       # fixed by the module: forward returns [B, 768]
LN_EPS = 1e-5

CLIP_MEAN = jnp.array([0.48145466, 0.4578275, 0.40821073], jnp.float32).reshape(1, 3, 1, 1)
CLIP_STD = jnp.array([0.26862954, 0.26130258, 0.27577711], jnp.float32).reshape(1, 3, 1, 1)


# ----------------------------- fused transformer-block Pallas kernel ------------------------


def _ln_rows(x, g, b, eps=LN_EPS):
    # x: (M, W) f32, g/b: (1, W) f32
    m = jnp.mean(x, axis=-1, keepdims=True)
    v = jnp.mean(jnp.square(x - m), axis=-1, keepdims=True)
    return (x - m) * jax.lax.rsqrt(v + eps) * g + b


def _vit_block_kernel(x_ref,
                      ln1_g_ref, ln1_b_ref, qkv_w_ref, qkv_b_ref, o_w_ref, o_b_ref,
                      ln2_g_ref, ln2_b_ref, fc1_w_ref, fc1_b_ref, fc2_w_ref, fc2_b_ref,
                      o_ref, *, batch, seq, n_real, heads):
    """One full pre-LN ViT residual block, resident in VMEM.

    x_ref / o_ref: (batch*seq, W) f32 residual stream (seq is the padded token count).
    Weights are pre-transposed [K, N] bf16; biases / LN params are (1, N) f32.
    """
    width = x_ref.shape[-1]
    d = width // heads
    scale = d ** -0.5

    x = x_ref[...]                                                    # (M, W) f32

    # ---------------- attention sub-block: x += o_proj(MHA(ln_1(x))) ----------------
    h1 = _ln_rows(x, ln1_g_ref[...], ln1_b_ref[...])
    qkv = jnp.dot(h1.astype(jnp.bfloat16), qkv_w_ref[...],
                  preferred_element_type=jnp.float32) + qkv_b_ref[...]  # (M, 3W) f32

    # static mask over padded key tokens (tokens n_real..seq-1 are padding)
    key_mask = jax.lax.broadcasted_iota(jnp.int32, (1, seq), 1) < n_real

    ctx_rows = []
    for bi in range(batch):                       # static unroll: B*HEADS tiny 2-D matmuls
        r0 = bi * seq
        head_ctx = []
        for hi in range(heads):
            c0 = hi * d
            q = qkv[r0:r0 + seq, c0:c0 + d].astype(jnp.bfloat16)              # (S, d)
            k = qkv[r0:r0 + seq, width + c0:width + c0 + d].astype(jnp.bfloat16)
            v = qkv[r0:r0 + seq, 2 * width + c0:2 * width + c0 + d].astype(jnp.bfloat16)
            s = jnp.einsum("qd,kd->qk", q, k,
                           preferred_element_type=jnp.float32) * scale        # (S, S) f32
            s = jnp.where(key_mask, s, -1e30)
            s = s - jnp.max(s, axis=-1, keepdims=True)
            e = jnp.exp(s)
            p = e * pl.reciprocal(jnp.sum(e, axis=-1, keepdims=True), approx=True)
            head_ctx.append(jnp.dot(p.astype(jnp.bfloat16), v,
                                    preferred_element_type=jnp.float32))      # (S, d)
        ctx_rows.append(jnp.concatenate(head_ctx, axis=-1))                   # (S, W)
    ctx = jnp.concatenate(ctx_rows, axis=0)                                   # (M, W)

    attn_out = jnp.dot(ctx.astype(jnp.bfloat16), o_w_ref[...],
                       preferred_element_type=jnp.float32) + o_b_ref[...]
    x = x + attn_out                                                          # residual

    # ---------------- MLP sub-block: x += c_proj(quick_gelu(c_fc(ln_2(x)))) ----------------
    h2 = _ln_rows(x, ln2_g_ref[...], ln2_b_ref[...])
    m1 = jnp.dot(h2.astype(jnp.bfloat16), fc1_w_ref[...],
                 preferred_element_type=jnp.float32) + fc1_b_ref[...]
    m1 = m1 * jax.nn.sigmoid(1.702 * m1)                                      # quick_gelu
    m2 = jnp.dot(m1.astype(jnp.bfloat16), fc2_w_ref[...],
                 preferred_element_type=jnp.float32) + fc2_b_ref[...]
    o_ref[...] = x + m2                                                       # residual


def _full_spec(shape):
    nd = len(shape)
    return pl.BlockSpec(shape, lambda *_: (0,) * nd)


def vit_block(h2d, lp, *, batch):
    """One fused transformer layer.  h2d: (batch*S_PAD, WIDTH) f32 residual stream."""
    M, W = h2d.shape
    assert M == batch * S_PAD and W == WIDTH

    matmul_flops = 2 * M * W * W * (3 + 1 + 4 + 4)
    attn_flops = 2 * batch * HEADS * (2 * S_PAD * S_PAD * HEAD_DIM)
    w_bytes = 2 * (W * 3 * W + W * W + W * 4 * W + 4 * W * W)         # bf16 weights
    cost = pl.CostEstimate(
        flops=matmul_flops + attn_flops,
        transcendentals=M * 4 * W + batch * HEADS * S_PAD * S_PAD,
        bytes_accessed=w_bytes + 2 * M * W * 4,
    )

    kernel = partial(_vit_block_kernel, batch=batch, seq=S_PAD, n_real=N_TOK, heads=HEADS)
    return pl.pallas_call(
        kernel,
        out_shape=jax.ShapeDtypeStruct((M, W), jnp.float32),
        grid_spec=pltpu.PrefetchScalarGridSpec(
            num_scalar_prefetch=0,
            grid=(1,),                                  # single step: no pointless N split
            in_specs=[
                _full_spec((M, W)),                     # residual stream
                _full_spec((1, W)), _full_spec((1, W)),                 # ln_1
                _full_spec((W, 3 * W)), _full_spec((1, 3 * W)),         # fused in_proj
                _full_spec((W, W)), _full_spec((1, W)),                 # out_proj
                _full_spec((1, W)), _full_spec((1, W)),                 # ln_2
                _full_spec((W, 4 * W)), _full_spec((1, 4 * W)),         # c_fc
                _full_spec((4 * W, W)), _full_spec((1, W)),             # c_proj
            ],
            out_specs=_full_spec((M, W)),
        ),
        compiler_params=pltpu.CompilerParams(
            dimension_semantics=("arbitrary",),
            vmem_limit_bytes=64 * 1024 * 1024,
        ),
        cost_estimate=cost,
    )(h2d,
      lp["ln1_g"], lp["ln1_b"], lp["qkv_w"], lp["qkv_b"], lp["o_w"], lp["o_b"],
      lp["ln2_g"], lp["ln2_b"], lp["fc1_w"], lp["fc1_b"], lp["fc2_w"], lp["fc2_b"])


# ----------------------------- params (weights pre-transposed, bf16) ------------------------


def init_params(key):
    scale = 0.02
    keys = iter(jax.random.split(key, 4 + LAYERS * 4))

    def w_kn(k_dim, n_dim, dtype=jnp.bfloat16):   # pre-transposed [K, N]
        return (scale * jax.random.normal(next(keys), (k_dim, n_dim), jnp.float32)).astype(dtype)

    def b_1n(n_dim):
        return jnp.zeros((1, n_dim), jnp.float32)

    p = {
        # conv1 patch embedding as a [3*P*P, width] matmul, no bias (real CLIP); XLA path -> f32
        "conv_w": w_kn(3 * PATCH * PATCH, WIDTH, jnp.float32),
        "class_emb": scale * jax.random.normal(next(keys), (1, 1, WIDTH), jnp.float32),
        "pos_emb": scale * jax.random.normal(next(keys), (N_TOK, WIDTH), jnp.float32),
        "ln_pre_g": jnp.ones((WIDTH,), jnp.float32), "ln_pre_b": jnp.zeros((WIDTH,), jnp.float32),
        "ln_post_g": jnp.ones((WIDTH,), jnp.float32), "ln_post_b": jnp.zeros((WIDTH,), jnp.float32),
        # visual projection: x @ proj, no bias (real CLIP); XLA path (M = B is tiny) -> f32
        "proj_w": w_kn(WIDTH, OUT_DIM, jnp.float32),
        "layers": [],
    }
    for _ in range(LAYERS):
        p["layers"].append({
            "ln1_g": jnp.ones((1, WIDTH), jnp.float32), "ln1_b": jnp.zeros((1, WIDTH), jnp.float32),
            # fused in_proj, [q;k;v] order along the output axis (matches nn.MultiheadAttention)
            "qkv_w": w_kn(WIDTH, 3 * WIDTH), "qkv_b": b_1n(3 * WIDTH),
            "o_w": w_kn(WIDTH, WIDTH), "o_b": b_1n(WIDTH),
            "ln2_g": jnp.ones((1, WIDTH), jnp.float32), "ln2_b": jnp.zeros((1, WIDTH), jnp.float32),
            "fc1_w": w_kn(WIDTH, 4 * WIDTH), "fc1_b": b_1n(4 * WIDTH),
            "fc2_w": w_kn(4 * WIDTH, WIDTH), "fc2_b": b_1n(WIDTH),
        })
    return p


# ----------------------------- glue (plain JAX, f32) -----------------------------------------


def layer_norm(x, g, b, eps=LN_EPS):
    m = jnp.mean(x, axis=-1, keepdims=True)
    v = jnp.mean((x - m) ** 2, axis=-1, keepdims=True)
    return (x - m) * jax.lax.rsqrt(v + eps) * g + b


def preprocess(x):
    # x: [B, 3, H, W] in [-1, 1]
    B = x.shape[0]
    x = jax.image.resize(x, (B, 3, IMG, IMG), method="bicubic")
    x = (x + 1.0) / 2.0
    return (x - CLIP_MEAN) / CLIP_STD


def patchify(x):
    # [B, 3, IMG, IMG] -> non-overlapping patches [B, GRID*GRID, 3*P*P] (== stride-P conv input)
    B = x.shape[0]
    x = x.reshape(B, 3, GRID, PATCH, GRID, PATCH)
    x = x.transpose(0, 2, 4, 1, 3, 5)                 # [B, gh, gw, 3, P, P]
    return x.reshape(B, GRID * GRID, 3 * PATCH * PATCH)


@jax.jit
def _encode_image(x, p):
    x = preprocess(x)                                              # [B, 3, IMG, IMG]
    # conv1 patch embed as plain XLA dot: M = B*G*G rows is far too small for a pallas_call.
    tok = jnp.dot(patchify(x), p["conv_w"])                        # [B, G*G, W]
    B = tok.shape[0]
    cls = jnp.broadcast_to(p["class_emb"], (B, 1, WIDTH))
    h = jnp.concatenate([cls, tok], axis=1) + p["pos_emb"][None]   # [B, N_TOK, W]
    h = layer_norm(h, p["ln_pre_g"], p["ln_pre_b"])

    # pad the token axis once to S_PAD (multiple of 8 sublanes); padded keys are masked
    # inside the Pallas block kernel, so results for real tokens are unchanged.
    h = jnp.pad(h, ((0, 0), (0, S_PAD - N_TOK), (0, 0)))
    h = h.reshape(B * S_PAD, WIDTH)                                # (M, W) residual stream

    for lp in p["layers"]:
        h = vit_block(h, lp, batch=B)                              # 1 fused pallas_call / layer

    h = h.reshape(B, S_PAD, WIDTH)
    pooled = layer_norm(h[:, 0, :], p["ln_post_g"], p["ln_post_b"])  # class token
    # visual projection as plain XLA dot (M = B rows)
    return jnp.dot(pooled, p["proj_w"])                            # [B, 768] f32


def frozen_clip_image_embedder(x, params):
    """FrozenCLIPImageEmbedder.forward"""
    if isinstance(x, list):
        return jnp.zeros((1, OUT_DIM), jnp.float32)
    return _encode_image(x, params).astype(jnp.float32)


def encode(im, params):
    """FrozenCLIPImageEmbedder.encode: forward(im).unsqueeze(1)"""
    return frozen_clip_image_embedder(im, params)[:, None, :]


# ----------------------------- main -----------------------------------------------------------

if __name__ == "__main__":
    key = jax.random.PRNGKey(0)
    k_img, k_par = jax.random.split(key)

    B = 2
    x = jax.random.uniform(k_img, (B, 3, 64, 64), jnp.float32, minval=-1.0, maxval=1.0)
    params = init_params(k_par)

    out = jax.block_until_ready(frozen_clip_image_embedder(x, params))
    assert out.shape == (B, OUT_DIM), out.shape
    assert out.dtype == jnp.float32
    assert bool(jnp.isfinite(out).all())

    enc = jax.block_until_ready(encode(x, params))
    assert enc.shape == (B, 1, OUT_DIM), enc.shape

    z_list = frozen_clip_image_embedder([], params)   # list-input branch -> zeros(1, 768)
    assert z_list.shape == (1, OUT_DIM) and bool((z_list == 0).all())

    print("KERNEL_OK")
</pallas_src>

<mosaic_0001>
module attributes {stable_mosaic.version = 11 : i64} {
  func.func @_vit_block_kernel(%arg0: i32, %arg1: memref<48x256xf32, #tpu.memory_space<vmem>>, %arg2: memref<1x256xf32, #tpu.memory_space<vmem>>, %arg3: memref<1x256xf32, #tpu.memory_space<vmem>>, %arg4: memref<256x768xbf16, #tpu.memory_space<vmem>>, %arg5: memref<1x768xf32, #tpu.memory_space<vmem>>, %arg6: memref<256x256xbf16, #tpu.memory_space<vmem>>, %arg7: memref<1x256xf32, #tpu.memory_space<vmem>>, %arg8: memref<1x256xf32, #tpu.memory_space<vmem>>, %arg9: memref<1x256xf32, #tpu.memory_space<vmem>>, %arg10: memref<256x1024xbf16, #tpu.memory_space<vmem>>, %arg11: memref<1x1024xf32, #tpu.memory_space<vmem>>, %arg12: memref<1024x256xbf16, #tpu.memory_space<vmem>>, %arg13: memref<1x256xf32, #tpu.memory_space<vmem>>, %arg14: memref<48x256xf32, #tpu.memory_space<vmem>>) attributes {dimension_semantics = [#tpu.dimension_semantics<arbitrary>], iteration_bounds = array<i64: 1>, scalar_prefetch = 0 : i64, scratch_operands = 0 : i64, tpu.core_type = #tpu.core_type<tc>, window_params = [{pipeline_mode = #tpu.pipeline_mode<synchronous>, transform_indices = @transform_0, window_bounds = array<i64: 48, 256>}, {pipeline_mode = #tpu.pipeline_mode<synchronous>, transform_indices = @transform_1, window_bounds = array<i64: 1, 256>}, {pipeline_mode = #tpu.pipeline_mode<synchronous>, transform_indices = @transform_2, window_bounds = array<i64: 1, 256>}, {pipeline_mode = #tpu.pipeline_mode<synchronous>, transform_indices = @transform_3, window_bounds = array<i64: 256, 768>}, {pipeline_mode = #tpu.pipeline_mode<synchronous>, transform_indices = @transform_4, window_bounds = array<i64: 1, 768>}, {pipeline_mode = #tpu.pipeline_mode<synchronous>, transform_indices = @transform_5, window_bounds = array<i64: 256, 256>}, {pipeline_mode = #tpu.pipeline_mode<synchronous>, transform_indices = @transform_6, window_bounds = array<i64: 1, 256>}, {pipeline_mode = #tpu.pipeline_mode<synchronous>, transform_indices = @transform_7, window_bounds = array<i64: 1, 256>}, {pipeline_mode = #tpu.pipeline_mode<synchronous>, transform_indices = @transform_8, window_bounds = array<i64: 1, 256>}, {pipeline_mode = #tpu.pipeline_mode<synchronous>, transform_indices = @transform_9, window_bounds = array<i64: 256, 1024>}, {pipeline_mode = #tpu.pipeline_mode<synchronous>, transform_indices = @transform_10, window_bounds = array<i64: 1, 1024>}, {pipeline_mode = #tpu.pipeline_mode<synchronous>, transform_indices = @transform_11, window_bounds = array<i64: 1024, 256>}, {pipeline_mode = #tpu.pipeline_mode<synchronous>, transform_indices = @transform_12, window_bounds = array<i64: 1, 256>}, {pipeline_mode = #tpu.pipeline_mode<synchronous>, transform_indices = @transform_13, window_bounds = array<i64: 48, 256>}]} {
    %c0 = arith.constant 0 : index
    %c0_0 = arith.constant 0 : index
    %0 = vector.load %arg1[%c0, %c0_0] : memref<48x256xf32, #tpu.memory_space<vmem>>, vector<48x256xf32>
    %c0_1 = arith.constant 0 : index
    %c0_2 = arith.constant 0 : index
    %1 = vector.load %arg2[%c0_1, %c0_2] : memref<1x256xf32, #tpu.memory_space<vmem>>, vector<1x256xf32>
    %c0_3 = arith.constant 0 : index
    %c0_4 = arith.constant 0 : index
    %2 = vector.load %arg3[%c0_3, %c0_4] : memref<1x256xf32, #tpu.memory_space<vmem>>, vector<1x256xf32>
    %cst = arith.constant dense<0.000000e+00> : vector<48xf32>
    %3 = vector.multi_reduction <add>, %0, %cst [1] : vector<48x256xf32> to vector<48xf32>
    %4 = vector.shape_cast %3 : vector<48xf32> to vector<48x1xf32>
    %cst_5 = arith.constant 2.560000e+02 : f32
    %5 = vector.broadcast %cst_5 : f32 to vector<48x1xf32>
    %6 = arith.divf %4, %5 : vector<48x1xf32>
    %7 = vector.broadcast %6 : vector<48x1xf32> to vector<48x256xf32>
    %8 = arith.subf %0, %7 : vector<48x256xf32>
    %9 = arith.mulf %8, %8 : vector<48x256xf32>
    %cst_6 = arith.constant dense<0.000000e+00> : vector<48xf32>
    %10 = vector.multi_reduction <add>, %9, %cst_6 [1] : vector<48x256xf32> to vector<48xf32>
    %11 = vector.shape_cast %10 : vector<48xf32> to vector<48x1xf32>
    %cst_7 = arith.constant 2.560000e+02 : f32
    %12 = vector.broadcast %cst_7 : f32 to vector<48x1xf32>
    %13 = arith.divf %11, %12 : vector<48x1xf32>
    %14 = vector.broadcast %6 : vector<48x1xf32> to vector<48x256xf32>
    %15 = arith.subf %0, %14 : vector<48x256xf32>
    %cst_8 = arith.constant 9.99999974E-6 : f32
    %16 = vector.broadcast %cst_8 : f32 to vector<48x1xf32>
    %17 = arith.addf %13, %16 : vector<48x1xf32>
    %18 = math.rsqrt %17 : vector<48x1xf32>
    %19 = vector.broadcast %18 : vector<48x1xf32> to vector<48x256xf32>
    %20 = arith.mulf %15, %19 : vector<48x256xf32>
    %21 = vector.broadcast %1 : vector<1x256xf32> to vector<48x256xf32>
    %22 = arith.mulf %20, %21 : vector<48x256xf32>
    %23 = vector.broadcast %2 : vector<1x256xf32> to vector<48x256xf32>
    %24 = arith.addf %22, %23 : vector<48x256xf32>
    %25 = arith.truncf %24 : vector<48x256xf32> to vector<48x256xbf16>
    %c0_9 = arith.constant 0 : index
    %c0_10 = arith.constant 0 : index
    %26 = vector.load %arg4[%c0_9, %c0_10] : memref<256x768xbf16, #tpu.memory_space<vmem>>, vector<256x768xbf16>
    %cst_11 = arith.constant dense<0.000000e+00> : vector<48x768xf32>
    %27 = tpu.matmul %25, %26, %cst_11 {dimension_numbers = #tpu.dot_dimension_numbers<[1], [0], [0], [1], [0, 0, 1, 1], [], []>} : vector<48x256xbf16>, vector<256x768xbf16>, vector<48x768xf32> -> vector<48x768xf32>
    %c0_12 = arith.constant 0 : index
    %c0_13 = arith.constant 0 : index
    %28 = vector.load %arg5[%c0_12, %c0_13] : memref<1x768xf32, #tpu.memory_space<vmem>>, vector<1x768xf32>
    %29 = vector.broadcast %28 : vector<1x768xf32> to vector<48x768xf32>
    %30 = arith.addf %27, %29 : vector<48x768xf32>
    %31 = tpu.iota {dimensions = array<i32: 1>} : vector<1x24xi32>
    %c17_i32 = arith.constant 17 : i32
    %32 = vector.broadcast %c17_i32 : i32 to vector<1x24xi32>
    %33 = arith.cmpi slt, %31, %32 : vector<1x24xi32>
    %34 = vector.extract_strided_slice %30 {offsets = [0, 0], sizes = [24, 64], strides = [1, 1]} : vector<48x768xf32> to vector<24x64xf32>
    %35 = arith.truncf %34 : vector<24x64xf32> to vector<24x64xbf16>
    %36 = vector.extract_strided_slice %30 {offsets = [0, 256], sizes = [24, 64], strides = [1, 1]} : vector<48x768xf32> to vector<24x64xf32>
    %37 = arith.truncf %36 : vector<24x64xf32> to vector<24x64xbf16>
    %38 = vector.extract_strided_slice %30 {offsets = [0, 512], sizes = [24, 64], strides = [1, 1]} : vector<48x768xf32> to vector<24x64xf32>
    %39 = arith.truncf %38 : vector<24x64xf32> to vector<24x64xbf16>
    "tpu.trace_start"() <{level = 10 : i32, message = "qd,kd->qk"}> : () -> ()
    %cst_14 = arith.constant dense<0.000000e+00> : vector<24x24xf32>
    %40 = tpu.matmul %35, %37, %cst_14 {dimension_numbers = #tpu.dot_dimension_numbers<[1], [1], [0], [0], [0, 0, 1, 0], [], []>} : vector<24x64xbf16>, vector<24x64xbf16>, vector<24x24xf32> -> vector<24x24xf32>
    "tpu.trace_stop"() : () -> ()
    %cst_15 = arith.constant 1.250000e-01 : f32
    %41 = vector.broadcast %cst_15 : f32 to vector<24x24xf32>
    %42 = arith.mulf %40, %41 : vector<24x24xf32>
    %cst_16 = arith.constant -1.000000e+30 : f32
    %43 = vector.shape_cast %33 : vector<1x24xi1> to vector<1x24xi1>
    %44 = vector.broadcast %43 : vector<1x24xi1> to vector<24x24xi1>
    %45 = vector.broadcast %cst_16 : f32 to vector<24x24xf32>
    %46 = arith.select %44, %42, %45 : vector<24x24xi1>, vector<24x24xf32>
    %cst_17 = arith.constant dense<0xFF800000> : vector<24xf32>
    %47 = vector.multi_reduction <maximumf>, %46, %cst_17 [1] : vector<24x24xf32> to vector<24xf32>
    %48 = vector.shape_cast %47 : vector<24xf32> to vector<24x1xf32>
    %49 = vector.broadcast %48 : vector<24x1xf32> to vector<24x24xf32>
    %50 = arith.subf %46, %49 : vector<24x24xf32>
    %51 = math.exp %50 : vector<24x24xf32>
    %cst_18 = arith.constant dense<0.000000e+00> : vector<24xf32>
    %52 = vector.multi_reduction <add>, %51, %cst_18 [1] : vector<24x24xf32> to vector<24xf32>
    %53 = vector.shape_cast %52 : vector<24xf32> to vector<24x1xf32>
    %54 = tpu.reciprocal %53 {approx = true} : vector<24x1xf32> -> vector<24x1xf32>
    %55 = vector.broadcast %54 : vector<24x1xf32> to vector<24x24xf32>
    %56 = arith.mulf %51, %55 : vector<24x24xf32>
    %57 = arith.truncf %56 : vector<24x24xf32> to vector<24x24xbf16>
    %cst_19 = arith.constant dense<0.000000e+00> : vector<24x64xf32>
    %58 = tpu.matmul %57, %39, %cst_19 {dimension_numbers = #tpu.dot_dimension_numbers<[1], [0], [0], [1], [0, 0, 1, 1], [], []>} : vector<24x24xbf16>, vector<24x64xbf16>, vector<24x64xf32> -> vector<24x64xf32>
    %59 = vector.extract_strided_slice %30 {offsets = [0, 64], sizes = [24, 64], strides = [1, 1]} : vector<48x768xf32> to vector<24x64xf32>
    %60 = arith.truncf %59 : vector<24x64xf32> to vector<24x64xbf16>
    %61 = vector.extract_strided_slice %30 {offsets = [0, 320], sizes = [24, 64], strides = [1, 1]} : vector<48x768xf32> to vector<24x64xf32>
    %62 = arith.truncf %61 : vector<24x64xf32> to vector<24x64xbf16>
    %63 = vector.extract_strided_slice %30 {offsets = [0, 576], sizes = [24, 64], strides = [1, 1]} : vector<48x768xf32> to vector<24x64xf32>
    %64 = arith.truncf %63 : vector<24x64xf32> to vector<24x64xbf16>
    "tpu.trace_start"() <{level = 10 : i32, message = "qd,kd->qk"}> : () -> ()
    %cst_20 = arith.constant dense<0.000000e+00> : vector<24x24xf32>
    %65 = tpu.matmul %60, %62, %cst_20 {dimension_numbers = #tpu.dot_dimension_numbers<[1], [1], [0], [0], [0, 0, 1, 0], [], []>} : vector<24x64xbf16>, vector<24x64xbf16>, vector<24x24xf32> -> vector<24x24xf32>
    "tpu.trace_stop"() : () -> ()
    %cst_21 = arith.constant 1.250000e-01 : f32
    %66 = vector.broadcast %cst_21 : f32 to vector<24x24xf32>
    %67 = arith.mulf %65, %66 : vector<24x24xf32>
    %cst_22 = arith.constant -1.000000e+30 : f32
    %68 = vector.shape_cast %33 : vector<1x24xi1> to vector<1x24xi1>
    %69 = vector.broadcast %68 : vector<1x24xi1> to vector<24x24xi1>
    %70 = vector.broadcast %cst_22 : f32 to vector<24x24xf32>
    %71 = arith.select %69, %67, %70 : vector<24x24xi1>, vector<24x24xf32>
    %cst_23 = arith.constant dense<0xFF800000> : vector<24xf32>
    %72 = vector.multi_reduction <maximumf>, %71, %cst_23 [1] : vector<24x24xf32> to vector<24xf32>
    %73 = vector.shape_cast %72 : vector<24xf32> to vector<24x1xf32>
    %74 = vector.broadcast %73 : vector<24x1xf32> to vector<24x24xf32>
    %75 = arith.subf %71, %74 : vector<24x24xf32>
    %76 = math.exp %75 : vector<24x24xf32>
    %cst_24 = arith.constant dense<0.000000e+00> : vector<24xf32>
    %77 = vector.multi_reduction <add>, %76, %cst_24 [1] : vector<24x24xf32> to vector<24xf32>
    %78 = vector.shape_cast %77 : vector<24xf32> to vector<24x1xf32>
    %79 = tpu.reciprocal %78 {approx = true} : vector<24x1xf32> -> vector<24x1xf32>
    %80 = vector.broadcast %79 : vector<24x1xf32> to vector<24x24xf32>
    %81 = arith.mulf %76, %80 : vector<24x24xf32>
    %82 = arith.truncf %81 : vector<24x24xf32> to vector<24x24xbf16>
    %cst_25 = arith.constant dense<0.000000e+00> : vector<24x64xf32>
    %83 = tpu.matmul %82, %64, %cst_25 {dimension_numbers = #tpu.dot_dimension_numbers<[1], [0], [0], [1], [0, 0, 1, 1], [], []>} : vector<24x24xbf16>, vector<24x64xbf16>, vector<24x64xf32> -> vector<24x64xf32>
    %84 = vector.extract_strided_slice %30 {offsets = [0, 128], sizes = [24, 64], strides = [1, 1]} : vector<48x768xf32> to vector<24x64xf32>
    %85 = arith.truncf %84 : vector<24x64xf32> to vector<24x64xbf16>
    %86 = vector.extract_strided_slice %30 {offsets = [0, 384], sizes = [24, 64], strides = [1, 1]} : vector<48x768xf32> to vector<24x64xf32>
    %87 = arith.truncf %86 : vector<24x64xf32> to vector<24x64xbf16>
    %88 = vector.extract_strided_slice %30 {offsets = [0, 640], sizes = [24, 64], strides = [1, 1]} : vector<48x768xf32> to vector<24x64xf32>
    %89 = arith.truncf %88 : vector<24x64xf32> to vector<24x64xbf16>
    "tpu.trace_start"() <{level = 10 : i32, message = "qd,kd->qk"}> : () -> ()
    %cst_26 = arith.constant dense<0.000000e+00> : vector<24x24xf32>
    %90 = tpu.matmul %85, %87, %cst_26 {dimension_numbers = #tpu.dot_dimension_numbers<[1], [1], [0], [0], [0, 0, 1, 0], [], []>} : vector<24x64xbf16>, vector<24x64xbf16>, vector<24x24xf32> -> vector<24x24xf32>
    "tpu.trace_stop"() : () -> ()
    %cst_27 = arith.constant 1.250000e-01 : f32
    %91 = vector.broadcast %cst_27 : f32 to vector<24x24xf32>
    %92 = arith.mulf %90, %91 : vector<24x24xf32>
    %cst_28 = arith.constant -1.000000e+30 : f32
    %93 = vector.shape_cast %33 : vector<1x24xi1> to vector<1x24xi1>
    %94 = vector.broadcast %93 : vector<1x24xi1> to vector<24x24xi1>
    %95 = vector.broadcast %cst_28 : f32 to vector<24x24xf32>
    %96 = arith.select %94, %92, %95 : vector<24x24xi1>, vector<24x24xf32>
    %cst_29 = arith.constant dense<0xFF800000> : vector<24xf32>
    %97 = vector.multi_reduction <maximumf>, %96, %cst_29 [1] : vector<24x24xf32> to vector<24xf32>
    %98 = vector.shape_cast %97 : vector<24xf32> to vector<24x1xf32>
    %99 = vector.broadcast %98 : vector<24x1xf32> to vector<24x24xf32>
    %100 = arith.subf %96, %99 : vector<24x24xf32>
    %101 = math.exp %100 : vector<24x24xf32>
    %cst_30 = arith.constant dense<0.000000e+00> : vector<24xf32>
    %102 = vector.multi_reduction <add>, %101, %cst_30 [1] : vector<24x24xf32> to vector<24xf32>
    %103 = vector.shape_cast %102 : vector<24xf32> to vector<24x1xf32>
    %104 = tpu.reciprocal %103 {approx = true} : vector<24x1xf32> -> vector<24x1xf32>
    %105 = vector.broadcast %104 : vector<24x1xf32> to vector<24x24xf32>
    %106 = arith.mulf %101, %105 : vector<24x24xf32>
    %107 = arith.truncf %106 : vector<24x24xf32> to vector<24x24xbf16>
    %cst_31 = arith.constant dense<0.000000e+00> : vector<24x64xf32>
    %108 = tpu.matmul %107, %89, %cst_31 {dimension_numbers = #tpu.dot_dimension_numbers<[1], [0], [0], [1], [0, 0, 1, 1], [], []>} : vector<24x24xbf16>, vector<24x64xbf16>, vector<24x64xf32> -> vector<24x64xf32>
    %109 = vector.extract_strided_slice %30 {offsets = [0, 192], sizes = [24, 64], strides = [1, 1]} : vector<48x768xf32> to vector<24x64xf32>
    %110 = arith.truncf %109 : vector<24x64xf32> to vector<24x64xbf16>
    %111 = vector.extract_strided_slice %30 {offsets = [0, 448], sizes = [24, 64], strides = [1, 1]} : vector<48x768xf32> to vector<24x64xf32>
    %112 = arith.truncf %111 : vector<24x64xf32> to vector<24x64xbf16>
    %113 = vector.extract_strided_slice %30 {offsets = [0, 704], sizes = [24, 64], strides = [1, 1]} : vector<48x768xf32> to vector<24x64xf32>
    %114 = arith.truncf %113 : vector<24x64xf32> to vector<24x64xbf16>
    "tpu.trace_start"() <{level = 10 : i32, message = "qd,kd->qk"}> : () -> ()
    %cst_32 = arith.constant dense<0.000000e+00> : vector<24x24xf32>
    %115 = tpu.matmul %110, %112, %cst_32 {dimension_numbers = #tpu.dot_dimension_numbers<[1], [1], [0], [0], [0, 0, 1, 0], [], []>} : vector<24x64xbf16>, vector<24x64xbf16>, vector<24x24xf32> -> vector<24x24xf32>
    "tpu.trace_stop"() : () -> ()
    %cst_33 = arith.constant 1.250000e-01 : f32
    %116 = vector.broadcast %cst_33 : f32 to vector<24x24xf32>
    %117 = arith.mulf %115, %116 : vector<24x24xf32>
    %cst_34 = arith.constant -1.000000e+30 : f32
    %118 = vector.shape_cast %33 : vector<1x24xi1> to vector<1x24xi1>
    %119 = vector.broadcast %118 : vector<1x24xi1> to vector<24x24xi1>
    %120 = vector.broadcast %cst_34 : f32 to vector<24x24xf32>
    %121 = arith.select %119, %117, %120 : vector<24x24xi1>, vector<24x24xf32>
    %cst_35 = arith.constant dense<0xFF800000> : vector<24xf32>
    %122 = vector.multi_reduction <maximumf>, %121, %cst_35 [1] : vector<24x24xf32> to vector<24xf32>
    %123 = vector.shape_cast %122 : vector<24xf32> to vector<24x1xf32>
    %124 = vector.broadcast %123 : vector<24x1xf32> to vector<24x24xf32>
    %125 = arith.subf %121, %124 : vector<24x24xf32>
    %126 = math.exp %125 : vector<24x24xf32>
    %cst_36 = arith.constant dense<0.000000e+00> : vector<24xf32>
    %127 = vector.multi_reduction <add>, %126, %cst_36 [1] : vector<24x24xf32> to vector<24xf32>
    %128 = vector.shape_cast %127 : vector<24xf32> to vector<24x1xf32>
    %129 = tpu.reciprocal %128 {approx = true} : vector<24x1xf32> -> vector<24x1xf32>
    %130 = vector.broadcast %129 : vector<24x1xf32> to vector<24x24xf32>
    %131 = arith.mulf %126, %130 : vector<24x24xf32>
    %132 = arith.truncf %131 : vector<24x24xf32> to vector<24x24xbf16>
    %cst_37 = arith.constant dense<0.000000e+00> : vector<24x64xf32>
    %133 = tpu.matmul %132, %114, %cst_37 {dimension_numbers = #tpu.dot_dimension_numbers<[1], [0], [0], [1], [0, 0, 1, 1], [], []>} : vector<24x24xbf16>, vector<24x64xbf16>, vector<24x64xf32> -> vector<24x64xf32>
    %134 = tpu.concatenate %58, %83, %108, %133 in 1 : vector<24x64xf32>, vector<24x64xf32>, vector<24x64xf32>, vector<24x64xf32> -> vector<24x256xf32>
    %135 = vector.extract_strided_slice %30 {offsets = [24, 0], sizes = [24, 64], strides = [1, 1]} : vector<48x768xf32> to vector<24x64xf32>
    %136 = arith.truncf %135 : vector<24x64xf32> to vector<24x64xbf16>
    %137 = vector.extract_strided_slice %30 {offsets = [24, 256], sizes = [24, 64], strides = [1, 1]} : vector<48x768xf32> to vector<24x64xf32>
    %138 = arith.truncf %137 : vector<24x64xf32> to vector<24x64xbf16>
    %139 = vector.extract_strided_slice %30 {offsets = [24, 512], sizes = [24, 64], strides = [1, 1]} : vector<48x768xf32> to vector<24x64xf32>
    %140 = arith.truncf %139 : vector<24x64xf32> to vector<24x64xbf16>
    "tpu.trace_start"() <{level = 10 : i32, message = "qd,kd->qk"}> : () -> ()
    %cst_38 = arith.constant dense<0.000000e+00> : vector<24x24xf32>
    %141 = tpu.matmul %136, %138, %cst_38 {dimension_numbers = #tpu.dot_dimension_numbers<[1], [1], [0], [0], [0, 0, 1, 0], [], []>} : vector<24x64xbf16>, vector<24x64xbf16>, vector<24x24xf32> -> vector<24x24xf32>
    "tpu.trace_stop"() : () -> ()
    %cst_39 = arith.constant 1.250000e-01 : f32
    %142 = vector.broadcast %cst_39 : f32 to vector<24x24xf32>
    %143 = arith.mulf %141, %142 : vector<24x24xf32>
    %cst_40 = arith.constant -1.000000e+30 : f32
    %144 = vector.shape_cast %33 : vector<1x24xi1> to vector<1x24xi1>
    %145 = vector.broadcast %144 : vector<1x24xi1> to vector<24x24xi1>
    %146 = vector.broadcast %cst_40 : f32 to vector<24x24xf32>
    %147 = arith.select %145, %143, %146 : vector<24x24xi1>, vector<24x24xf32>
    %cst_41 = arith.constant dense<0xFF800000> : vector<24xf32>
    %148 = vector.multi_reduction <maximumf>, %147, %cst_41 [1] : vector<24x24xf32> to vector<24xf32>
    %149 = vector.shape_cast %148 : vector<24xf32> to vector<24x1xf32>
    %150 = vector.broadcast %149 : vector<24x1xf32> to vector<24x24xf32>
    %151 = arith.subf %147, %150 : vector<24x24xf32>
    %152 = math.exp %151 : vector<24x24xf32>
    %cst_42 = arith.constant dense<0.000000e+00> : vector<24xf32>
    %153 = vector.multi_reduction <add>, %152, %cst_42 [1] : vector<24x24xf32> to vector<24xf32>
    %154 = vector.shape_cast %153 : vector<24xf32> to vector<24x1xf32>
    %155 = tpu.reciprocal %154 {approx = true} : vector<24x1xf32> -> vector<24x1xf32>
    %156 = vector.broadcast %155 : vector<24x1xf32> to vector<24x24xf32>
    %157 = arith.mulf %152, %156 : vector<24x24xf32>
    %158 = arith.truncf %157 : vector<24x24xf32> to vector<24x24xbf16>
    %cst_43 = arith.constant dense<0.000000e+00> : vector<24x64xf32>
    %159 = tpu.matmul %158, %140, %cst_43 {dimension_numbers = #tpu.dot_dimension_numbers<[1], [0], [0], [1], [0, 0, 1, 1], [], []>} : vector<24x24xbf16>, vector<24x64xbf16>, vector<24x64xf32> -> vector<24x64xf32>
    %160 = vector.extract_strided_slice %30 {offsets = [24, 64], sizes = [24, 64], strides = [1, 1]} : vector<48x768xf32> to vector<24x64xf32>
    %161 = arith.truncf %160 : vector<24x64xf32> to vector<24x64xbf16>
    %162 = vector.extract_strided_slice %30 {offsets = [24, 320], sizes = [24, 64], strides = [1, 1]} : vector<48x768xf32> to vector<24x64xf32>
    %163 = arith.truncf %162 : vector<24x64xf32> to vector<24x64xbf16>
    %164 = vector.extract_strided_slice %30 {offsets = [24, 576], sizes = [24, 64], strides = [1, 1]} : vector<48x768xf32> to vector<24x64xf32>
    %165 = arith.truncf %164 : vector<24x64xf32> to vector<24x64xbf16>
    "tpu.trace_start"() <{level = 10 : i32, message = "qd,kd->qk"}> : () -> ()
    %cst_44 = arith.constant dense<0.000000e+00> : vector<24x24xf32>
    %166 = tpu.matmul %161, %163, %cst_44 {dimension_numbers = #tpu.dot_dimension_numbers<[1], [1], [0], [0], [0, 0, 1, 0], [], []>} : vector<24x64xbf16>, vector<24x64xbf16>, vector<24x24xf32> -> vector<24x24xf32>
    "tpu.trace_stop"() : () -> ()
    %cst_45 = arith.constant 1.250000e-01 : f32
    %167 = vector.broadcast %cst_45 : f32 to vector<24x24xf32>
    %168 = arith.mulf %166, %167 : vector<24x24xf32>
    %cst_46 = arith.constant -1.000000e+30 : f32
    %169 = vector.shape_cast %33 : vector<1x24xi1> to vector<1x24xi1>
    %170 = vector.broadcast %169 : vector<1x24xi1> to vector<24x24xi1>
    %171 = vector.broadcast %cst_46 : f32 to vector<24x24xf32>
    %172 = arith.select %170, %168, %171 : vector<24x24xi1>, vector<24x24xf32>
    %cst_47 = arith.constant dense<0xFF800000> : vector<24xf32>
    %173 = vector.multi_reduction <maximumf>, %172, %cst_47 [1] : vector<24x24xf32> to vector<24xf32>
    %174 = vector.shape_cast %173 : vector<24xf32> to vector<24x1xf32>
    %175 = vector.broadcast %174 : vector<24x1xf32> to vector<24x24xf32>
    %176 = arith.subf %172, %175 : vector<24x24xf32>
    %177 = math.exp %176 : vector<24x24xf32>
    %cst_48 = arith.constant dense<0.000000e+00> : vector<24xf32>
    %178 = vector.multi_reduction <add>, %177, %cst_48 [1] : vector<24x24xf32> to vector<24xf32>
    %179 = vector.shape_cast %178 : vector<24xf32> to vector<24x1xf32>
    %180 = tpu.reciprocal %179 {approx = true} : vector<24x1xf32> -> vector<24x1xf32>
    %181 = vector.broadcast %180 : vector<24x1xf32> to vector<24x24xf32>
    %182 = arith.mulf %177, %181 : vector<24x24xf32>
    %183 = arith.truncf %182 : vector<24x24xf32> to vector<24x24xbf16>
    %cst_49 = arith.constant dense<0.000000e+00> : vector<24x64xf32>
    %184 = tpu.matmul %183, %165, %cst_49 {dimension_numbers = #tpu.dot_dimension_numbers<[1], [0], [0], [1], [0, 0, 1, 1], [], []>} : vector<24x24xbf16>, vector<24x64xbf16>, vector<24x64xf32> -> vector<24x64xf32>
    %185 = vector.extract_strided_slice %30 {offsets = [24, 128], sizes = [24, 64], strides = [1, 1]} : vector<48x768xf32> to vector<24x64xf32>
    %186 = arith.truncf %185 : vector<24x64xf32> to vector<24x64xbf16>
    %187 = vector.extract_strided_slice %30 {offsets = [24, 384], sizes = [24, 64], strides = [1, 1]} : vector<48x768xf32> to vector<24x64xf32>
    %188 = arith.truncf %187 : vector<24x64xf32> to vector<24x64xbf16>
    %189 = vector.extract_strided_slice %30 {offsets = [24, 640], sizes = [24, 64], strides = [1, 1]} : vector<48x768xf32> to vector<24x64xf32>
    %190 = arith.truncf %189 : vector<24x64xf32> to vector<24x64xbf16>
    "tpu.trace_start"() <{level = 10 : i32, message = "qd,kd->qk"}> : () -> ()
    %cst_50 = arith.constant dense<0.000000e+00> : vector<24x24xf32>
    %191 = tpu.matmul %186, %188, %cst_50 {dimension_numbers = #tpu.dot_dimension_numbers<[1], [1], [0], [0], [0, 0, 1, 0], [], []>} : vector<24x64xbf16>, vector<24x64xbf16>, vector<24x24xf32> -> vector<24x24xf32>
    "tpu.trace_stop"() : () -> ()
    %cst_51 = arith.constant 1.250000e-01 : f32
    %192 = vector.broadcast %cst_51 : f32 to vector<24x24xf32>
    %193 = arith.mulf %191, %192 : vector<24x24xf32>
    %cst_52 = arith.constant -1.000000e+30 : f32
    %194 = vector.shape_cast %33 : vector<1x24xi1> to vector<1x24xi1>
    %195 = vector.broadcast %194 : vector<1x24xi1> to vector<24x24xi1>
    %196 = vector.broadcast %cst_52 : f32 to vector<24x24xf32>
    %197 = arith.select %195, %193, %196 : vector<24x24xi1>, vector<24x24xf32>
    %cst_53 = arith.constant dense<0xFF800000> : vector<24xf32>
    %198 = vector.multi_reduction <maximumf>, %197, %cst_53 [1] : vector<24x24xf32> to vector<24xf32>
    %199 = vector.shape_cast %198 : vector<24xf32> to vector<24x1xf32>
    %200 = vector.broadcast %199 : vector<24x1xf32> to vector<24x24xf32>
    %201 = arith.subf %197, %200 : vector<24x24xf32>
    %202 = math.exp %201 : vector<24x24xf32>
    %cst_54 = arith.constant dense<0.000000e+00> : vector<24xf32>
    %203 = vector.multi_reduction <add>, %202, %cst_54 [1] : vector<24x24xf32> to vector<24xf32>
    %204 = vector.shape_cast %203 : vector<24xf32> to vector<24x1xf32>
    %205 = tpu.reciprocal %204 {approx = true} : vector<24x1xf32> -> vector<24x1xf32>
    %206 = vector.broadcast %205 : vector<24x1xf32> to vector<24x24xf32>
    %207 = arith.mulf %202, %206 : vector<24x24xf32>
    %208 = arith.truncf %207 : vector<24x24xf32> to vector<24x24xbf16>
    %cst_55 = arith.constant dense<0.000000e+00> : vector<24x64xf32>
    %209 = tpu.matmul %208, %190, %cst_55 {dimension_numbers = #tpu.dot_dimension_numbers<[1], [0], [0], [1], [0, 0, 1, 1], [], []>} : vector<24x24xbf16>, vector<24x64xbf16>, vector<24x64xf32> -> vector<24x64xf32>
    %210 = vector.extract_strided_slice %30 {offsets = [24, 192], sizes = [24, 64], strides = [1, 1]} : vector<48x768xf32> to vector<24x64xf32>
    %211 = arith.truncf %210 : vector<24x64xf32> to vector<24x64xbf16>
    %212 = vector.extract_strided_slice %30 {offsets = [24, 448], sizes = [24, 64], strides = [1, 1]} : vector<48x768xf32> to vector<24x64xf32>
    %213 = arith.truncf %212 : vector<24x64xf32> to vector<24x64xbf16>
    %214 = vector.extract_strided_slice %30 {offsets = [24, 704], sizes = [24, 64], strides = [1, 1]} : vector<48x768xf32> to vector<24x64xf32>
    %215 = arith.truncf %214 : vector<24x64xf32> to vector<24x64xbf16>
    "tpu.trace_start"() <{level = 10 : i32, message = "qd,kd->qk"}> : () -> ()
    %cst_56 = arith.constant dense<0.000000e+00> : vector<24x24xf32>
    %216 = tpu.matmul %211, %213, %cst_56 {dimension_numbers = #tpu.dot_dimension_numbers<[1], [1], [0], [0], [0, 0, 1, 0], [], []>} : vector<24x64xbf16>, vector<24x64xbf16>, vector<24x24xf32> -> vector<24x24xf32>
    "tpu.trace_stop"() : () -> ()
    %cst_57 = arith.constant 1.250000e-01 : f32
    %217 = vector.broadcast %cst_57 : f32 to vector<24x24xf32>
    %218 = arith.mulf %216, %217 : vector<24x24xf32>
    %cst_58 = arith.constant -1.000000e+30 : f32
    %219 = vector.shape_cast %33 : vector<1x24xi1> to vector<1x24xi1>
    %220 = vector.broadcast %219 : vector<1x24xi1> to vector<24x24xi1>
    %221 = vector.broadcast %cst_58 : f32 to vector<24x24xf32>
    %222 = arith.select %220, %218, %221 : vector<24x24xi1>, vector<24x24xf32>
    %cst_59 = arith.constant dense<0xFF800000> : vector<24xf32>
    %223 = vector.multi_reduction <maximumf>, %222, %cst_59 [1] : vector<24x24xf32> to vector<24xf32>
    %224 = vector.shape_cast %223 : vector<24xf32> to vector<24x1xf32>
    %225 = vector.broadcast %224 : vector<24x1xf32> to vector<24x24xf32>
    %226 = arith.subf %222, %225 : vector<24x24xf32>
    %227 = math.exp %226 : vector<24x24xf32>
    %cst_60 = arith.constant dense<0.000000e+00> : vector<24xf32>
    %228 = vector.multi_reduction <add>, %227, %cst_60 [1] : vector<24x24xf32> to vector<24xf32>
    %229 = vector.shape_cast %228 : vector<24xf32> to vector<24x1xf32>
    %230 = tpu.reciprocal %229 {approx = true} : vector<24x1xf32> -> vector<24x1xf32>
    %231 = vector.broadcast %230 : vector<24x1xf32> to vector<24x24xf32>
    %232 = arith.mulf %227, %231 : vector<24x24xf32>
    %233 = arith.truncf %232 : vector<24x24xf32> to vector<24x24xbf16>
    %cst_61 = arith.constant dense<0.000000e+00> : vector<24x64xf32>
    %234 = tpu.matmul %233, %215, %cst_61 {dimension_numbers = #tpu.dot_dimension_numbers<[1], [0], [0], [1], [0, 0, 1, 1], [], []>} : vector<24x24xbf16>, vector<24x64xbf16>, vector<24x64xf32> -> vector<24x64xf32>
    %235 = tpu.concatenate %159, %184, %209, %234 in 1 : vector<24x64xf32>, vector<24x64xf32>, vector<24x64xf32>, vector<24x64xf32> -> vector<24x256xf32>
    %236 = tpu.concatenate %134, %235 in 0 : vector<24x256xf32>, vector<24x256xf32> -> vector<48x256xf32>
    %237 = arith.truncf %236 : vector<48x256xf32> to vector<48x256xbf16>
    %c0_62 = arith.constant 0 : index
    %c0_63 = arith.constant 0 : index
    %238 = vector.load %arg6[%c0_62, %c0_63] : memref<256x256xbf16, #tpu.memory_space<vmem>>, vector<256x256xbf16>
    %cst_64 = arith.constant dense<0.000000e+00> : vector<48x256xf32>
    %239 = tpu.matmul %237, %238, %cst_64 {dimension_numbers = #tpu.dot_dimension_numbers<[1], [0], [0], [1], [0, 0, 1, 1], [], []>} : vector<48x256xbf16>, vector<256x256xbf16>, vector<48x256xf32> -> vector<48x256xf32>
    %c0_65 = arith.constant 0 : index
    %c0_66 = arith.constant 0 : index
    %240 = vector.load %arg7[%c0_65, %c0_66] : memref<1x256xf32, #tpu.memory_space<vmem>>, vector<1x256xf32>
    %241 = vector.broadcast %240 : vector<1x256xf32> to vector<48x256xf32>
    %242 = arith.addf %239, %241 : vector<48x256xf32>
    %243 = arith.addf %0, %242 : vector<48x256xf32>
    %c0_67 = arith.constant 0 : index
    %c0_68 = arith.constant 0 : index
    %244 = vector.load %arg8[%c0_67, %c0_68] : memref<1x256xf32, #tpu.memory_space<vmem>>, vector<1x256xf32>
    %c0_69 = arith.constant 0 : index
    %c0_70 = arith.constant 0 : index
    %245 = vector.load %arg9[%c0_69, %c0_70] : memref<1x256xf32, #tpu.memory_space<vmem>>, vector<1x256xf32>
    %cst_71 = arith.constant dense<0.000000e+00> : vector<48xf32>
    %246 = vector.multi_reduction <add>, %243, %cst_71 [1] : vector<48x256xf32> to vector<48xf32>
    %247 = vector.shape_cast %246 : vector<48xf32> to vector<48x1xf32>
    %cst_72 = arith.constant 2.560000e+02 : f32
    %248 = vector.broadcast %cst_72 : f32 to vector<48x1xf32>
    %249 = arith.divf %247, %248 : vector<48x1xf32>
    %250 = vector.broadcast %249 : vector<48x1xf32> to vector<48x256xf32>
    %251 = arith.subf %243, %250 : vector<48x256xf32>
    %252 = arith.mulf %251, %251 : vector<48x256xf32>
    %cst_73 = arith.constant dense<0.000000e+00> : vector<48xf32>
    %253 = vector.multi_reduction <add>, %252, %cst_73 [1] : vector<48x256xf32> to vector<48xf32>
    %254 = vector.shape_cast %253 : vector<48xf32> to vector<48x1xf32>
    %cst_74 = arith.constant 2.560000e+02 : f32
    %255 = vector.broadcast %cst_74 : f32 to vector<48x1xf32>
    %256 = arith.divf %254, %255 : vector<48x1xf32>
    %257 = vector.broadcast %249 : vector<48x1xf32> to vector<48x256xf32>
    %258 = arith.subf %243, %257 : vector<48x256xf32>
    %cst_75 = arith.constant 9.99999974E-6 : f32
    %259 = vector.broadcast %cst_75 : f32 to vector<48x1xf32>
    %260 = arith.addf %256, %259 : vector<48x1xf32>
    %261 = math.rsqrt %260 : vector<48x1xf32>
    %262 = vector.broadcast %261 : vector<48x1xf32> to vector<48x256xf32>
    %263 = arith.mulf %258, %262 : vector<48x256xf32>
    %264 = vector.broadcast %244 : vector<1x256xf32> to vector<48x256xf32>
    %265 = arith.mulf %263, %264 : vector<48x256xf32>
    %266 = vector.broadcast %245 : vector<1x256xf32> to vector<48x256xf32>
    %267 = arith.addf %265, %266 : vector<48x256xf32>
    %268 = arith.truncf %267 : vector<48x256xf32> to vector<48x256xbf16>
    %c0_76 = arith.constant 0 : index
    %c0_77 = arith.constant 0 : index
    %269 = vector.load %arg10[%c0_76, %c0_77] : memref<256x1024xbf16, #tpu.memory_space<vmem>>, vector<256x1024xbf16>
    %cst_78 = arith.constant dense<0.000000e+00> : vector<48x1024xf32>
    %270 = tpu.matmul %268, %269, %cst_78 {dimension_numbers = #tpu.dot_dimension_numbers<[1], [0], [0], [1], [0, 0, 1, 1], [], []>} : vector<48x256xbf16>, vector<256x1024xbf16>, vector<48x1024xf32> -> vector<48x1024xf32>
    %c0_79 = arith.constant 0 : index
    %c0_80 = arith.constant 0 : index
    %271 = vector.load %arg11[%c0_79, %c0_80] : memref<1x1024xf32, #tpu.memory_space<vmem>>, vector<1x1024xf32>
    %272 = vector.broadcast %271 : vector<1x1024xf32> to vector<48x1024xf32>
    %273 = arith.addf %270, %272 : vector<48x1024xf32>
    %cst_81 = arith.constant 1.702000e+00 : f32
    %274 = vector.broadcast %cst_81 : f32 to vector<48x1024xf32>
    %275 = arith.mulf %274, %273 : vector<48x1024xf32>
    %276 = arith.negf %275 : vector<48x1024xf32>
    %277 = math.exp %276 : vector<48x1024xf32>
    %cst_82 = arith.constant 1.000000e+00 : f32
    %278 = vector.broadcast %cst_82 : f32 to vector<48x1024xf32>
    %279 = arith.addf %278, %277 : vector<48x1024xf32>
    %280 = arith.divf %278, %279 : vector<48x1024xf32>
    %281 = arith.mulf %273, %280 : vector<48x1024xf32>
    %282 = arith.truncf %281 : vector<48x1024xf32> to vector<48x1024xbf16>
    %c0_83 = arith.constant 0 : index
    %c0_84 = arith.constant 0 : index
    %283 = vector.load %arg12[%c0_83, %c0_84] : memref<1024x256xbf16, #tpu.memory_space<vmem>>, vector<1024x256xbf16>
    %cst_85 = arith.constant dense<0.000000e+00> : vector<48x256xf32>
    %284 = tpu.matmul %282, %283, %cst_85 {dimension_numbers = #tpu.dot_dimension_numbers<[1], [0], [0], [1], [0, 0, 1, 1], [], []>} : vector<48x1024xbf16>, vector<1024x256xbf16>, vector<48x256xf32> -> vector<48x256xf32>
    %c0_86 = arith.constant 0 : index
    %c0_87 = arith.constant 0 : index
    %285 = vector.load %arg13[%c0_86, %c0_87] : memref<1x256xf32, #tpu.memory_space<vmem>>, vector<1x256xf32>
    %286 = vector.broadcast %285 : vector<1x256xf32> to vector<48x256xf32>
    %287 = arith.addf %284, %286 : vector<48x256xf32>
    %288 = arith.addf %243, %287 : vector<48x256xf32>
    %c0_88 = arith.constant 0 : index
    %c0_89 = arith.constant 0 : index
    %289 = vector.load %arg14[%c0_88, %c0_89] : memref<48x256xf32, #tpu.memory_space<vmem>>, vector<48x256xf32>
    tpu.vector_store %arg14[%c0_88, %c0_89], %288 {strides = array<i32>} : memref<48x256xf32, #tpu.memory_space<vmem>>, vector<48x256xf32>,
    return
  }
  func.func @transform_0(%arg0: i32) -> (i32, i32) {
    %c0_i32 = arith.constant 0 : i32
    %c0_i32_0 = arith.constant 0 : i32
    %c0_i32_1 = arith.constant 0 : i32
    return %c0_i32, %c0_i32_0 : i32, i32
  }
  func.func @transform_1(%arg0: i32) -> (i32, i32) {
    %c0_i32 = arith.constant 0 : i32
    %c0_i32_0 = arith.constant 0 : i32
    %c0_i32_1 = arith.constant 0 : i32
    return %c0_i32, %c0_i32_0 : i32, i32
  }
  func.func @transform_2(%arg0: i32) -> (i32, i32) {
    %c0_i32 = arith.constant 0 : i32
    %c0_i32_0 = arith.constant 0 : i32
    %c0_i32_1 = arith.constant 0 : i32
    return %c0_i32, %c0_i32_0 : i32, i32
  }
  func.func @transform_3(%arg0: i32) -> (i32, i32) {
    %c0_i32 = arith.constant 0 : i32
    %c0_i32_0 = arith.constant 0 : i32
    %c0_i32_1 = arith.constant 0 : i32
    return %c0_i32, %c0_i32_0 : i32, i32
  }
  func.func @transform_4(%arg0: i32) -> (i32, i32) {
    %c0_i32 = arith.constant 0 : i32
    %c0_i32_0 = arith.constant 0 : i32
    %c0_i32_1 = arith.constant 0 : i32
    return %c0_i32, %c0_i32_0 : i32, i32
  }
  func.func @transform_5(%arg0: i32) -> (i32, i32) {
    %c0_i32 = arith.constant 0 : i32
    %c0_i32_0 = arith.constant 0 : i32
    %c0_i32_1 = arith.constant 0 : i32
    return %c0_i32, %c0_i32_0 : i32, i32
  }
  func.func @transform_6(%arg0: i32) -> (i32, i32) {
    %c0_i32 = arith.constant 0 : i32
    %c0_i32_0 = arith.constant 0 : i32
    %c0_i32_1 = arith.constant 0 : i32
    return %c0_i32, %c0_i32_0 : i32, i32
  }
  func.func @transform_7(%arg0: i32) -> (i32, i32) {
    %c0_i32 = arith.constant 0 : i32
    %c0_i32_0 = arith.constant 0 : i32
    %c0_i32_1 = arith.constant 0 : i32
    return %c0_i32, %c0_i32_0 : i32, i32
  }
  func.func @transform_8(%arg0: i32) -> (i32, i32) {
    %c0_i32 = arith.constant 0 : i32
    %c0_i32_0 = arith.constant 0 : i32
    %c0_i32_1 = arith.constant 0 : i32
    return %c0_i32, %c0_i32_0 : i32, i32
  }
  func.func @transform_9(%arg0: i32) -> (i32, i32) {
    %c0_i32 = arith.constant 0 : i32
    %c0_i32_0 = arith.constant 0 : i32
    %c0_i32_1 = arith.constant 0 : i32
    return %c0_i32, %c0_i32_0 : i32, i32
  }
  func.func @transform_10(%arg0: i32) -> (i32, i32) {
    %c0_i32 = arith.constant 0 : i32
    %c0_i32_0 = arith.constant 0 : i32
    %c0_i32_1 = arith.constant 0 : i32
    return %c0_i32, %c0_i32_0 : i32, i32
  }
  func.func @transform_11(%arg0: i32) -> (i32, i32) {
    %c0_i32 = arith.constant 0 : i32
    %c0_i32_0 = arith.constant 0 : i32
    %c0_i32_1 = arith.constant 0 : i32
    return %c0_i32, %c0_i32_0 : i32, i32
  }
  func.func @transform_12(%arg0: i32) -> (i32, i32) {
    %c0_i32 = arith.constant 0 : i32
    %c0_i32_0 = arith.constant 0 : i32
    %c0_i32_1 = arith.constant 0 : i32
    return %c0_i32, %c0_i32_0 : i32, i32
  }
  func.func @transform_13(%arg0: i32) -> (i32, i32) {
    %c0_i32 = arith.constant 0 : i32
    %c0_i32_0 = arith.constant 0 : i32
    %c0_i32_1 = arith.constant 0 : i32
    return %c0_i32, %c0_i32_0 : i32, i32
  }
}

</mosaic_0001>

<llo_original>
// kernel: _encode_image.2
$region0: #{_encode_image.2}
  #allocation0 [shape = 'u32[]', space=smem, size = 0x4, offset = 0x4, fixed_abs, tag = 'smem constant byte address 0x4 - core index']
  #allocation1 [shape = 'u32[144,128]{1,0:T(1,128)}', space=vmem, size = 0x12000, scoped, tag = 'internal scratch']
  %s0 = inlined_call_operand.hbm [shape: f32[48,256], index: 0, kind: input, shape index: {}]
  %s1 = inlined_call_operand.hbm [shape: f32[1,256], index: 1, kind: input, shape index: {}]
  %s2 = inlined_call_operand.hbm [shape: f32[1,256], index: 2, kind: input, shape index: {}]
  %s3 = inlined_call_operand.hbm [shape: bf16[256,768], index: 3, kind: input, shape index: {}]
  %s4 = inlined_call_operand.hbm [shape: f32[1,768], index: 4, kind: input, shape index: {}]
  %s5 = inlined_call_operand.hbm [shape: bf16[256,256], index: 5, kind: input, shape index: {}]
  %s6 = inlined_call_operand.hbm [shape: f32[1,256], index: 6, kind: input, shape index: {}]
  %s7 = inlined_call_operand.hbm [shape: f32[1,256], index: 7, kind: input, shape index: {}]
  %s8 = inlined_call_operand.hbm [shape: f32[1,256], index: 8, kind: input, shape index: {}]
  %s9 = inlined_call_operand.hbm [shape: bf16[256,1024], index: 9, kind: input, shape index: {}]
  %s10 = inlined_call_operand.hbm [shape: f32[1,1024], index: 10, kind: input, shape index: {}]
  %s11 = inlined_call_operand.hbm [shape: bf16[1024,256], index: 11, kind: input, shape index: {}]
  %s12 = inlined_call_operand.hbm [shape: f32[1,256], index: 12, kind: input, shape index: {}]
  %s13 = inlined_call_operand.hbm [shape: f32[48,256], index: 13, kind: output, shape index: {}]
  %s14 = sld [smem:[#allocation0]]
  $region114: #{_encode_image.2} parent=0
    _
  %s16 = ssub.s32 1, %s14
  %s17 = scalar_select 0, %s16, %s14
  $region1: #{_encode_image.2} parent=0
    #allocation2 [shape = 'u8[49152]{0}', space=vmem, size = 0xc000, scoped, tag = 'input window, operand 0, single buffered']
    #allocation3 [shape = 's32[1]{0}', space=sflag, size = 0x4, scoped, tag = 'scoped memory for _encode_image.2']
    #allocation4 [shape = 's32[1]{0}', space=sflag, size = 0x4, scoped, tag = 'scoped memory for _encode_image.2']
    #allocation5 [shape = 'u8[1024]{0}', space=vmem, size = 0x400, scoped, tag = 'input window, operand 1, single buffered']
    #allocation6 [shape = 's32[1]{0}', space=sflag, size = 0x4, scoped, tag = 'scoped memory for _encode_image.2']
    #allocation7 [shape = 'u8[1024]{0}', space=vmem, size = 0x400, scoped, tag = 'input window, operand 2, single buffered']
    #allocation8 [shape = 'u8[393216]{0}', space=vmem, size = 0x60000, scoped, tag = 'input window, operand 3, single buffered']
    #allocation9 [shape = 's32[1]{0}', space=sflag, size = 0x4, scoped, tag = 'scoped memory for _encode_image.2']
    #allocation10 [shape = 'u8[3072]{0}', space=vmem, size = 0xc00, scoped, tag = 'input window, operand 4, single buffered']
    #allocation11 [shape = 'u8[131072]{0}', space=vmem, size = 0x20000, scoped, tag = 'input window, operand 5, single buffered']
    #allocation12 [shape = 's32[1]{0}', space=sflag, size = 0x4, scoped, tag = 'scoped memory for _encode_image.2']
    #allocation13 [shape = 'u8[1024]{0}', space=vmem, size = 0x400, scoped, tag = 'input window, operand 6, single buffered']
    #allocation14 [shape = 'u8[1024]{0}', space=vmem, size = 0x400, scoped, tag = 'input window, operand 7, single buffered']
    #allocation15 [shape = 's32[1]{0}', space=sflag, size = 0x4, scoped, tag = 'scoped memory for _encode_image.2']
    #allocation16 [shape = 'u8[1024]{0}', space=vmem, size = 0x400, scoped, tag = 'input window, operand 8, single buffered']
    #allocation17 [shape = 'u8[524288]{0}', space=vmem, size = 0x80000, scoped, tag = 'input window, operand 9, single buffered']
    #allocation18 [shape = 's32[1]{0}', space=sflag, size = 0x4, scoped, tag = 'scoped memory for _encode_image.2']
    #allocation19 [shape = 'u8[4096]{0}', space=vmem, size = 0x1000, scoped, tag = 'input window, operand 10, single buffered']
    #allocation20 [shape = 'u8[524288]{0}', space=vmem, size = 0x80000, scoped, tag = 'input window, operand 11, single buffered']
    #allocation21 [shape = 's32[1]{0}', space=sflag, size = 0x4, scoped, tag = 'scoped memory for _encode_image.2']
    #allocation22 [shape = 'u8[1024]{0}', space=vmem, size = 0x400, scoped, tag = 'input window, operand 12, single buffered']
    #allocation23 [shape = 'u8[49152]{0}', space=vmem, size = 0xc000, scoped, tag = 'output window, operand 0, single buffered']
    %18 = vsyncpa [#allocation3], 0
    %19 = vsyncpa [#allocation6], 0
    %20 = vsyncpa [#allocation9], 0
    %21 = vsyncpa [#allocation12], 0
    %22 = vsyncpa [#allocation15], 0
    %23 = vsyncpa [#allocation18], 0
    %24 = vsyncpa [#allocation21], 0
    %25 = vsyncpa [#allocation4], 0
    // Predicated region
    $region2: #{_encode_image.2} parent=1 // pred_check
      _
    $region3: #{_encode_image.2} parent=1 // pred_check_branch
      %27 = sbr.rel (0) target = $region5
    $region4: #{_encode_image.2} parent=1 // pred_region
      %s29 = ssub.s32 1536, 1536
      %30 = vsyncadd [#allocation3], %s29
      %s31 = sshll.u32 [#allocation2], 4
      %s32 = int_to_ptr.vmem [resolvable:$true] %s31
      %37 = dma.hbm_to_vmem [thread:$0]  %s0, 1536, %s32, [#allocation3], 256, 256, 16
    $region5: #{_encode_image.2} parent=1 // pred_fallthru
      _
    // Predicated region
    $region6: #{_encode_image.2} parent=1 // pred_check
      _
    $region7: #{_encode_image.2} parent=1 // pred_check_branch
      %39 = sbr.rel (0) target = $region9
    $region8: #{_encode_image.2} parent=1 // pred_region
      %s41 = ssub.s32 32, 32
      %42 = vsyncadd [#allocation6], %s41
      %s44 = sshll.u32 [#allocation5], 4
      %s45 = int_to_ptr.vmem [resolvable:$true] %s44
      %47 = dma.hbm_to_vmem [thread:$0]  %s1, 32, %s45, [#allocation6]
    $region9: #{_encode_image.2} parent=1 // pred_fallthru
      _
    // Predicated region
    $region10: #{_encode_image.2} parent=1 // pred_check
      _
    $region11: #{_encode_image.2} parent=1 // pred_check_branch
      %49 = sbr.rel (0) target = $region13
    $region12: #{_encode_image.2} parent=1 // pred_region
      %s51 = ssub.s32 32, 32
      %52 = vsyncadd [#allocation6], %s51
      %s54 = sshll.u32 [#allocation7], 4
      %s55 = int_to_ptr.vmem [resolvable:$true] %s54
      %57 = dma.hbm_to_vmem [thread:$0]  %s2, 32, %s55, [#allocation6]
    $region13: #{_encode_image.2} parent=1 // pred_fallthru
      _
    // Predicated region
    $region14: #{_encode_image.2} parent=1 // pred_check
      _
    $region15: #{_encode_image.2} parent=1 // pred_check_branch
      %59 = sbr.rel (0) target = $region17
    $region16: #{_encode_image.2} parent=1 // pred_region
      %s61 = ssub.s32 12288, 12288
      %62 = vsyncadd [#allocation9], %s61
      %s63 = sshll.u32 [#allocation8], 4
      %s64 = int_to_ptr.vmem [resolvable:$true] %s63
      %69 = dma.hbm_to_vmem [thread:$0]  %s3, 12288, %s64, [#allocation9], 384, 384, 24
    $region17: #{_encode_image.2} parent=1 // pred_fallthru
      _
    // Predicated region
    $region18: #{_encode_image.2} parent=1 // pred_check
      _
    $region19: #{_encode_image.2} parent=1 // pred_check_branch
      %71 = sbr.rel (0) target = $region21
    $region20: #{_encode_image.2} parent=1 // pred_region
      %s73 = ssub.s32 96, 96
      %74 = vsyncadd [#allocation9], %s73
      %s76 = sshll.u32 [#allocation10], 4
      %s77 = int_to_ptr.vmem [resolvable:$true] %s76
      %79 = dma.hbm_to_vmem [thread:$0]  %s4, 96, %s77, [#allocation9]
    $region21: #{_encode_image.2} parent=1 // pred_fallthru
      _
    // Predicated region
    $region22: #{_encode_image.2} parent=1 // pred_check
      _
    $region23: #{_encode_image.2} parent=1 // pred_check_branch
      %81 = sbr.rel (0) target = $region25
    $region24: #{_encode_image.2} parent=1 // pred_region
      %s83 = ssub.s32 4096, 4096
      %84 = vsyncadd [#allocation12], %s83
      %s85 = sshll.u32 [#allocation11], 4
      %s86 = int_to_ptr.vmem [resolvable:$true] %s85
      %91 = dma.hbm_to_vmem [thread:$0]  %s5, 4096, %s86, [#allocation12], 128, 128, 8
    $region25: #{_encode_image.2} parent=1 // pred_fallthru
      _
    // Predicated region
    $region26: #{_encode_image.2} parent=1 // pred_check
      _
    $region27: #{_encode_image.2} parent=1 // pred_check_branch
      %93 = sbr.rel (0) target = $region29
    $region28: #{_encode_image.2} parent=1 // pred_region
      %s95 = ssub.s32 32, 32
      %96 = vsyncadd [#allocation12], %s95
      %s98 = sshll.u32 [#allocation13], 4
      %s99 = int_to_ptr.vmem [resolvable:$true] %s98
      %101 = dma.hbm_to_vmem [thread:$0]  %s6, 32, %s99, [#allocation12]
    $region29: #{_encode_image.2} parent=1 // pred_fallthru
      _
    // Predicated region
    $region30: #{_encode_image.2} parent=1 // pred_check
      _
    $region31: #{_encode_image.2} parent=1 // pred_check_branch
      %103 = sbr.rel (0) target = $region33
    $region32: #{_encode_image.2} parent=1 // pred_region
      %s105 = ssub.s32 32, 32
      %106 = vsyncadd [#allocation15], %s105
      %s108 = sshll.u32 [#allocation14], 4
      %s109 = int_to_ptr.vmem [resolvable:$true] %s108
      %111 = dma.hbm_to_vmem [thread:$0]  %s7, 32, %s109, [#allocation15]
    $region33: #{_encode_image.2} parent=1 // pred_fallthru
      _
    // Predicated region
    $region34: #{_encode_image.2} parent=1 // pred_check
      _
    $region35: #{_encode_image.2} parent=1 // pred_check_branch
      %113 = sbr.rel (0) target = $region37
    $region36: #{_encode_image.2} parent=1 // pred_region
      %s115 = ssub.s32 32, 32
      %116 = vsyncadd [#allocation15], %s115
      %s118 = sshll.u32 [#allocation16], 4
      %s119 = int_to_ptr.vmem [resolvable:$true] %s118
      %121 = dma.hbm_to_vmem [thread:$0]  %s8, 32, %s119, [#allocation15]
    $region37: #{_encode_image.2} parent=1 // pred_fallthru
      _
    // Predicated region
    $region38: #{_encode_image.2} parent=1 // pred_check
      _
    $region39: #{_encode_image.2} parent=1 // pred_check_branch
      %123 = sbr.rel (0) target = $region41
    $region40: #{_encode_image.2} parent=1 // pred_region
      %s125 = ssub.s32 16384, 16384
      %126 = vsyncadd [#allocation18], %s125
      %s127 = sshll.u32 [#allocation17], 4
      %s128 = int_to_ptr.vmem [resolvable:$true] %s127
      %133 = dma.hbm_to_vmem [thread:$0]  %s9, 16384, %s128, [#allocation18], 512, 512, 32
    $region41: #{_encode_image.2} parent=1 // pred_fallthru
      _
    // Predicated region
    $region42: #{_encode_image.2} parent=1 // pred_check
      _
    $region43: #{_encode_image.2} parent=1 // pred_check_branch
      %135 = sbr.rel (0) target = $region45
    $region44: #{_encode_image.2} parent=1 // pred_region
      %s137 = ssub.s32 128, 128
      %138 = vsyncadd [#allocation18], %s137
      %s140 = sshll.u32 [#allocation19], 4
      %s141 = int_to_ptr.vmem [resolvable:$true] %s140
      %143 = dma.hbm_to_vmem [thread:$0]  %s10, 128, %s141, [#allocation18]
    $region45: #{_encode_image.2} parent=1 // pred_fallthru
      _
    // Predicated region
    $region46: #{_encode_image.2} parent=1 // pred_check
      _
    $region47: #{_encode_image.2} parent=1 // pred_check_branch
      %145 = sbr.rel (0) target = $region49
    $region48: #{_encode_image.2} parent=1 // pred_region
      %s147 = ssub.s32 16384, 16384
      %148 = vsyncadd [#allocation21], %s147
      %s149 = sshll.u32 [#allocation20], 4
      %s150 = int_to_ptr.vmem [resolvable:$true] %s149
      %155 = dma.hbm_to_vmem [thread:$0]  %s11, 16384, %s150, [#allocation21], 128, 128, 8
    $region49: #{_encode_image.2} parent=1 // pred_fallthru
      _
    // Predicated region
    $region50: #{_encode_image.2} parent=1 // pred_check
      _
    $region51: #{_encode_image.2} parent=1 // pred_check_branch
      %157 = sbr.rel (0) target = $region53
    $region52: #{_encode_image.2} parent=1 // pred_region
      %s159 = ssub.s32 32, 32
      %160 = vsyncadd [#allocation21], %s159
      %s162 = sshll.u32 [#allocation22], 4
      %s163 = int_to_ptr.vmem [resolvable:$true] %s162
      %165 = dma.hbm_to_vmem [thread:$0]  %s12, 32, %s163, [#allocation21]
    $region53: #{_encode_image.2} parent=1 // pred_fallthru
      _
    // Predicated region
    $region54: #{_encode_image.2} parent=1 // pred_check
      _
    $region55: #{_encode_image.2} parent=1 // pred_check_branch
      %167 = sbr.rel (0) target = $region57
    $region56: #{_encode_image.2} parent=1 // pred_region
      %168 = dma.done [#allocation3], 1536
    $region57: #{_encode_image.2} parent=1 // pred_fallthru
      _
    // Predicated region
    $region58: #{_encode_image.2} parent=1 // pred_check
      _
    $region59: #{_encode_image.2} parent=1 // pred_check_branch
      %170 = sbr.rel (0) target = $region61
    $region60: #{_encode_image.2} parent=1 // pred_region
      %171 = dma.done [#allocation6], 32
    $region61: #{_encode_image.2} parent=1 // pred_fallthru
      _
    // Predicated region
    $region62: #{_encode_image.2} parent=1 // pred_check
      _
    $region63: #{_encode_image.2} parent=1 // pred_check_branch
      %173 = sbr.rel (0) target = $region65
    $region64: #{_encode_image.2} parent=1 // pred_region
      %174 = dma.done [#allocation6], 32
    $region65: #{_encode_image.2} parent=1 // pred_fallthru
      _
    // Predicated region
    $region66: #{_encode_image.2} parent=1 // pred_check
      _
    $region67: #{_encode_image.2} parent=1 // pred_check_branch
      %176 = sbr.rel (0) target = $region69
    $region68: #{_encode_image.2} parent=1 // pred_region
      %177 = dma.done [#allocation9], 12288
    $region69: #{_encode_image.2} parent=1 // pred_fallthru
      _
    // Predicated region
    $region70: #{_encode_image.2} parent=1 // pred_check
      _
    $region71: #{_encode_image.2} parent=1 // pred_check_branch
      %179 = sbr.rel (0) target = $region73
    $region72: #{_encode_image.2} parent=1 // pred_region
      %180 = dma.done [#allocation9], 96
    $region73: #{_encode_image.2} parent=1 // pred_fallthru
      _
    // Predicated region
    $region74: #{_encode_image.2} parent=1 // pred_check
      _
    $region75: #{_encode_image.2} parent=1 // pred_check_branch
      %182 = sbr.rel (0) target = $region77
    $region76: #{_encode_image.2} parent=1 // pred_region
      %183 = dma.done [#allocation12], 4096
    $region77: #{_encode_image.2} parent=1 // pred_fallthru
      _
    // Predicated region
    $region78: #{_encode_image.2} parent=1 // pred_check
      _
    $region79: #{_encode_image.2} parent=1 // pred_check_branch
      %185 = sbr.rel (0) target = $region81
    $region80: #{_encode_image.2} parent=1 // pred_region
      %186 = dma.done [#allocation12], 32
    $region81: #{_encode_image.2} parent=1 // pred_fallthru
      _
    // Predicated region
    $region82: #{_encode_image.2} parent=1 // pred_check
      _
    $region83: #{_encode_image.2} parent=1 // pred_check_branch
      %188 = sbr.rel (0) target = $region85
    $region84: #{_encode_image.2} parent=1 // pred_region
      %189 = dma.done [#allocation15], 32
    $region85: #{_encode_image.2} parent=1 // pred_fallthru
      _
    // Predicated region
    $region86: #{_encode_image.2} parent=1 // pred_check
      _
    $region87: #{_encode_image.2} parent=1 // pred_check_branch
      %191 = sbr.rel (0) target = $region89
    $region88: #{_encode_image.2} parent=1 // pred_region
      %192 = dma.done [#allocation15], 32
    $region89: #{_encode_image.2} parent=1 // pred_fallthru
      _
    // Predicated region
    $region90: #{_encode_image.2} parent=1 // pred_check
      _
    $region91: #{_encode_image.2} parent=1 // pred_check_branch
      %194 = sbr.rel (0) target = $region93
    $region92: #{_encode_image.2} parent=1 // pred_region
      %195 = dma.done [#allocation18], 16384
    $region93: #{_encode_image.2} parent=1 // pred_fallthru
      _
    // Predicated region
    $region94: #{_encode_image.2} parent=1 // pred_check
      _
    $region95: #{_encode_image.2} parent=1 // pred_check_branch
      %197 = sbr.rel (0) target = $region97
    $region96: #{_encode_image.2} parent=1 // pred_region
      %198 = dma.done [#allocation18], 128
    $region97: #{_encode_image.2} parent=1 // pred_fallthru
      _
    // Predicated region
    $region98: #{_encode_image.2} parent=1 // pred_check
      _
    $region99: #{_encode_image.2} parent=1 // pred_check_branch
      %200 = sbr.rel (0) target = $region101
    $region100: #{_encode_image.2} parent=1 // pred_region
      %201 = dma.done [#allocation21], 16384
    $region101: #{_encode_image.2} parent=1 // pred_fallthru
      _
    // Predicated region
    $region102: #{_encode_image.2} parent=1 // pred_check
      _
    $region103: #{_encode_image.2} parent=1 // pred_check_branch
      %203 = sbr.rel (0) target = $region105
    $region104: #{_encode_image.2} parent=1 // pred_region
      %204 = dma.done [#allocation21], 32
    $region105: #{_encode_image.2} parent=1 // pred_fallthru
      _
    %v206 = vld [vmem:[#allocation2] sm:$0xff]
    %v207 = vld [vmem:[#allocation2 + $0x8] sm:$0xff]
    %v208 = vld [vmem:[#allocation2 + $0x10] sm:$0xff]
    %v209 = vld [vmem:[#allocation2 + $0x18] sm:$0xff]
    %v210 = vld [vmem:[#allocation2 + $0x20] sm:$0xff]
    %v211 = vld [vmem:[#allocation2 + $0x28] sm:$0xff]
    %v212 = vld [vmem:[#allocation2 + $0x30] sm:$0xff]
    %v213 = vld [vmem:[#allocation2 + $0x38] sm:$0xff]
    %v214 = vld [vmem:[#allocation2 + $0x40] sm:$0xff]
    %v215 = vld [vmem:[#allocation2 + $0x48] sm:$0xff]
    %v216 = vld [vmem:[#allocation2 + $0x50] sm:$0xff]
    %v217 = vld [vmem:[#allocation2 + $0x58] sm:$0xff]
    %v218 = vld [vmem:[#allocation5] sm:$0x3]
    %v219 = vld [vmem:[#allocation7] sm:$0x3]
    %v220 = vadd.f32 %v206, %v207
    %221 = vadd.xlane.f32.xlu0 %v220
    %v222 = vpop.xlane.xlu0 %221
    %v223 = vadd.f32 %v208, %v209
    %224 = vadd.xlane.f32.xlu0 %v223
    %v225 = vpop.xlane.xlu0 %224
    %v226 = vadd.f32 %v210, %v211
    %227 = vadd.xlane.f32.xlu0 %v226
    %v228 = vpop.xlane.xlu0 %227
    %v229 = vadd.f32 %v212, %v213
    %230 = vadd.xlane.f32.xlu0 %v229
    %v231 = vpop.xlane.xlu0 %230
    %v232 = vadd.f32 %v214, %v215
    %233 = vadd.xlane.f32.xlu0 %v232
    %v234 = vpop.xlane.xlu0 %233
    %v235 = vadd.f32 %v216, %v217
    %236 = vadd.xlane.f32.xlu0 %v235
    %v237 = vpop.xlane.xlu0 %236
    %v238 = vrcp.pop 256.0
    %v239 = vmul.f32 %v222, %v238
    %v240 = vmul.f32 %v225, %v238
    %v241 = vmul.f32 %v228, %v238
    %v242 = vmul.f32 %v231, %v238
    %v243 = vmul.f32 %v234, %v238
    %v244 = vmul.f32 %v237, %v238
    %v245 = vsub.f32 %v206, %v239
    %v246 = vsub.f32 %v207, %v239
    %v247 = vsub.f32 %v208, %v240
    %v248 = vsub.f32 %v209, %v240
    %v249 = vsub.f32 %v210, %v241
    %v250 = vsub.f32 %v211, %v241
    %v251 = vsub.f32 %v212, %v242
    %v252 = vsub.f32 %v213, %v242
    %v253 = vsub.f32 %v214, %v243
    %v254 = vsub.f32 %v215, %v243
    %v255 = vsub.f32 %v216, %v244
    %v256 = vsub.f32 %v217, %v244
    %v257 = vmul.f32 %v245, %v245
    %v258 = vmul.f32 %v246, %v246
    %v259 = vmul.f32 %v247, %v247
    %v260 = vmul.f32 %v248, %v248
    %v261 = vmul.f32 %v249, %v249
    %v262 = vmul.f32 %v250, %v250
    %v263 = vmul.f32 %v251, %v251
    %v264 = vmul.f32 %v252, %v252
    %v265 = vmul.f32 %v253, %v253
    %v266 = vmul.f32 %v254, %v254
    %v267 = vmul.f32 %v255, %v255
    %v268 = vmul.f32 %v256, %v256
    %v269 = vadd.f32 %v257, %v258
    %270 = vadd.xlane.f32.xlu0 %v269
    %v271 = vpop.xlane.xlu0 %270
    %v272 = vadd.f32 %v259, %v260
    %273 = vadd.xlane.f32.xlu0 %v272
    %v274 = vpop.xlane.xlu0 %273
    %v275 = vadd.f32 %v261, %v262
    %276 = vadd.xlane.f32.xlu0 %v275
    %v277 = vpop.xlane.xlu0 %276
    %v278 = vadd.f32 %v263, %v264
    %279 = vadd.xlane.f32.xlu0 %v278
    %v280 = vpop.xlane.xlu0 %279
    %v281 = vadd.f32 %v265, %v266
    %282 = vadd.xlane.f32.xlu0 %v281
    %v283 = vpop.xlane.xlu0 %282
    %v284 = vadd.f32 %v267, %v268
    %285 = vadd.xlane.f32.xlu0 %v284
    %v286 = vpop.xlane.xlu0 %285
    %v287 = vmul.f32 %v271, %v238
    %v288 = vmul.f32 %v274, %v238
    %v289 = vmul.f32 %v277, %v238
    %v290 = vmul.f32 %v280, %v238
    %v291 = vmul.f32 %v283, %v238
    %v292 = vmul.f32 %v286, %v238
    %v293 = vadd.f32 %v287, 1e-05
    %v294 = vadd.f32 %v288, 1e-05
    %v295 = vadd.f32 %v289, 1e-05
    %v296 = vadd.f32 %v290, 1e-05
    %v297 = vadd.f32 %v291, 1e-05
    %v298 = vadd.f32 %v292, 1e-05
    %v299 = vrsqrt.pop %v293
    %v300 = vrsqrt.pop %v294
    %v301 = vrsqrt.pop %v295
    %v302 = vrsqrt.pop %v296
    %v303 = vrsqrt.pop %v297
    %v304 = vrsqrt.pop %v298
    %v305 = vmul.f32 %v245, %v299
    %v306 = vmul.f32 %v246, %v299
    %v307 = vmul.f32 %v247, %v300
    %v308 = vmul.f32 %v248, %v300
    %v309 = vmul.f32 %v249, %v301
    %v310 = vmul.f32 %v250, %v301
    %v311 = vmul.f32 %v251, %v302
    %v312 = vmul.f32 %v252, %v302
    %v313 = vmul.f32 %v253, %v303
    %v314 = vmul.f32 %v254, %v303
    %v315 = vmul.f32 %v255, %v304
    %v316 = vmul.f32 %v256, %v304
    %v318 = vlaneseq
    %v319 = vshrl.u32 %v318, 7
    %v320 = vsub.s32 0, %v319
    %v321 = vrot.slane %v218, %v320
    %v322 = vlaneseq
    %v323 = vshrl.u32 %v322, 7
    %v324 = vsub.s32 1, %v323
    %v325 = vrot.slane %v218, %v324
    %v328 = vmul.f32 %v305, %v321
    %v329 = vmul.f32 %v306, %v325
    %v330 = vmul.f32 %v307, %v321
    %v331 = vmul.f32 %v308, %v325
    %v332 = vmul.f32 %v309, %v321
    %v333 = vmul.f32 %v310, %v325
    %v334 = vmul.f32 %v311, %v321
    %v335 = vmul.f32 %v312, %v325
    %v336 = vmul.f32 %v313, %v321
    %v337 = vmul.f32 %v314, %v325
    %v338 = vmul.f32 %v315, %v321
    %v339 = vmul.f32 %v316, %v325
    %v341 = vlaneseq
    %v342 = vshrl.u32 %v341, 7
    %v343 = vsub.s32 0, %v342
    %v344 = vrot.slane %v219, %v343
    %v345 = vlaneseq
    %v346 = vshrl.u32 %v345, 7
    %v347 = vsub.s32 1, %v346
    %v348 = vrot.slane %v219, %v347
    %v351 = vadd.f32 %v328, %v344
    %v352 = vadd.f32 %v329, %v348
    %v353 = vadd.f32 %v330, %v344
    %v354 = vadd.f32 %v331, %v348
    %v355 = vadd.f32 %v332, %v344
    %v356 = vadd.f32 %v333, %v348
    %v357 = vadd.f32 %v334, %v344
    %v358 = vadd.f32 %v335, %v348
    %v359 = vadd.f32 %v336, %v344
    %v360 = vadd.f32 %v337, %v348
    %v361 = vadd.f32 %v338, %v344
    %v362 = vadd.f32 %v339, %v348
    %v363 = vpack.c.bf16 %v353, %v351
    %v364 = vpack.c.bf16 %v354, %v352
    %v365 = vpack.c.bf16 %v357, %v355
    %v366 = vpack.c.bf16 %v358, %v356
    %v367 = vpack.c.bf16 %v361, %v359
    %v368 = vpack.c.bf16 %v362, %v360
    %v369 = vld [vmem:[#allocation8] sm:$0xff]
    %v370 = vld [vmem:[#allocation8 + $0x8] sm:$0xff]
    %v371 = vld [vmem:[#allocation8 + $0x10] sm:$0xff]
    %v372 = vld [vmem:[#allocation8 + $0x18] sm:$0xff]
    %v373 = vld [vmem:[#allocation8 + $0x20] sm:$0xff]
    %v374 = vld [vmem:[#allocation8 + $0x28] sm:$0xff]
    %v375 = vld [vmem:[#allocation8 + $0x30] sm:$0xff]
    %v376 = vld [vmem:[#allocation8 + $0x38] sm:$0xff]
    %v377 = vld [vmem:[#allocation8 + $0x40] sm:$0xff]
    %v378 = vld [vmem:[#allocation8 + $0x48] sm:$0xff]
    %v379 = vld [vmem:[#allocation8 + $0x50] sm:$0xff]
    %v380 = vld [vmem:[#allocation8 + $0x58] sm:$0xff]
    %v381 = vld [vmem:[#allocation8 + $0x60] sm:$0xff]
    %v382 = vld [vmem:[#allocation8 + $0x68] sm:$0xff]
    %v383 = vld [vmem:[#allocation8 + $0x70] sm:$0xff]
    %v384 = vld [vmem:[#allocation8 + $0x78] sm:$0xff]
    %v385 = vld [vmem:[#allocation8 + $0x80] sm:$0xff]
    %v386 = vld [vmem:[#allocation8 + $0x88] sm:$0xff]
    %v387 = vld [vmem:[#allocation8 + $0x90] sm:$0xff]
    %v388 = vld [vmem:[#allocation8 + $0x98] sm:$0xff]
    %v389 = vld [vmem:[#allocation8 + $0xa0] sm:$0xff]
    %v390 = vld [vmem:[#allocation8 + $0xa8] sm:$0xff]
    %v391 = vld [vmem:[#allocation8 + $0xb0] sm:$0xff]
    %v392 = vld [vmem:[#allocation8 + $0xb8] sm:$0xff]
    %v393 = vld [vmem:[#allocation8 + $0xc0] sm:$0xff]
    %v394 = vld [vmem:[#allocation8 + $0xc8] sm:$0xff]
    %v395 = vld [vmem:[#allocation8 + $0xd0] sm:$0xff]
    %v396 = vld [vmem:[#allocation8 + $0xd8] sm:$0xff]
    %v397 = vld [vmem:[#allocation8 + $0xe0] sm:$0xff]
    %v398 = vld [vmem:[#allocation8 + $0xe8] sm:$0xff]
    %v399 = vld [vmem:[#allocation8 + $0xf0] sm:$0xff]
    %v400 = vld [vmem:[#allocation8 + $0xf8] sm:$0xff]
    %v401 = vld [vmem:[#allocation8 + $0x100] sm:$0xff]
    %v402 = vld [vmem:[#allocation8 + $0x108] sm:$0xff]
    %v403 = vld [vmem:[#allocation8 + $0x110] sm:$0xff]
    %v404 = vld [vmem:[#allocation8 + $0x118] sm:$0xff]
    %v405 = vld [vmem:[#allocation8 + $0x120] sm:$0xff]
    %v406 = vld [vmem:[#allocation8 + $0x128] sm:$0xff]
    %v407 = vld [vmem:[#allocation8 + $0x130] sm:$0xff]
    %v408 = vld [vmem:[#allocation8 + $0x138] sm:$0xff]
    %v409 = vld [vmem:[#allocation8 + $0x140] sm:$0xff]
    %v410 = vld [vmem:[#allocation8 + $0x148] sm:$0xff]
    %v411 = vld [vmem:[#allocation8 + $0x150] sm:$0xff]
    %v412 = vld [vmem:[#allocation8 + $0x158] sm:$0xff]
    %v413 = vld [vmem:[#allocation8 + $0x160] sm:$0xff]
    %v414 = vld [vmem:[#allocation8 + $0x168] sm:$0xff]
    %v415 = vld [vmem:[#allocation8 + $0x170] sm:$0xff]
    %v416 = vld [vmem:[#allocation8 + $0x178] sm:$0xff]
    %v417 = vld [vmem:[#allocation8 + $0x180] sm:$0xff]
    %v418 = vld [vmem:[#allocation8 + $0x188] sm:$0xff]
    %v419 = vld [vmem:[#allocation8 + $0x190] sm:$0xff]
    %v420 = vld [vmem:[#allocation8 + $0x198] sm:$0xff]
    %v421 = vld [vmem:[#allocation8 + $0x1a0] sm:$0xff]
    %v422 = vld [vmem:[#allocation8 + $0x1a8] sm:$0xff]
    %v423 = vld [vmem:[#allocation8 + $0x1b0] sm:$0xff]
    %v424 = vld [vmem:[#allocation8 + $0x1b8] sm:$0xff]
    %v425 = vld [vmem:[#allocation8 + $0x1c0] sm:$0xff]
    %v426 = vld [vmem:[#allocation8 + $0x1c8] sm:$0xff]
    %v427 = vld [vmem:[#allocation8 + $0x1d0] sm:$0xff]
    %v428 = vld [vmem:[#allocation8 + $0x1d8] sm:$0xff]
    %v429 = vld [vmem:[#allocation8 + $0x1e0] sm:$0xff]
    %v430 = vld [vmem:[#allocation8 + $0x1e8] sm:$0xff]
    %v431 = vld [vmem:[#allocation8 + $0x1f0] sm:$0xff]
    %v432 = vld [vmem:[#allocation8 + $0x1f8] sm:$0xff]
    %v433 = vld [vmem:[#allocation8 + $0x200] sm:$0xff]
    %v434 = vld [vmem:[#allocation8 + $0x208] sm:$0xff]
    %v435 = vld [vmem:[#allocation8 + $0x210] sm:$0xff]
    %v436 = vld [vmem:[#allocation8 + $0x218] sm:$0xff]
    %v437 = vld [vmem:[#allocation8 + $0x220] sm:$0xff]
    %v438 = vld [vmem:[#allocation8 + $0x228] sm:$0xff]
    %v439 = vld [vmem:[#allocation8 + $0x230] sm:$0xff]
    %v440 = vld [vmem:[#allocation8 + $0x238] sm:$0xff]
    %v441 = vld [vmem:[#allocation8 + $0x240] sm:$0xff]
    %v442 = vld [vmem:[#allocation8 + $0x248] sm:$0xff]
    %v443 = vld [vmem:[#allocation8 + $0x250] sm:$0xff]
    %v444 = vld [vmem:[#allocation8 + $0x258] sm:$0xff]
    %v445 = vld [vmem:[#allocation8 + $0x260] sm:$0xff]
    %v446 = vld [vmem:[#allocation8 + $0x268] sm:$0xff]
    %v447 = vld [vmem:[#allocation8 + $0x270] sm:$0xff]
    %v448 = vld [vmem:[#allocation8 + $0x278] sm:$0xff]
    %v449 = vld [vmem:[#allocation8 + $0x280] sm:$0xff]
    %v450 = vld [vmem:[#allocation8 + $0x288] sm:$0xff]
    %v451 = vld [vmem:[#allocation8 + $0x290] sm:$0xff]
    %v452 = vld [vmem:[#allocation8 + $0x298] sm:$0xff]
    %v453 = vld [vmem:[#allocation8 + $0x2a0] sm:$0xff]
    %v454 = vld [vmem:[#allocation8 + $0x2a8] sm:$0xff]
    %v455 = vld [vmem:[#allocation8 + $0x2b0] sm:$0xff]
    %v456 = vld [vmem:[#allocation8 + $0x2b8] sm:$0xff]
    %v457 = vld [vmem:[#allocation8 + $0x2c0] sm:$0xff]
    %v458 = vld [vmem:[#allocation8 + $0x2c8] sm:$0xff]
    %v459 = vld [vmem:[#allocation8 + $0x2d0] sm:$0xff]
    %v460 = vld [vmem:[#allocation8 + $0x2d8] sm:$0xff]
    %v461 = vld [vmem:[#allocation8 + $0x2e0] sm:$0xff]
    %v462 = vld [vmem:[#allocation8 + $0x2e8] sm:$0xff]
    %v463 = vld [vmem:[#allocation8 + $0x2f0] sm:$0xff]
    %v464 = vld [vmem:[#allocation8 + $0x2f8] sm:$0xff]
    %v465 = vld [vmem:[#allocation10] sm:$0x3f]
    %v467 = vlaneseq
    %v468 = vshrl.u32 %v467, 7
    %v469 = vsub.s32 0, %v468
    %v470 = vrot.slane %v465, %v469
    %v471 = vlaneseq
    %v472 = vshrl.u32 %v471, 7
    %v473 = vsub.s32 1, %v472
    %v474 = vrot.slane %v465, %v473
    %v475 = vlaneseq
    %v476 = vshrl.u32 %v475, 7
    %v477 = vsub.s32 2, %v476
    %v478 = vrot.slane %v465, %v477
    %v479 = vlaneseq
    %v480 = vshrl.u32 %v479, 7
    %v481 = vsub.s32 3, %v480
    %v482 = vrot.slane %v465, %v481
    %v483 = vlaneseq
    %v484 = vshrl.u32 %v483, 7
    %v485 = vsub.s32 4, %v484
    %v486 = vrot.slane %v465, %v485
    %v487 = vlaneseq
    %v488 = vshrl.u32 %v487, 7
    %v489 = vsub.s32 5, %v488
    %v490 = vrot.slane %v465, %v489
    %v593 = vunpack.c.l.b16 %v369
    %v594 = vunpack.c.h.b16 %v369
    %v595 = vunpack.c.l.b16 %v370
    %v596 = vunpack.c.h.b16 %v370
    %v597 = vunpack.c.l.b16 %v371
    %v598 = vunpack.c.h.b16 %v371
    %v599 = vunpack.c.l.b16 %v372
    %v600 = vunpack.c.h.b16 %v372
    %v601 = vunpack.c.l.b16 %v373
    %v602 = vunpack.c.h.b16 %v373
    %v603 = vunpack.c.l.b16 %v374
    %v604 = vunpack.c.h.b16 %v374
    %v605 = vunpack.c.l.b16 %v375
    %v606 = vunpack.c.h.b16 %v375
    %v607 = vunpack.c.l.b16 %v376
    %v608 = vunpack.c.h.b16 %v376
    %v609 = vunpack.c.l.b16 %v377
    %v610 = vunpack.c.h.b16 %v377
    %v611 = vunpack.c.l.b16 %v378
    %v612 = vunpack.c.h.b16 %v378
    %v613 = vunpack.c.l.b16 %v379
    %v614 = vunpack.c.h.b16 %v379
    %v615 = vunpack.c.l.b16 %v380
    %v616 = vunpack.c.h.b16 %v380
    %v617 = vunpack.c.l.b16 %v381
    %v618 = vunpack.c.h.b16 %v381
    %v619 = vunpack.c.l.b16 %v382
    %v620 = vunpack.c.h.b16 %v382
    %v621 = vunpack.c.l.b16 %v383
    %v622 = vunpack.c.h.b16 %v383
    %v623 = vunpack.c.l.b16 %v384
    %v624 = vunpack.c.h.b16 %v384
    %v625 = vunpack.c.l.b16 %v385
    %v626 = vunpack.c.h.b16 %v385
    %v627 = vunpack.c.l.b16 %v386
    %v628 = vunpack.c.h.b16 %v386
    %v629 = vunpack.c.l.b16 %v387
    %v630 = vunpack.c.h.b16 %v387
    %v631 = vunpack.c.l.b16 %v388
    %v632 = vunpack.c.h.b16 %v388
    %v633 = vunpack.c.l.b16 %v389
    %v634 = vunpack.c.h.b16 %v389
    %v635 = vunpack.c.l.b16 %v390
    %v636 = vunpack.c.h.b16 %v390
    %v637 = vunpack.c.l.b16 %v391
    %v638 = vunpack.c.h.b16 %v391
    %v639 = vunpack.c.l.b16 %v392
    %v640 = vunpack.c.h.b16 %v392
    %v641 = vunpack.c.l.b16 %v393
    %v642 = vunpack.c.h.b16 %v393
    %v643 = vunpack.c.l.b16 %v394
    %v644 = vunpack.c.h.b16 %v394
    %v645 = vunpack.c.l.b16 %v395
    %v646 = vunpack.c.h.b16 %v395
    %v647 = vunpack.c.l.b16 %v396
    %v648 = vunpack.c.h.b16 %v396
    %v649 = vunpack.c.l.b16 %v397
    %v650 = vunpack.c.h.b16 %v397
    %v651 = vunpack.c.l.b16 %v398
    %v652 = vunpack.c.h.b16 %v398
    %v653 = vunpack.c.l.b16 %v399
    %v654 = vunpack.c.h.b16 %v399
    %v655 = vunpack.c.l.b16 %v400
    %v656 = vunpack.c.h.b16 %v400
    %v657 = vunpack.c.l.b16 %v401
    %v658 = vunpack.c.h.b16 %v401
    %v659 = vunpack.c.l.b16 %v402
    %v660 = vunpack.c.h.b16 %v402
    %v661 = vunpack.c.l.b16 %v403
    %v662 = vunpack.c.h.b16 %v403
    %v663 = vunpack.c.l.b16 %v404
    %v664 = vunpack.c.h.b16 %v404
    %v665 = vunpack.c.l.b16 %v405
    %v666 = vunpack.c.h.b16 %v405
    %v667 = vunpack.c.l.b16 %v406
    %v668 = vunpack.c.h.b16 %v406
    %v669 = vunpack.c.l.b16 %v407
    %v670 = vunpack.c.h.b16 %v407
    %v671 = vunpack.c.l.b16 %v408
    %v672 = vunpack.c.h.b16 %v408
    %v673 = vunpack.c.l.b16 %v409
    %v674 = vunpack.c.h.b16 %v409
    %v675 = vunpack.c.l.b16 %v410
    %v676 = vunpack.c.h.b16 %v410
    %v677 = vunpack.c.l.b16 %v411
    %v678 = vunpack.c.h.b16 %v411
    %v679 = vunpack.c.l.b16 %v412
    %v680 = vunpack.c.h.b16 %v412
    %v681 = vunpack.c.l.b16 %v413
    %v682 = vunpack.c.h.b16 %v413
    %v683 = vunpack.c.l.b16 %v414
    %v684 = vunpack.c.h.b16 %v414
    %v685 = vunpack.c.l.b16 %v415
    %v686 = vunpack.c.h.b16 %v415
    %v687 = vunpack.c.l.b16 %v416
    %v688 = vunpack.c.h.b16 %v416
    %v689 = vunpack.c.l.b16 %v417
    %v690 = vunpack.c.h.b16 %v417
    %v691 = vunpack.c.l.b16 %v418
    %v692 = vunpack.c.h.b16 %v418
    %v693 = vunpack.c.l.b16 %v419
    %v694 = vunpack.c.h.b16 %v419
    %v695 = vunpack.c.l.b16 %v420
    %v696 = vunpack.c.h.b16 %v420
    %v697 = vunpack.c.l.b16 %v421
    %v698 = vunpack.c.h.b16 %v421
    %v699 = vunpack.c.l.b16 %v422
    %v700 = vunpack.c.h.b16 %v422
    %v701 = vunpack.c.l.b16 %v423
    %v702 = vunpack.c.h.b16 %v423
    %v703 = vunpack.c.l.b16 %v424
    %v704 = vunpack.c.h.b16 %v424
    %v705 = vunpack.c.l.b16 %v425
    %v706 = vunpack.c.h.b16 %v425
    %v707 = vunpack.c.l.b16 %v426
    %v708 = vunpack.c.h.b16 %v426
    %v709 = vunpack.c.l.b16 %v427
    %v710 = vunpack.c.h.b16 %v427
    %v711 = vunpack.c.l.b16 %v428
    %v712 = vunpack.c.h.b16 %v428
    %v713 = vunpack.c.l.b16 %v429
    %v714 = vunpack.c.h.b16 %v429
    %v715 = vunpack.c.l.b16 %v430
    %v716 = vunpack.c.h.b16 %v430
    %v717 = vunpack.c.l.b16 %v431
    %v718 = vunpack.c.h.b16 %v431
    %v719 = vunpack.c.l.b16 %v432
    %v720 = vunpack.c.h.b16 %v432
    %v721 = vunpack.c.l.b16 %v433
    %v722 = vunpack.c.h.b16 %v433
    %v723 = vunpack.c.l.b16 %v434
    %v724 = vunpack.c.h.b16 %v434
    %v725 = vunpack.c.l.b16 %v435
    %v726 = vunpack.c.h.b16 %v435
    %v727 = vunpack.c.l.b16 %v436
    %v728 = vunpack.c.h.b16 %v436
    %v729 = vunpack.c.l.b16 %v437
    %v730 = vunpack.c.h.b16 %v437
    %v731 = vunpack.c.l.b16 %v438
    %v732 = vunpack.c.h.b16 %v438
    %v733 = vunpack.c.l.b16 %v439
    %v734 = vunpack.c.h.b16 %v439
    %v735 = vunpack.c.l.b16 %v440
    %v736 = vunpack.c.h.b16 %v440
    %v737 = vunpack.c.l.b16 %v441
    %v738 = vunpack.c.h.b16 %v441
    %v739 = vunpack.c.l.b16 %v442
    %v740 = vunpack.c.h.b16 %v442
    %v741 = vunpack.c.l.b16 %v443
    %v742 = vunpack.c.h.b16 %v443
    %v743 = vunpack.c.l.b16 %v444
    %v744 = vunpack.c.h.b16 %v444
    %v745 = vunpack.c.l.b16 %v445
    %v746 = vunpack.c.h.b16 %v445
    %v747 = vunpack.c.l.b16 %v446
    %v748 = vunpack.c.h.b16 %v446
    %v749 = vunpack.c.l.b16 %v447
    %v750 = vunpack.c.h.b16 %v447
    %v751 = vunpack.c.l.b16 %v448
    %v752 = vunpack.c.h.b16 %v448
    %v753 = vunpack.c.l.b16 %v449
    %v754 = vunpack.c.h.b16 %v449
    %v755 = vunpack.c.l.b16 %v450
    %v756 = vunpack.c.h.b16 %v450
    %v757 = vunpack.c.l.b16 %v451
    %v758 = vunpack.c.h.b16 %v451
    %v759 = vunpack.c.l.b16 %v452
    %v760 = vunpack.c.h.b16 %v452
    %v761 = vunpack.c.l.b16 %v453
    %v762 = vunpack.c.h.b16 %v453
    %v763 = vunpack.c.l.b16 %v454
    %v764 = vunpack.c.h.b16 %v454
    %v765 = vunpack.c.l.b16 %v455
    %v766 = vunpack.c.h.b16 %v455
    %v767 = vunpack.c.l.b16 %v456
    %v768 = vunpack.c.h.b16 %v456
    %v769 = vunpack.c.l.b16 %v457
    %v770 = vunpack.c.h.b16 %v457
    %v771 = vunpack.c.l.b16 %v458
    %v772 = vunpack.c.h.b16 %v458
    %v773 = vunpack.c.l.b16 %v459
    %v774 = vunpack.c.h.b16 %v459
    %v775 = vunpack.c.l.b16 %v460
    %v776 = vunpack.c.h.b16 %v460
    %v777 = vunpack.c.l.b16 %v461
    %v778 = vunpack.c.h.b16 %v461
    %v779 = vunpack.c.l.b16 %v462
    %v780 = vunpack.c.h.b16 %v462
    %v781 = vunpack.c.l.b16 %v463
    %v782 = vunpack.c.h.b16 %v463
    %v783 = vunpack.c.l.b16 %v464
    %v784 = vunpack.c.h.b16 %v464
    %v785 = vpack.c.b16 %v599, %v593
    %v786 = vpack.c.b16 %v600, %v594
    %v787 = vpack.c.b16 %v601, %v595
    %v788 = vpack.c.b16 %v602, %v596
    %v789 = vpack.c.b16 %v603, %v597
    %v790 = vpack.c.b16 %v604, %v598
    %v791 = vpack.c.b16 %v611, %v605
    %v792 = vpack.c.b16 %v612, %v606
    %v793 = vpack.c.b16 %v613, %v607
    %v794 = vpack.c.b16 %v614, %v608
    %v795 = vpack.c.b16 %v615, %v609
    %v796 = vpack.c.b16 %v616, %v610
    %v797 = vpack.c.b16 %v623, %v617
    %v798 = vpack.c.b16 %v624, %v618
    %v799 = vpack.c.b16 %v625, %v619
    %v800 = vpack.c.b16 %v626, %v620
    %v801 = vpack.c.b16 %v627, %v621
    %v802 = vpack.c.b16 %v628, %v622
    %v803 = vpack.c.b16 %v635, %v629
    %v804 = vpack.c.b16 %v636, %v630
    %v805 = vpack.c.b16 %v637, %v631
    %v806 = vpack.c.b16 %v638, %v632
    %v807 = vpack.c.b16 %v639, %v633
    %v808 = vpack.c.b16 %v640, %v634
    %v809 = vpack.c.b16 %v647, %v641
    %v810 = vpack.c.b16 %v648, %v642
    %v811 = vpack.c.b16 %v649, %v643
    %v812 = vpack.c.b16 %v650, %v644
    %v813 = vpack.c.b16 %v651, %v645
    %v814 = vpack.c.b16 %v652, %v646
    %v815 = vpack.c.b16 %v659, %v653
    %v816 = vpack.c.b16 %v660, %v654
    %v817 = vpack.c.b16 %v661, %v655
    %v818 = vpack.c.b16 %v662, %v656
    %v819 = vpack.c.b16 %v663, %v657
    %v820 = vpack.c.b16 %v664, %v658
    %v821 = vpack.c.b16 %v671, %v665
    %v822 = vpack.c.b16 %v672, %v666
    %v823 = vpack.c.b16 %v673, %v667
    %v824 = vpack.c.b16 %v674, %v668
    %v825 = vpack.c.b16 %v675, %v669
    %v826 = vpack.c.b16 %v676, %v670
    %v827 = vpack.c.b16 %v683, %v677
    %v828 = vpack.c.b16 %v684, %v678
    %v829 = vpack.c.b16 %v685, %v679
    %v830 = vpack.c.b16 %v686, %v680
    %v831 = vpack.c.b16 %v687, %v681
    %v832 = vpack.c.b16 %v688, %v682
    %v833 = vpack.c.b16 %v695, %v689
    %v834 = vpack.c.b16 %v696, %v690
    %v835 = vpack.c.b16 %v697, %v691
    %v836 = vpack.c.b16 %v698, %v692
    %v837 = vpack.c.b16 %v699, %v693
    %v838 = vpack.c.b16 %v700, %v694
    %v839 = vpack.c.b16 %v707, %v701
    %v840 = vpack.c.b16 %v708, %v702
    %v841 = vpack.c.b16 %v709, %v703
    %v842 = vpack.c.b16 %v710, %v704
    %v843 = vpack.c.b16 %v711, %v705
    %v844 = vpack.c.b16 %v712, %v706
    %v845 = vpack.c.b16 %v719, %v713
    %v846 = vpack.c.b16 %v720, %v714
    %v847 = vpack.c.b16 %v721, %v715
    %v848 = vpack.c.b16 %v722, %v716
    %v849 = vpack.c.b16 %v723, %v717
    %v850 = vpack.c.b16 %v724, %v718
    %v851 = vpack.c.b16 %v731, %v725
    %v852 = vpack.c.b16 %v732, %v726
    %v853 = vpack.c.b16 %v733, %v727
    %v854 = vpack.c.b16 %v734, %v728
    %v855 = vpack.c.b16 %v735, %v729
    %v856 = vpack.c.b16 %v736, %v730
    %v857 = vpack.c.b16 %v743, %v737
    %v858 = vpack.c.b16 %v744, %v738
    %v859 = vpack.c.b16 %v745, %v739
    %v860 = vpack.c.b16 %v746, %v740
    %v861 = vpack.c.b16 %v747, %v741
    %v862 = vpack.c.b16 %v748, %v742
    %v863 = vpack.c.b16 %v755, %v749
    %v864 = vpack.c.b16 %v756, %v750
    %v865 = vpack.c.b16 %v757, %v751
    %v866 = vpack.c.b16 %v758, %v752
    %v867 = vpack.c.b16 %v759, %v753
    %v868 = vpack.c.b16 %v760, %v754
    %v869 = vpack.c.b16 %v767, %v761
    %v870 = vpack.c.b16 %v768, %v762
    %v871 = vpack.c.b16 %v769, %v763
    %v872 = vpack.c.b16 %v770, %v764
    %v873 = vpack.c.b16 %v771, %v765
    %v874 = vpack.c.b16 %v772, %v766
    %v875 = vpack.c.b16 %v779, %v773
    %v876 = vpack.c.b16 %v780, %v774
    %v877 = vpack.c.b16 %v781, %v775
    %v878 = vpack.c.b16 %v782, %v776
    %v879 = vpack.c.b16 %v783, %v777
    %v880 = vpack.c.b16 %v784, %v778
    %977 = vmatprep.subr.bf16.mxu0 %v786
    %978 = vmatpush1.bf16.msra.mxu0 %v785
    %979 = vmatprep.subr.bf16.mxu0 %v792
    %980 = vmatpush1.bf16.msra.mxu0 %v791
    %981 = vmatprep.subr.bf16.mxu0 %v798
    %982 = vmatpush1.bf16.msra.mxu0 %v797
    %983 = vmatprep.subr.bf16.mxu0 %v804
    %984 = vmatpush1.bf16.msra.mxu0 %v803
    %985 = vmatprep.subr.bf16.mxu0 %v810
    %986 = vmatpush1.bf16.msra.mxu0 %v809
    %987 = vmatprep.subr.bf16.mxu0 %v816
    %988 = vmatpush1.bf16.msra.mxu0 %v815
    %989 = vmatprep.subr.bf16.mxu0 %v822
    %990 = vmatpush1.bf16.msra.mxu0 %v821
    %991 = vmatprep.subr.bf16.mxu0 %v828
    %992 = vmatpush1.bf16.msra.mxu0 %v827
    %993 = vmatprep.subr.bf16.mxu0 %v834
    %994 = vmatpush1.bf16.msra.mxu0 %v833
    %995 = vmatprep.subr.bf16.mxu0 %v840
    %996 = vmatpush1.bf16.msra.mxu0 %v839
    %997 = vmatprep.subr.bf16.mxu0 %v846
    %998 = vmatpush1.bf16.msra.mxu0 %v845
    %999 = vmatprep.subr.bf16.mxu0 %v852
    %1000 = vmatpush1.bf16.msra.mxu0 %v851
    %1001 = vmatprep.subr.bf16.mxu0 %v858
    %1002 = vmatpush1.bf16.msra.mxu0 %v857
    %1003 = vmatprep.subr.bf16.mxu0 %v864
    %1004 = vmatpush1.bf16.msra.mxu0 %v863
    %1005 = vmatprep.subr.bf16.mxu0 %v870
    %1006 = vmatpush1.bf16.msra.mxu0 %v869
    %1007 = vmatprep.subr.bf16.mxu0 %v876
    %1008 = vmatpush1.bf16.msra.mxu0 %v875
    %1009 = vmatprep.mubr.bf16.mxu0 %v364
    %1010 = vmatmul.mubr.bf16.gmra.mrb[0].mxu0 %v363
    %v1011 = vpop.f32.mrb[0].mxu0
    %v1012 = vadd.f32 %v470, %v1011
    %v1013 = vpop.f32.mrb[0].mxu0
    %v1014 = vadd.f32 %v474, %v1013
    %v1015 = vpop.f32.mrb[0].mxu0
    %v1016 = vadd.f32 %v470, %v1015
    %v1017 = vpop.f32.mrb[0].mxu0
    %v1018 = vadd.f32 %v474, %v1017
    %1019 = vmatprep.mubr.bf16.mxu0 %v366
    %1020 = vmatmul.mubr.bf16.gmra.mrb[0].mxu0 %v365
    %v1021 = vpop.f32.mrb[0].mxu0
    %v1022 = vadd.f32 %v470, %v1021
    %v1023 = vpop.f32.mrb[0].mxu0
    %v1024 = vadd.f32 %v474, %v1023
    %v1025 = vpop.f32.mrb[0].mxu0
    %v1026 = vadd.f32 %v470, %v1025
    %v1027 = vpop.f32.mrb[0].mxu0
    %v1028 = vadd.f32 %v474, %v1027
    %1029 = vmatprep.mubr.bf16.mxu0 %v368
    %1030 = vmatmul.mubr.bf16.gmra.mrb[0].mxu0 %v367
    %v1031 = vpop.f32.mrb[0].mxu0
    %v1032 = vadd.f32 %v470, %v1031
    %v1033 = vpop.f32.mrb[0].mxu0
    %v1034 = vadd.f32 %v474, %v1033
    %v1035 = vpop.f32.mrb[0].mxu0
    %v1036 = vadd.f32 %v470, %v1035
    %v1037 = vpop.f32.mrb[0].mxu0
    %v1038 = vadd.f32 %v474, %v1037
    %1039 = vdwg.mxu0
    %1040 = vmatprep.subr.bf16.mxu0 %v788
    %1041 = vmatpush1.bf16.msra.mxu0 %v787
    %1042 = vmatprep.subr.bf16.mxu0 %v794
    %1043 = vmatpush1.bf16.msra.mxu0 %v793
    %1044 = vmatprep.subr.bf16.mxu0 %v800
    %1045 = vmatpush1.bf16.msra.mxu0 %v799
    %1046 = vmatprep.subr.bf16.mxu0 %v806
    %1047 = vmatpush1.bf16.msra.mxu0 %v805
    %1048 = vmatprep.subr.bf16.mxu0 %v812
    %1049 = vmatpush1.bf16.msra.mxu0 %v811
    %1050 = vmatprep.subr.bf16.mxu0 %v818
    %1051 = vmatpush1.bf16.msra.mxu0 %v817
    %1052 = vmatprep.subr.bf16.mxu0 %v824
    %1053 = vmatpush1.bf16.msra.mxu0 %v823
    %1054 = vmatprep.subr.bf16.mxu0 %v830
    %1055 = vmatpush1.bf16.msra.mxu0 %v829
    %1056 = vmatprep.subr.bf16.mxu0 %v836
    %1057 = vmatpush1.bf16.msra.mxu0 %v835
    %1058 = vmatprep.subr.bf16.mxu0 %v842
    %1059 = vmatpush1.bf16.msra.mxu0 %v841
    %1060 = vmatprep.subr.bf16.mxu0 %v848
    %1061 = vmatpush1.bf16.msra.mxu0 %v847
    %1062 = vmatprep.subr.bf16.mxu0 %v854
    %1063 = vmatpush1.bf16.msra.mxu0 %v853
    %1064 = vmatprep.subr.bf16.mxu0 %v860
    %1065 = vmatpush1.bf16.msra.mxu0 %v859
    %1066 = vmatprep.subr.bf16.mxu0 %v866
    %1067 = vmatpush1.bf16.msra.mxu0 %v865
    %1068 = vmatprep.subr.bf16.mxu0 %v872
    %1069 = vmatpush1.bf16.msra.mxu0 %v871
    %1070 = vmatprep.subr.bf16.mxu0 %v878
    %1071 = vmatpush1.bf16.msra.mxu0 %v877
    %1072 = vmatprep.mubr.bf16.mxu0 %v364
    %1073 = vmatmul.mubr.bf16.gmra.mrb[0].mxu0 %v363
    %v1074 = vpop.f32.mrb[0].mxu0
    %v1075 = vadd.f32 %v478, %v1074
    %v1076 = vpop.f32.mrb[0].mxu0
    %v1077 = vadd.f32 %v482, %v1076
    %v1078 = vpop.f32.mrb[0].mxu0
    %v1079 = vadd.f32 %v478, %v1078
    %v1080 = vpop.f32.mrb[0].mxu0
    %v1081 = vadd.f32 %v482, %v1080
    %1082 = vmatprep.mubr.bf16.mxu0 %v366
    %1083 = vmatmul.mubr.bf16.gmra.mrb[0].mxu0 %v365
    %v1084 = vpop.f32.mrb[0].mxu0
    %v1085 = vadd.f32 %v478, %v1084
    %v1086 = vpop.f32.mrb[0].mxu0
    %v1087 = vadd.f32 %v482, %v1086
    %v1088 = vpop.f32.mrb[0].mxu0
    %v1089 = vadd.f32 %v478, %v1088
    %v1090 = vpop.f32.mrb[0].mxu0
    %v1091 = vadd.f32 %v482, %v1090
    %1092 = vmatprep.mubr.bf16.mxu0 %v368
    %1093 = vmatmul.mubr.bf16.gmra.mrb[0].mxu0 %v367
    %v1094 = vpop.f32.mrb[0].mxu0
    %v1095 = vadd.f32 %v478, %v1094
    %v1096 = vpop.f32.mrb[0].mxu0
    %v1097 = vadd.f32 %v482, %v1096
    %v1098 = vpop.f32.mrb[0].mxu0
    %v1099 = vadd.f32 %v478, %v1098
    %v1100 = vpop.f32.mrb[0].mxu0
    %v1101 = vadd.f32 %v482, %v1100
    %1102 = vdwg.mxu0
    %1103 = vmatprep.subr.bf16.mxu0 %v790
    %1104 = vmatpush1.bf16.msra.mxu0 %v789
    %1105 = vmatprep.subr.bf16.mxu0 %v796
    %1106 = vmatpush1.bf16.msra.mxu0 %v795
    %1107 = vmatprep.subr.bf16.mxu0 %v802
    %1108 = vmatpush1.bf16.msra.mxu0 %v801
    %1109 = vmatprep.subr.bf16.mxu0 %v808
    %1110 = vmatpush1.bf16.msra.mxu0 %v807
    %1111 = vmatprep.subr.bf16.mxu0 %v814
    %1112 = vmatpush1.bf16.msra.mxu0 %v813
    %1113 = vmatprep.subr.bf16.mxu0 %v820
    %1114 = vmatpush1.bf16.msra.mxu0 %v819
    %1115 = vmatprep.subr.bf16.mxu0 %v826
    %1116 = vmatpush1.bf16.msra.mxu0 %v825
    %1117 = vmatprep.subr.bf16.mxu0 %v832
    %1118 = vmatpush1.bf16.msra.mxu0 %v831
    %1119 = vmatprep.subr.bf16.mxu0 %v838
    %1120 = vmatpush1.bf16.msra.mxu0 %v837
    %1121 = vmatprep.subr.bf16.mxu0 %v844
    %1122 = vmatpush1.bf16.msra.mxu0 %v843
    %1123 = vmatprep.subr.bf16.mxu0 %v850
    %1124 = vmatpush1.bf16.msra.mxu0 %v849
    %1125 = vmatprep.subr.bf16.mxu0 %v856
    %1126 = vmatpush1.bf16.msra.mxu0 %v855
    %1127 = vmatprep.subr.bf16.mxu0 %v862
    %1128 = vmatpush1.bf16.msra.mxu0 %v861
    %1129 = vmatprep.subr.bf16.mxu0 %v868
    %1130 = vmatpush1.bf16.msra.mxu0 %v867
    %1131 = vmatprep.subr.bf16.mxu0 %v874
    %1132 = vmatpush1.bf16.msra.mxu0 %v873
    %1133 = vmatprep.subr.bf16.mxu0 %v880
    %1134 = vmatpush1.bf16.msra.mxu0 %v879
    %1135 = vmatprep.mubr.bf16.mxu0 %v364
    %1136 = vmatmul.mubr.bf16.gmra.mrb[0].mxu0 %v363
    %v1137 = vpop.f32.mrb[0].mxu0
    %v1138 = vadd.f32 %v486, %v1137
    %v1139 = vpop.f32.mrb[0].mxu0
    %v1140 = vadd.f32 %v490, %v1139
    %v1141 = vpop.f32.mrb[0].mxu0
    %v1142 = vadd.f32 %v486, %v1141
    %v1143 = vpop.f32.mrb[0].mxu0
    %v1144 = vadd.f32 %v490, %v1143
    %1145 = vmatprep.mubr.bf16.mxu0 %v366
    %1146 = vmatmul.mubr.bf16.gmra.mrb[0].mxu0 %v365
    %v1147 = vpop.f32.mrb[0].mxu0
    %v1148 = vadd.f32 %v486, %v1147
    %v1149 = vpop.f32.mrb[0].mxu0
    %v1150 = vadd.f32 %v490, %v1149
    %v1151 = vpop.f32.mrb[0].mxu0
    %v1152 = vadd.f32 %v486, %v1151
    %v1153 = vpop.f32.mrb[0].mxu0
    %v1154 = vadd.f32 %v490, %v1153
    %1155 = vmatprep.mubr.bf16.mxu0 %v368
    %1156 = vmatmul.mubr.bf16.gmra.mrb[0].mxu0 %v367
    %v1157 = vpop.f32.mrb[0].mxu0
    %v1158 = vadd.f32 %v486, %v1157
    %v1159 = vpop.f32.mrb[0].mxu0
    %v1160 = vadd.f32 %v490, %v1159
    %v1161 = vpop.f32.mrb[0].mxu0
    %v1162 = vadd.f32 %v486, %v1161
    %v1163 = vpop.f32.mrb[0].mxu0
    %v1164 = vadd.f32 %v490, %v1163
    %1165 = vdwg.mxu0
    %v1166 = vlaneseq
    %v1167 = vand.u32 %v1166, 127
    %vm1168 = vcmp.lt.s32.totalorder %v1167, 17
    %v1169 = vpack.c.bf16 %v1016, %v1012
    %v1170 = vpack.c.bf16 %v1022, %v1022
    %v1171 = vpack.c.bf16 %v1079, %v1075
    %v1172 = vpack.c.bf16 %v1085, %v1085
    %v1173 = vpack.c.bf16 %v1142, %v1138
    %v1174 = vpack.c.bf16 %v1148, %v1148
    %vm1175 = vcmask 523264
    %v1177 = vsel %vm1175, %v1169, 0
    %v1180 = vsel %vm1175, %v1170, 0
    %v1183 = vsel %vm1175, %v1171, 0
    %v1186 = vsel %vm1175, %v1172, 0
    %1188 = vmatprep.subr.bf16.mxu0 0
    %1189 = vmatpush1.bf16.xpose.msra.mxu0 %v1183
    %1190 = vmatprep.subr.bf16.mxu0 0
    %1191 = vmatpush1.bf16.xpose.msra.mxu0 %v1186
    %1192 = vmatprep.subr.bf16.mxu0 0
    %1193 = vmatpush1.bf16.xpose.msra.mxu0 0
    %1194 = vmatprep.subr.bf16.mxu0 0
    %1195 = vmatpush1.bf16.xpose.msra.mxu0 0
    %1196 = vmatprep.subr.bf16.mxu0 0
    %1197 = vmatpush1.bf16.xpose.msra.mxu0 0
    %1198 = vmatprep.subr.bf16.mxu0 0
    %1199 = vmatpush1.bf16.xpose.msra.mxu0 0
    %1200 = vmatprep.subr.bf16.mxu0 0
    %1201 = vmatpush1.bf16.xpose.msra.mxu0 0
    %1202 = vmatprep.subr.bf16.mxu0 0
    %1203 = vmatpush1.bf16.xpose.msra.mxu0 0
    %1204 = vmatprep.subr.bf16.mxu0 0
    %1205 = vmatpush1.bf16.xpose.msra.mxu0 0
    %1206 = vmatprep.subr.bf16.mxu0 0
    %1207 = vmatpush1.bf16.xpose.msra.mxu0 0
    %1208 = vmatprep.subr.bf16.mxu0 0
    %1209 = vmatpush1.bf16.xpose.msra.mxu0 0
    %1210 = vmatprep.subr.bf16.mxu0 0
    %1211 = vmatpush1.bf16.xpose.msra.mxu0 0
    %1212 = vmatprep.subr.bf16.mxu0 0
    %1213 = vmatpush1.bf16.xpose.msra.mxu0 0
    %1214 = vmatprep.subr.bf16.mxu0 0
    %1215 = vmatpush1.bf16.xpose.msra.mxu0 0
    %1216 = vmatprep.subr.bf16.mxu0 0
    %1217 = vmatpush1.bf16.xpose.msra.mxu0 0
    %1218 = vmatprep.subr.bf16.mxu0 0
    %1219 = vmatpush1.bf16.xpose.msra.mxu0 0
    %1220 = vmatprep.mubr.bf16.mxu0 0
    %1221 = vmatmul.mubr.bf16.gmra.mrb[0].mxu0 %v1177
    %v1222 = vpop.f32.mrb[0].mxu0
    %v1223 = vadd.f32 0.0, %v1222
    %v1224 = vpop.f32.mrb[0].mxu0
    %v1225 = vpop.f32.mrb[0].mxu0
    %v1226 = vadd.f32 0.0, %v1225
    %v1227 = vpop.f32.mrb[0].mxu0
    %1228 = vmatprep.mubr.bf16.mxu0 0
    %1229 = vmatmul.mubr.bf16.gmra.mrb[0].mxu0 %v1180
    %v1230 = vpop.f32.mrb[0].mxu0
    %v1231 = vadd.f32 0.0, %v1230
    %v1232 = vpop.f32.mrb[0].mxu0
    %v1233 = vpop.f32.mrb[0].mxu0
    %v1234 = vpop.f32.mrb[0].mxu0
    %1235 = vdwg.mxu0
    %v1236 = vmul.f32 %v1223, 0.125
    %v1237 = vmul.f32 %v1226, 0.125
    %v1238 = vmul.f32 %v1231, 0.125
    %v1239 = vsel %vm1168, 1, 0
    %vm1240 = vcmp.eq.s32.totalorder %v1239, 1
    %v1241 = vsel %vm1240, %v1236, -1e+30
    %v1242 = vsel %vm1240, %v1237, -1e+30
    %v1243 = vsel %vm1240, %v1238, -1e+30
    %vm1244 = vcmask 195584
    %v1245 = vsel %vm1244, %v1241, -inf
    %1246 = vmax.xlane.f32.xlu0 %v1245
    %v1247 = vpop.xlane.xlu0 %1246
    %v1248 = vsel %vm1244, %v1242, -inf
    %1249 = vmax.xlane.f32.xlu0 %v1248
    %v1250 = vpop.xlane.xlu0 %1249
    %v1251 = vsel %vm1244, %v1243, -inf
    %1252 = vmax.xlane.f32.xlu0 %v1251
    %v1253 = vpop.xlane.xlu0 %1252
    %v1254 = vsub.f32 %v1241, %v1247
    %v1255 = vsub.f32 %v1242, %v1250
    %v1256 = vsub.f32 %v1243, %v1253
    %v1257 = vmul.f32 %v1254, 1.442695
    %v1258 = vpow.pop %v1257
    %v1259 = vmul.f32 %v1255, 1.442695
    %v1260 = vpow.pop %v1259
    %v1261 = vmul.f32 %v1256, 1.442695
    %v1262 = vpow.pop %v1261
    %v1263 = vsel %vm1244, %v1258, 0.0
    %1264 = vadd.xlane.f32.xlu0 %v1263
    %v1265 = vpop.xlane.xlu0 %1264
    %v1266 = vsel %vm1244, %v1260, 0.0
    %1267 = vadd.xlane.f32.xlu0 %v1266
    %v1268 = vpop.xlane.xlu0 %1267
    %v1269 = vsel %vm1244, %v1262, 0.0
    %1270 = vadd.xlane.f32.xlu0 %v1269
    %v1271 = vpop.xlane.xlu0 %1270
    %v1272 = vrcp.pop %v1265
    %v1273 = vrcp.pop %v1268
    %v1274 = vrcp.pop %v1271
    %v1275 = vmul.f32 %v1258, %v1272
    %v1276 = vmul.f32 %v1260, %v1273
    %v1277 = vmul.f32 %v1262, %v1274
    %v1278 = vpack.c.bf16 %v1276, %v1275
    %v1279 = vpack.c.bf16 %v1277, %v1277
    %v1281 = vsel %vm1244, %v1278, 0
    %v1284 = vsel %vm1244, %v1279, 0
    %vm1286 = vcmask 1043456
    %v1288 = vsel %vm1286, %v1174, 0
    %1290 = vmatprep.subr.bf16.mxu0 0
    %1291 = vmatpush1.bf16.msra.mxu0 %v1173
    %1292 = vmatprep.subr.bf16.mxu0 0
    %1293 = vmatpush1.bf16.msra.mxu0 %v1288
    %1294 = vmatprep.subr.bf16.mxu0 0
    %1295 = vmatpush1.bf16.msra.mxu0 0
    %1296 = vmatprep.subr.bf16.mxu0 0
    %1297 = vmatpush1.bf16.msra.mxu0 0
    %1298 = vmatprep.subr.bf16.mxu0 0
    %1299 = vmatpush1.bf16.msra.mxu0 0
    %1300 = vmatprep.subr.bf16.mxu0 0
    %1301 = vmatpush1.bf16.msra.mxu0 0
    %1302 = vmatprep.subr.bf16.mxu0 0
    %1303 = vmatpush1.bf16.msra.mxu0 0
    %1304 = vmatprep.subr.bf16.mxu0 0
    %1305 = vmatpush1.bf16.msra.mxu0 0
    %1306 = vmatprep.subr.bf16.mxu0 0
    %1307 = vmatpush1.bf16.msra.mxu0 0
    %1308 = vmatprep.subr.bf16.mxu0 0
    %1309 = vmatpush1.bf16.msra.mxu0 0
    %1310 = vmatprep.subr.bf16.mxu0 0
    %1311 = vmatpush1.bf16.msra.mxu0 0
    %1312 = vmatprep.subr.bf16.mxu0 0
    %1313 = vmatpush1.bf16.msra.mxu0 0
    %1314 = vmatprep.subr.bf16.mxu0 0
    %1315 = vmatpush1.bf16.msra.mxu0 0
    %1316 = vmatprep.subr.bf16.mxu0 0
    %1317 = vmatpush1.bf16.msra.mxu0 0
    %1318 = vmatprep.subr.bf16.mxu0 0
    %1319 = vmatpush1.bf16.msra.mxu0 0
    %1320 = vmatprep.subr.bf16.mxu0 0
    %1321 = vmatpush1.bf16.msra.mxu0 0
    %1322 = vmatprep.mubr.bf16.mxu0 0
    %1323 = vmatmul.mubr.bf16.gmra.mrb[0].mxu0 %v1281
    %v1324 = vpop.f32.mrb[0].mxu0
    %v1325 = vadd.f32 0.0, %v1324
    %v1326 = vpop.f32.mrb[0].mxu0
    %v1327 = vpop.f32.mrb[0].mxu0
    %v1328 = vadd.f32 0.0, %v1327
    %v1329 = vpop.f32.mrb[0].mxu0
    %1330 = vmatprep.mubr.bf16.mxu0 0
    %1331 = vmatmul.mubr.bf16.gmra.mrb[0].mxu0 %v1284
    %v1332 = vpop.f32.mrb[0].mxu0
    %v1333 = vadd.f32 0.0, %v1332
    %v1334 = vpop.f32.mrb[0].mxu0
    %v1335 = vpop.f32.mrb[0].mxu0
    %v1336 = vpop.f32.mrb[0].mxu0
    %1337 = vdwg.mxu0
    %1340 = vrot.lane.b32.xlu0 %v1169, 64
    %v1341 = vpop.permute.xlu0 %1340
    %1342 = vrot.lane.b32.xlu0 %v1170, 64
    %v1343 = vpop.permute.xlu0 %1342
    %1346 = vrot.lane.b32.xlu0 %v1171, 64
    %v1347 = vpop.permute.xlu0 %1346
    %1348 = vrot.lane.b32.xlu0 %v1172, 64
    %v1349 = vpop.permute.xlu0 %1348
    %v1351 = vsel %vm1175, %v1341, 0
    %v1354 = vsel %vm1175, %v1343, 0
    %v1357 = vsel %vm1175, %v1347, 0
    %v1360 = vsel %vm1175, %v1349, 0
    %1362 = vmatprep.subr.bf16.mxu0 0
    %1363 = vmatpush1.bf16.xpose.msra.mxu0 %v1357
    %1364 = vmatprep.subr.bf16.mxu0 0
    %1365 = vmatpush1.bf16.xpose.msra.mxu0 %v1360
    %1366 = vmatprep.subr.bf16.mxu0 0
    %1367 = vmatpush1.bf16.xpose.msra.mxu0 0
    %1368 = vmatprep.subr.bf16.mxu0 0
    %1369 = vmatpush1.bf16.xpose.msra.mxu0 0
    %1370 = vmatprep.subr.bf16.mxu0 0
    %1371 = vmatpush1.bf16.xpose.msra.mxu0 0
    %1372 = vmatprep.subr.bf16.mxu0 0
    %1373 = vmatpush1.bf16.xpose.msra.mxu0 0
    %1374 = vmatprep.subr.bf16.mxu0 0
    %1375 = vmatpush1.bf16.xpose.msra.mxu0 0
    %1376 = vmatprep.subr.bf16.mxu0 0
    %1377 = vmatpush1.bf16.xpose.msra.mxu0 0
    %1378 = vmatprep.subr.bf16.mxu0 0
    %1379 = vmatpush1.bf16.xpose.msra.mxu0 0
    %1380 = vmatprep.subr.bf16.mxu0 0
    %1381 = vmatpush1.bf16.xpose.msra.mxu0 0
    %1382 = vmatprep.subr.bf16.mxu0 0
    %1383 = vmatpush1.bf16.xpose.msra.mxu0 0
    %1384 = vmatprep.subr.bf16.mxu0 0
    %1385 = vmatpush1.bf16.xpose.msra.mxu0 0
    %1386 = vmatprep.subr.bf16.mxu0 0
    %1387 = vmatpush1.bf16.xpose.msra.mxu0 0
    %1388 = vmatprep.subr.bf16.mxu0 0
    %1389 = vmatpush1.bf16.xpose.msra.mxu0 0
    %1390 = vmatprep.subr.bf16.mxu0 0
    %1391 = vmatpush1.bf16.xpose.msra.mxu0 0
    %1392 = vmatprep.subr.bf16.mxu0 0
    %1393 = vmatpush1.bf16.xpose.msra.mxu0 0
    %1394 = vmatprep.mubr.bf16.mxu0 0
    %1395 = vmatmul.mubr.bf16.gmra.mrb[0].mxu0 %v1351
    %v1396 = vpop.f32.mrb[0].mxu0
    %v1397 = vadd.f32 0.0, %v1396
    %v1398 = vpop.f32.mrb[0].mxu0
    %v1399 = vpop.f32.mrb[0].mxu0
    %v1400 = vadd.f32 0.0, %v1399
    %v1401 = vpop.f32.mrb[0].mxu0
    %1402 = vmatprep.mubr.bf16.mxu0 0
    %1403 = vmatmul.mubr.bf16.gmra.mrb[0].mxu0 %v1354
    %v1404 = vpop.f32.mrb[0].mxu0
    %v1405 = vadd.f32 0.0, %v1404
    %v1406 = vpop.f32.mrb[0].mxu0
    %v1407 = vpop.f32.mrb[0].mxu0
    %v1408 = vpop.f32.mrb[0].mxu0
    %1409 = vdwg.mxu0
    %v1410 = vmul.f32 %v1397, 0.125
    %v1411 = vmul.f32 %v1400, 0.125
    %v1412 = vmul.f32 %v1405, 0.125
    %v1413 = vsel %vm1240, %v1410, -1e+30
    %v1414 = vsel %vm1240, %v1411, -1e+30
    %v1415 = vsel %vm1240, %v1412, -1e+30
    %v1416 = vsel %vm1244, %v1413, -inf
    %1417 = vmax.xlane.f32.xlu0 %v1416
    %v1418 = vpop.xlane.xlu0 %1417
    %v1419 = vsel %vm1244, %v1414, -inf
    %1420 = vmax.xlane.f32.xlu0 %v1419
    %v1421 = vpop.xlane.xlu0 %1420
    %v1422 = vsel %vm1244, %v1415, -inf
    %1423 = vmax.xlane.f32.xlu0 %v1422
    %v1424 = vpop.xlane.xlu0 %1423
    %v1425 = vsub.f32 %v1413, %v1418
    %v1426 = vsub.f32 %v1414, %v1421
    %v1427 = vsub.f32 %v1415, %v1424
    %v1428 = vmul.f32 %v1425, 1.442695
    %v1429 = vpow.pop %v1428
    %v1430 = vmul.f32 %v1426, 1.442695
    %v1431 = vpow.pop %v1430
    %v1432 = vmul.f32 %v1427, 1.442695
    %v1433 = vpow.pop %v1432
    %v1434 = vsel %vm1244, %v1429, 0.0
    %1435 = vadd.xlane.f32.xlu0 %v1434
    %v1436 = vpop.xlane.xlu0 %1435
    %v1437 = vsel %vm1244, %v1431, 0.0
    %1438 = vadd.xlane.f32.xlu0 %v1437
    %v1439 = vpop.xlane.xlu0 %1438
    %v1440 = vsel %vm1244, %v1433, 0.0
    %1441 = vadd.xlane.f32.xlu0 %v1440
    %v1442 = vpop.xlane.xlu0 %1441
    %v1443 = vrcp.pop %v1436
    %v1444 = vrcp.pop %v1439
    %v1445 = vrcp.pop %v1442
    %v1446 = vmul.f32 %v1429, %v1443
    %v1447 = vmul.f32 %v1431, %v1444
    %v1448 = vmul.f32 %v1433, %v1445
    %v1449 = vpack.c.bf16 %v1447, %v1446
    %v1450 = vpack.c.bf16 %v1448, %v1448
    %1453 = vrot.lane.b32.xlu0 %v1173, 64
    %v1454 = vpop.permute.xlu0 %1453
    %1455 = vrot.lane.b32.xlu0 %v1174, 64
    %v1456 = vpop.permute.xlu0 %1455
    %v1459 = vsel %vm1244, %v1449, 0
    %v1462 = vsel %vm1244, %v1450, 0
    %v1465 = vsel %vm1286, %v1456, 0
    %1467 = vmatprep.subr.bf16.mxu0 0
    %1468 = vmatpush1.bf16.msra.mxu0 %v1454
    %1469 = vmatprep.subr.bf16.mxu0 0
    %1470 = vmatpush1.bf16.msra.mxu0 %v1465
    %1471 = vmatprep.subr.bf16.mxu0 0
    %1472 = vmatpush1.bf16.msra.mxu0 0
    %1473 = vmatprep.subr.bf16.mxu0 0
    %1474 = vmatpush1.bf16.msra.mxu0 0
    %1475 = vmatprep.subr.bf16.mxu0 0
    %1476 = vmatpush1.bf16.msra.mxu0 0
    %1477 = vmatprep.subr.bf16.mxu0 0
    %1478 = vmatpush1.bf16.msra.mxu0 0
    %1479 = vmatprep.subr.bf16.mxu0 0
    %1480 = vmatpush1.bf16.msra.mxu0 0
    %1481 = vmatprep.subr.bf16.mxu0 0
    %1482 = vmatpush1.bf16.msra.mxu0 0
    %1483 = vmatprep.subr.bf16.mxu0 0
    %1484 = vmatpush1.bf16.msra.mxu0 0
    %1485 = vmatprep.subr.bf16.mxu0 0
    %1486 = vmatpush1.bf16.msra.mxu0 0
    %1487 = vmatprep.subr.bf16.mxu0 0
    %1488 = vmatpush1.bf16.msra.mxu0 0
    %1489 = vmatprep.subr.bf16.mxu0 0
    %1490 = vmatpush1.bf16.msra.mxu0 0
    %1491 = vmatprep.subr.bf16.mxu0 0
    %1492 = vmatpush1.bf16.msra.mxu0 0
    %1493 = vmatprep.subr.bf16.mxu0 0
    %1494 = vmatpush1.bf16.msra.mxu0 0
    %1495 = vmatprep.subr.bf16.mxu0 0
    %1496 = vmatpush1.bf16.msra.mxu0 0
    %1497 = vmatprep.subr.bf16.mxu0 0
    %1498 = vmatpush1.bf16.msra.mxu0 0
    %1499 = vmatprep.mubr.bf16.mxu0 0
    %1500 = vmatmul.mubr.bf16.gmra.mrb[0].mxu0 %v1459
    %v1501 = vpop.f32.mrb[0].mxu0
    %v1502 = vadd.f32 0.0, %v1501
    %v1503 = vpop.f32.mrb[0].mxu0
    %v1504 = vpop.f32.mrb[0].mxu0
    %v1505 = vadd.f32 0.0, %v1504
    %v1506 = vpop.f32.mrb[0].mxu0
    %1507 = vmatprep.mubr.bf16.mxu0 0
    %1508 = vmatmul.mubr.bf16.gmra.mrb[0].mxu0 %v1462
    %v1509 = vpop.f32.mrb[0].mxu0
    %v1510 = vadd.f32 0.0, %v1509
    %v1511 = vpop.f32.mrb[0].mxu0
    %v1512 = vpop.f32.mrb[0].mxu0
    %v1513 = vpop.f32.mrb[0].mxu0
    %1514 = vdwg.mxu0
    %v1515 = vpack.c.bf16 %v1018, %v1014
    %v1516 = vpack.c.bf16 %v1024, %v1024
    %v1517 = vpack.c.bf16 %v1081, %v1077
    %v1518 = vpack.c.bf16 %v1087, %v1087
    %v1519 = vpack.c.bf16 %v1144, %v1140
    %v1520 = vpack.c.bf16 %v1150, %v1150
    %v1522 = vsel %vm1175, %v1515, 0
    %v1525 = vsel %vm1175, %v1516, 0
    %v1528 = vsel %vm1175, %v1517, 0
    %v1531 = vsel %vm1175, %v1518, 0
    %1533 = vmatprep.subr.bf16.mxu0 0
    %1534 = vmatpush1.bf16.xpose.msra.mxu0 %v1528
    %1535 = vmatprep.subr.bf16.mxu0 0
    %1536 = vmatpush1.bf16.xpose.msra.mxu0 %v1531
    %1537 = vmatprep.subr.bf16.mxu0 0
    %1538 = vmatpush1.bf16.xpose.msra.mxu0 0
    %1539 = vmatprep.subr.bf16.mxu0 0
    %1540 = vmatpush1.bf16.xpose.msra.mxu0 0
    %1541 = vmatprep.subr.bf16.mxu0 0
    %1542 = vmatpush1.bf16.xpose.msra.mxu0 0
    %1543 = vmatprep.subr.bf16.mxu0 0
    %1544 = vmatpush1.bf16.xpose.msra.mxu0 0
    %1545 = vmatprep.subr.bf16.mxu0 0
    %1546 = vmatpush1.bf16.xpose.msra.mxu0 0
    %1547 = vmatprep.subr.bf16.mxu0 0
    %1548 = vmatpush1.bf16.xpose.msra.mxu0 0
    %1549 = vmatprep.subr.bf16.mxu0 0
    %1550 = vmatpush1.bf16.xpose.msra.mxu0 0
    %1551 = vmatprep.subr.bf16.mxu0 0
    %1552 = vmatpush1.bf16.xpose.msra.mxu0 0
    %1553 = vmatprep.subr.bf16.mxu0 0
    %1554 = vmatpush1.bf16.xpose.msra.mxu0 0
    %1555 = vmatprep.subr.bf16.mxu0 0
    %1556 = vmatpush1.bf16.xpose.msra.mxu0 0
    %1557 = vmatprep.subr.bf16.mxu0 0
    %1558 = vmatpush1.bf16.xpose.msra.mxu0 0
    %1559 = vmatprep.subr.bf16.mxu0 0
    %1560 = vmatpush1.bf16.xpose.msra.mxu0 0
    %1561 = vmatprep.subr.bf16.mxu0 0
    %1562 = vmatpush1.bf16.xpose.msra.mxu0 0
    %1563 = vmatprep.subr.bf16.mxu0 0
    %1564 = vmatpush1.bf16.xpose.msra.mxu0 0
    %1565 = vmatprep.mubr.bf16.mxu0 0
    %1566 = vmatmul.mubr.bf16.gmra.mrb[0].mxu0 %v1522
    %v1567 = vpop.f32.mrb[0].mxu0
    %v1568 = vadd.f32 0.0, %v1567
    %v1569 = vpop.f32.mrb[0].mxu0
    %v1570 = vpop.f32.mrb[0].mxu0
    %v1571 = vadd.f32 0.0, %v1570
    %v1572 = vpop.f32.mrb[0].mxu0
    %1573 = vmatprep.mubr.bf16.mxu0 0
    %1574 = vmatmul.mubr.bf16.gmra.mrb[0].mxu0 %v1525
    %v1575 = vpop.f32.mrb[0].mxu0
    %v1576 = vadd.f32 0.0, %v1575
    %v1577 = vpop.f32.mrb[0].mxu0
    %v1578 = vpop.f32.mrb[0].mxu0
    %v1579 = vpop.f32.mrb[0].mxu0
    %1580 = vdwg.mxu0
    %v1581 = vmul.f32 %v1568, 0.125
    %v1582 = vmul.f32 %v1571, 0.125
    %v1583 = vmul.f32 %v1576, 0.125
    %v1584 = vsel %vm1240, %v1581, -1e+30
    %v1585 = vsel %vm1240, %v1582, -1e+30
    %v1586 = vsel %vm1240, %v1583, -1e+30
    %v1587 = vsel %vm1244, %v1584, -inf
    %1588 = vmax.xlane.f32.xlu0 %v1587
    %v1589 = vpop.xlane.xlu0 %1588
    %v1590 = vsel %vm1244, %v1585, -inf
    %1591 = vmax.xlane.f32.xlu0 %v1590
    %v1592 = vpop.xlane.xlu0 %1591
    %v1593 = vsel %vm1244, %v1586, -inf
    %1594 = vmax.xlane.f32.xlu0 %v1593
    %v1595 = vpop.xlane.xlu0 %1594
    %v1596 = vsub.f32 %v1584, %v1589
    %v1597 = vsub.f32 %v1585, %v1592
    %v1598 = vsub.f32 %v1586, %v1595
    %v1599 = vmul.f32 %v1596, 1.442695
    %v1600 = vpow.pop %v1599
    %v1601 = vmul.f32 %v1597, 1.442695
    %v1602 = vpow.pop %v1601
    %v1603 = vmul.f32 %v1598, 1.442695
    %v1604 = vpow.pop %v1603
    %v1605 = vsel %vm1244, %v1600, 0.0
    %1606 = vadd.xlane.f32.xlu0 %v1605
    %v1607 = vpop.xlane.xlu0 %1606
    %v1608 = vsel %vm1244, %v1602, 0.0
    %1609 = vadd.xlane.f32.xlu0 %v1608
    %v1610 = vpop.xlane.xlu0 %1609
    %v1611 = vsel %vm1244, %v1604, 0.0
    %1612 = vadd.xlane.f32.xlu0 %v1611
    %v1613 = vpop.xlane.xlu0 %1612
    %v1614 = vrcp.pop %v1607
    %v1615 = vrcp.pop %v1610
    %v1616 = vrcp.pop %v1613
    %v1617 = vmul.f32 %v1600, %v1614
    %v1618 = vmul.f32 %v1602, %v1615
    %v1619 = vmul.f32 %v1604, %v1616
    %v1620 = vpack.c.bf16 %v1618, %v1617
    %v1621 = vpack.c.bf16 %v1619, %v1619
    %v1623 = vsel %vm1244, %v1620, 0
    %v1626 = vsel %vm1244, %v1621, 0
    %v1629 = vsel %vm1286, %v1520, 0
    %1631 = vmatprep.subr.bf16.mxu0 0
    %1632 = vmatpush1.bf16.msra.mxu0 %v1519
    %1633 = vmatprep.subr.bf16.mxu0 0
    %1634 = vmatpush1.bf16.msra.mxu0 %v1629
    %1635 = vmatprep.subr.bf16.mxu0 0
    %1636 = vmatpush1.bf16.msra.mxu0 0
    %1637 = vmatprep.subr.bf16.mxu0 0
    %1638 = vmatpush1.bf16.msra.mxu0 0
    %1639 = vmatprep.subr.bf16.mxu0 0
    %1640 = vmatpush1.bf16.msra.mxu0 0
    %1641 = vmatprep.subr.bf16.mxu0 0
    %1642 = vmatpush1.bf16.msra.mxu0 0
    %1643 = vmatprep.subr.bf16.mxu0 0
    %1644 = vmatpush1.bf16.msra.mxu0 0
    %1645 = vmatprep.subr.bf16.mxu0 0
    %1646 = vmatpush1.bf16.msra.mxu0 0
    %1647 = vmatprep.subr.bf16.mxu0 0
    %1648 = vmatpush1.bf16.msra.mxu0 0
    %1649 = vmatprep.subr.bf16.mxu0 0
    %1650 = vmatpush1.bf16.msra.mxu0 0
    %1651 = vmatprep.subr.bf16.mxu0 0
    %1652 = vmatpush1.bf16.msra.mxu0 0
    %1653 = vmatprep.subr.bf16.mxu0 0
    %1654 = vmatpush1.bf16.msra.mxu0 0
    %1655 = vmatprep.subr.bf16.mxu0 0
    %1656 = vmatpush1.bf16.msra.mxu0 0
    %1657 = vmatprep.subr.bf16.mxu0 0
    %1658 = vmatpush1.bf16.msra.mxu0 0
    %1659 = vmatprep.subr.bf16.mxu0 0
    %1660 = vmatpush1.bf16.msra.mxu0 0
    %1661 = vmatprep.subr.bf16.mxu0 0
    %1662 = vmatpush1.bf16.msra.mxu0 0
    %1663 = vmatprep.mubr.bf16.mxu0 0
    %1664 = vmatmul.mubr.bf16.gmra.mrb[0].mxu0 %v1623
    %v1665 = vpop.f32.mrb[0].mxu0
    %v1666 = vadd.f32 0.0, %v1665
    %v1667 = vpop.f32.mrb[0].mxu0
    %v1668 = vpop.f32.mrb[0].mxu0
    %v1669 = vadd.f32 0.0, %v1668
    %v1670 = vpop.f32.mrb[0].mxu0
    %1671 = vmatprep.mubr.bf16.mxu0 0
    %1672 = vmatmul.mubr.bf16.gmra.mrb[0].mxu0 %v1626
    %v1673 = vpop.f32.mrb[0].mxu0
    %v1674 = vadd.f32 0.0, %v1673
    %v1675 = vpop.f32.mrb[0].mxu0
    %v1676 = vpop.f32.mrb[0].mxu0
    %v1677 = vpop.f32.mrb[0].mxu0
    %1678 = vdwg.mxu0
    %1681 = vrot.lane.b32.xlu0 %v1515, 64
    %v1682 = vpop.permute.xlu0 %1681
    %1683 = vrot.lane.b32.xlu0 %v1516, 64
    %v1684 = vpop.permute.xlu0 %1683
    %1687 = vrot.lane.b32.xlu0 %v1517, 64
    %v1688 = vpop.permute.xlu0 %1687
    %1689 = vrot.lane.b32.xlu0 %v1518, 64
    %v1690 = vpop.permute.xlu0 %1689
    %v1692 = vsel %vm1175, %v1682, 0
    %v1695 = vsel %vm1175, %v1684, 0
    %v1698 = vsel %vm1175, %v1688, 0
    %v1701 = vsel %vm1175, %v1690, 0
    %1703 = vmatprep.subr.bf16.mxu0 0
    %1704 = vmatpush1.bf16.xpose.msra.mxu0 %v1698
    %1705 = vmatprep.subr.bf16.mxu0 0
    %1706 = vmatpush1.bf16.xpose.msra.mxu0 %v1701
    %1707 = vmatprep.subr.bf16.mxu0 0
    %1708 = vmatpush1.bf16.xpose.msra.mxu0 0
    %1709 = vmatprep.subr.bf16.mxu0 0
    %1710 = vmatpush1.bf16.xpose.msra.mxu0 0
    %1711 = vmatprep.subr.bf16.mxu0 0
    %1712 = vmatpush1.bf16.xpose.msra.mxu0 0
    %1713 = vmatprep.subr.bf16.mxu0 0
    %1714 = vmatpush1.bf16.xpose.msra.mxu0 0
    %1715 = vmatprep.subr.bf16.mxu0 0
    %1716 = vmatpush1.bf16.xpose.msra.mxu0 0
    %1717 = vmatprep.subr.bf16.mxu0 0
    %1718 = vmatpush1.bf16.xpose.msra.mxu0 0
    %1719 = vmatprep.subr.bf16.mxu0 0
    %1720 = vmatpush1.bf16.xpose.msra.mxu0 0
    %1721 = vmatprep.subr.bf16.mxu0 0
    %1722 = vmatpush1.bf16.xpose.msra.mxu0 0
    %1723 = vmatprep.subr.bf16.mxu0 0
    %1724 = vmatpush1.bf16.xpose.msra.mxu0 0
    %1725 = vmatprep.subr.bf16.mxu0 0
    %1726 = vmatpush1.bf16.xpose.msra.mxu0 0
    %1727 = vmatprep.subr.bf16.mxu0 0
    %1728 = vmatpush1.bf16.xpose.msra.mxu0 0
    %1729 = vmatprep.subr.bf16.mxu0 0
    %1730 = vmatpush1.bf16.xpose.msra.mxu0 0
    %1731 = vmatprep.subr.bf16.mxu0 0
    %1732 = vmatpush1.bf16.xpose.msra.mxu0 0
    %1733 = vmatprep.subr.bf16.mxu0 0
    %1734 = vmatpush1.bf16.xpose.msra.mxu0 0
    %1735 = vmatprep.mubr.bf16.mxu0 0
    %1736 = vmatmul.mubr.bf16.gmra.mrb[0].mxu0 %v1692
    %v1737 = vpop.f32.mrb[0].mxu0
    %v1738 = vadd.f32 0.0, %v1737
    %v1739 = vpop.f32.mrb[0].mxu0
    %v1740 = vpop.f32.mrb[0].mxu0
    %v1741 = vadd.f32 0.0, %v1740
    %v1742 = vpop.f32.mrb[0].mxu0
    %1743 = vmatprep.mubr.bf16.mxu0 0
    %1744 = vmatmul.mubr.bf16.gmra.mrb[0].mxu0 %v1695
    %v1745 = vpop.f32.mrb[0].mxu0
    %v1746 = vadd.f32 0.0, %v1745
    %v1747 = vpop.f32.mrb[0].mxu0
    %v1748 = vpop.f32.mrb[0].mxu0
    %v1749 = vpop.f32.mrb[0].mxu0
    %1750 = vdwg.mxu0
    %v1751 = vmul.f32 %v1738, 0.125
    %v1752 = vmul.f32 %v1741, 0.125
    %v1753 = vmul.f32 %v1746, 0.125
    %v1754 = vsel %vm1240, %v1751, -1e+30
    %v1755 = vsel %vm1240, %v1752, -1e+30
    %v1756 = vsel %vm1240, %v1753, -1e+30
    %v1757 = vsel %vm1244, %v1754, -inf
    %1758 = vmax.xlane.f32.xlu0 %v1757
    %v1759 = vpop.xlane.xlu0 %1758
    %v1760 = vsel %vm1244, %v1755, -inf
    %1761 = vmax.xlane.f32.xlu0 %v1760
    %v1762 = vpop.xlane.xlu0 %1761
    %v1763 = vsel %vm1244, %v1756, -inf
    %1764 = vmax.xlane.f32.xlu0 %v1763
    %v1765 = vpop.xlane.xlu0 %1764
    %v1766 = vsub.f32 %v1754, %v1759
    %v1767 = vsub.f32 %v1755, %v1762
    %v1768 = vsub.f32 %v1756, %v1765
    %v1769 = vmul.f32 %v1766, 1.442695
    %v1770 = vpow.pop %v1769
    %v1771 = vmul.f32 %v1767, 1.442695
    %v1772 = vpow.pop %v1771
    %v1773 = vmul.f32 %v1768, 1.442695
    %v1774 = vpow.pop %v1773
    %v1775 = vsel %vm1244, %v1770, 0.0
    %1776 = vadd.xlane.f32.xlu0 %v1775
    %v1777 = vpop.xlane.xlu0 %1776
    %v1778 = vsel %vm1244, %v1772, 0.0
    %1779 = vadd.xlane.f32.xlu0 %v1778
    %v1780 = vpop.xlane.xlu0 %1779
    %v1781 = vsel %vm1244, %v1774, 0.0
    %1782 = vadd.xlane.f32.xlu0 %v1781
    %v1783 = vpop.xlane.xlu0 %1782
    %v1784 = vrcp.pop %v1777
    %v1785 = vrcp.pop %v1780
    %v1786 = vrcp.pop %v1783
    %v1787 = vmul.f32 %v1770, %v1784
    %v1788 = vmul.f32 %v1772, %v1785
    %v1789 = vmul.f32 %v1774, %v1786
    %v1790 = vpack.c.bf16 %v1788, %v1787
    %v1791 = vpack.c.bf16 %v1789, %v1789
    %1794 = vrot.lane.b32.xlu0 %v1519, 64
    %v1795 = vpop.permute.xlu0 %1794
    %1796 = vrot.lane.b32.xlu0 %v1520, 64
    %v1797 = vpop.permute.xlu0 %1796
    %v1800 = vsel %vm1244, %v1790, 0
    %v1803 = vsel %vm1244, %v1791, 0
    %v1806 = vsel %vm1286, %v1797, 0
    %1808 = vmatprep.subr.bf16.mxu0 0
    %1809 = vmatpush1.bf16.msra.mxu0 %v1795
    %1810 = vmatprep.subr.bf16.mxu0 0
    %1811 = vmatpush1.bf16.msra.mxu0 %v1806
    %1812 = vmatprep.subr.bf16.mxu0 0
    %1813 = vmatpush1.bf16.msra.mxu0 0
    %1814 = vmatprep.subr.bf16.mxu0 0
    %1815 = vmatpush1.bf16.msra.mxu0 0
    %1816 = vmatprep.subr.bf16.mxu0 0
    %1817 = vmatpush1.bf16.msra.mxu0 0
    %1818 = vmatprep.subr.bf16.mxu0 0
    %1819 = vmatpush1.bf16.msra.mxu0 0
    %1820 = vmatprep.subr.bf16.mxu0 0
    %1821 = vmatpush1.bf16.msra.mxu0 0
    %1822 = vmatprep.subr.bf16.mxu0 0
    %1823 = vmatpush1.bf16.msra.mxu0 0
    %1824 = vmatprep.subr.bf16.mxu0 0
    %1825 = vmatpush1.bf16.msra.mxu0 0
    %1826 = vmatprep.subr.bf16.mxu0 0
    %1827 = vmatpush1.bf16.msra.mxu0 0
    %1828 = vmatprep.subr.bf16.mxu0 0
    %1829 = vmatpush1.bf16.msra.mxu0 0
    %1830 = vmatprep.subr.bf16.mxu0 0
    %1831 = vmatpush1.bf16.msra.mxu0 0
    %1832 = vmatprep.subr.bf16.mxu0 0
    %1833 = vmatpush1.bf16.msra.mxu0 0
    %1834 = vmatprep.subr.bf16.mxu0 0
    %1835 = vmatpush1.bf16.msra.mxu0 0
    %1836 = vmatprep.subr.bf16.mxu0 0
    %1837 = vmatpush1.bf16.msra.mxu0 0
    %1838 = vmatprep.subr.bf16.mxu0 0
    %1839 = vmatpush1.bf16.msra.mxu0 0
    %1840 = vmatprep.mubr.bf16.mxu0 0
    %1841 = vmatmul.mubr.bf16.gmra.mrb[0].mxu0 %v1800
    %v1842 = vpop.f32.mrb[0].mxu0
    %v1843 = vadd.f32 0.0, %v1842
    %v1844 = vpop.f32.mrb[0].mxu0
    %v1845 = vpop.f32.mrb[0].mxu0
    %v1846 = vadd.f32 0.0, %v1845
    %v1847 = vpop.f32.mrb[0].mxu0
    %1848 = vmatprep.mubr.bf16.mxu0 0
    %1849 = vmatmul.mubr.bf16.gmra.mrb[0].mxu0 %v1803
    %v1850 = vpop.f32.mrb[0].mxu0
    %v1851 = vadd.f32 0.0, %v1850
    %v1852 = vpop.f32.mrb[0].mxu0
    %v1853 = vpop.f32.mrb[0].mxu0
    %v1854 = vpop.f32.mrb[0].mxu0
    %1855 = vdwg.mxu0
    %1859 = vrot.lane.b32.xlu0 %v1502, 64
    %v1860 = vpop.permute.xlu0 %1859
    %1861 = vrot.lane.b32.xlu0 %v1505, 64
    %v1862 = vpop.permute.xlu0 %1861
    %1863 = vrot.lane.b32.xlu0 %v1510, 64
    %v1864 = vpop.permute.xlu0 %1863
    %1871 = vrot.lane.b32.xlu0 %v1843, 64
    %v1872 = vpop.permute.xlu0 %1871
    %1873 = vrot.lane.b32.xlu0 %v1846, 64
    %v1874 = vpop.permute.xlu0 %1873
    %1875 = vrot.lane.b32.xlu0 %v1851, 64
    %v1876 = vpop.permute.xlu0 %1875
    %v1880 = vsel %vm1175, %v1325, %v1860
    %v1881 = vsel %vm1175, %v1328, %v1862
    %v1882 = vsel %vm1175, %v1333, %v1864
    %v1883 = vsel %vm1175, %v1666, %v1872
    %v1884 = vsel %vm1175, %v1669, %v1874
    %v1885 = vsel %vm1175, %v1674, %v1876
    %v1886 = vpack.c.bf16 %v1032, %v1026
    %v1887 = vpack.c.bf16 %v1036, %v1036
    %v1888 = vpack.c.bf16 %v1095, %v1089
    %v1889 = vpack.c.bf16 %v1099, %v1099
    %v1890 = vpack.c.bf16 %v1158, %v1152
    %v1891 = vpack.c.bf16 %v1162, %v1162
    %v1893 = vsel %vm1175, %v1886, 0
    %v1896 = vsel %vm1175, %v1887, 0
    %v1899 = vsel %vm1175, %v1888, 0
    %v1902 = vsel %vm1175, %v1889, 0
    %1904 = vmatprep.subr.bf16.mxu0 0
    %1905 = vmatpush1.bf16.xpose.msra.mxu0 %v1899
    %1906 = vmatprep.subr.bf16.mxu0 0
    %1907 = vmatpush1.bf16.xpose.msra.mxu0 %v1902
    %1908 = vmatprep.subr.bf16.mxu0 0
    %1909 = vmatpush1.bf16.xpose.msra.mxu0 0
    %1910 = vmatprep.subr.bf16.mxu0 0
    %1911 = vmatpush1.bf16.xpose.msra.mxu0 0
    %1912 = vmatprep.subr.bf16.mxu0 0
    %1913 = vmatpush1.bf16.xpose.msra.mxu0 0
    %1914 = vmatprep.subr.bf16.mxu0 0
    %1915 = vmatpush1.bf16.xpose.msra.mxu0 0
    %1916 = vmatprep.subr.bf16.mxu0 0
    %1917 = vmatpush1.bf16.xpose.msra.mxu0 0
    %1918 = vmatprep.subr.bf16.mxu0 0
    %1919 = vmatpush1.bf16.xpose.msra.mxu0 0
    %1920 = vmatprep.subr.bf16.mxu0 0
    %1921 = vmatpush1.bf16.xpose.msra.mxu0 0
    %1922 = vmatprep.subr.bf16.mxu0 0
    %1923 = vmatpush1.bf16.xpose.msra.mxu0 0
    %1924 = vmatprep.subr.bf16.mxu0 0
    %1925 = vmatpush1.bf16.xpose.msra.mxu0 0
    %1926 = vmatprep.subr.bf16.mxu0 0
    %1927 = vmatpush1.bf16.xpose.msra.mxu0 0
    %1928 = vmatprep.subr.bf16.mxu0 0
    %1929 = vmatpush1.bf16.xpose.msra.mxu0 0
    %1930 = vmatprep.subr.bf16.mxu0 0
    %1931 = vmatpush1.bf16.xpose.msra.mxu0 0
    %1932 = vmatprep.subr.bf16.mxu0 0
    %1933 = vmatpush1.bf16.xpose.msra.mxu0 0
    %1934 = vmatprep.subr.bf16.mxu0 0
    %1935 = vmatpush1.bf16.xpose.msra.mxu0 0
    %1936 = vmatprep.mubr.bf16.mxu0 0
    %1937 = vmatmul.mubr.bf16.gmra.mrb[0].mxu0 %v1893
    %v1938 = vpop.f32.mrb[0].mxu0
    %v1939 = vadd.f32 0.0, %v1938
    %v1940 = vpop.f32.mrb[0].mxu0
    %v1941 = vpop.f32.mrb[0].mxu0
    %v1942 = vadd.f32 0.0, %v1941
    %v1943 = vpop.f32.mrb[0].mxu0
    %1944 = vmatprep.mubr.bf16.mxu0 0
    %1945 = vmatmul.mubr.bf16.gmra.mrb[0].mxu0 %v1896
    %v1946 = vpop.f32.mrb[0].mxu0
    %v1947 = vadd.f32 0.0, %v1946
    %v1948 = vpop.f32.mrb[0].mxu0
    %v1949 = vpop.f32.mrb[0].mxu0
    %v1950 = vpop.f32.mrb[0].mxu0
    %1951 = vdwg.mxu0
    %v1952 = vmul.f32 %v1939, 0.125
    %v1953 = vmul.f32 %v1942, 0.125
    %v1954 = vmul.f32 %v1947, 0.125
    %v1955 = vsel %vm1240, %v1952, -1e+30
    %v1956 = vsel %vm1240, %v1953, -1e+30
    %v1957 = vsel %vm1240, %v1954, -1e+30
    %v1958 = vsel %vm1244, %v1955, -inf
    %1959 = vmax.xlane.f32.xlu0 %v1958
    %v1960 = vpop.xlane.xlu0 %1959
    %v1961 = vsel %vm1244, %v1956, -inf
    %1962 = vmax.xlane.f32.xlu0 %v1961
    %v1963 = vpop.xlane.xlu0 %1962
    %v1964 = vsel %vm1244, %v1957, -inf
    %1965 = vmax.xlane.f32.xlu0 %v1964
    %v1966 = vpop.xlane.xlu0 %1965
    %v1967 = vsub.f32 %v1955, %v1960
    %v1968 = vsub.f32 %v1956, %v1963
    %v1969 = vsub.f32 %v1957, %v1966
    %v1970 = vmul.f32 %v1967, 1.442695
    %v1971 = vpow.pop %v1970
    %v1972 = vmul.f32 %v1968, 1.442695
    %v1973 = vpow.pop %v1972
    %v1974 = vmul.f32 %v1969, 1.442695
    %v1975 = vpow.pop %v1974
    %v1976 = vsel %vm1244, %v1971, 0.0
    %1977 = vadd.xlane.f32.xlu0 %v1976
    %v1978 = vpop.xlane.xlu0 %1977
    %v1979 = vsel %vm1244, %v1973, 0.0
    %1980 = vadd.xlane.f32.xlu0 %v1979
    %v1981 = vpop.xlane.xlu0 %1980
    %v1982 = vsel %vm1244, %v1975, 0.0
    %1983 = vadd.xlane.f32.xlu0 %v1982
    %v1984 = vpop.xlane.xlu0 %1983
    %v1985 = vrcp.pop %v1978
    %v1986 = vrcp.pop %v1981
    %v1987 = vrcp.pop %v1984
    %v1988 = vmul.f32 %v1971, %v1985
    %v1989 = vmul.f32 %v1973, %v1986
    %v1990 = vmul.f32 %v1975, %v1987
    %v1991 = vpack.c.bf16 %v1989, %v1988
    %v1992 = vpack.c.bf16 %v1990, %v1990
    %v1994 = vsel %vm1244, %v1991, 0
    %v1997 = vsel %vm1244, %v1992, 0
    %v2000 = vsel %vm1286, %v1891, 0
    %2002 = vmatprep.subr.bf16.mxu0 0
    %2003 = vmatpush1.bf16.msra.mxu0 %v1890
    %2004 = vmatprep.subr.bf16.mxu0 0
    %2005 = vmatpush1.bf16.msra.mxu0 %v2000
    %2006 = vmatprep.subr.bf16.mxu0 0
    %2007 = vmatpush1.bf16.msra.mxu0 0
    %2008 = vmatprep.subr.bf16.mxu0 0
    %2009 = vmatpush1.bf16.msra.mxu0 0
    %2010 = vmatprep.subr.bf16.mxu0 0
    %2011 = vmatpush1.bf16.msra.mxu0 0
    %2012 = vmatprep.subr.bf16.mxu0 0
    %2013 = vmatpush1.bf16.msra.mxu0 0
    %2014 = vmatprep.subr.bf16.mxu0 0
    %2015 = vmatpush1.bf16.msra.mxu0 0
    %2016 = vmatprep.subr.bf16.mxu0 0
    %2017 = vmatpush1.bf16.msra.mxu0 0
    %2018 = vmatprep.subr.bf16.mxu0 0
    %2019 = vmatpush1.bf16.msra.mxu0 0
    %2020 = vmatprep.subr.bf16.mxu0 0
    %2021 = vmatpush1.bf16.msra.mxu0 0
    %2022 = vmatprep.subr.bf16.mxu0 0
    %2023 = vmatpush1.bf16.msra.mxu0 0
    %2024 = vmatprep.subr.bf16.mxu0 0
    %2025 = vmatpush1.bf16.msra.mxu0 0
    %2026 = vmatprep.subr.bf16.mxu0 0
    %2027 = vmatpush1.bf16.msra.mxu0 0
    %2028 = vmatprep.subr.bf16.mxu0 0
    %2029 = vmatpush1.bf16.msra.mxu0 0
    %2030 = vmatprep.subr.bf16.mxu0 0
    %2031 = vmatpush1.bf16.msra.mxu0 0
    %2032 = vmatprep.subr.bf16.mxu0 0
    %2033 = vmatpush1.bf16.msra.mxu0 0
    %2034 = vmatprep.mubr.bf16.mxu0 0
    %2035 = vmatmul.mubr.bf16.gmra.mrb[0].mxu0 %v1994
    %v2036 = vpop.f32.mrb[0].mxu0
    %v2037 = vadd.f32 0.0, %v2036
    %v2038 = vpop.f32.mrb[0].mxu0
    %v2039 = vpop.f32.mrb[0].mxu0
    %v2040 = vadd.f32 0.0, %v2039
    %v2041 = vpop.f32.mrb[0].mxu0
    %2042 = vmatprep.mubr.bf16.mxu0 0
    %2043 = vmatmul.mubr.bf16.gmra.mrb[0].mxu0 %v1997
    %v2044 = vpop.f32.mrb[0].mxu0
    %v2045 = vadd.f32 0.0, %v2044
    %v2046 = vpop.f32.mrb[0].mxu0
    %v2047 = vpop.f32.mrb[0].mxu0
    %v2048 = vpop.f32.mrb[0].mxu0
    %2049 = vdwg.mxu0
    %2052 = vrot.lane.b32.xlu0 %v1886, 64
    %v2053 = vpop.permute.xlu0 %2052
    %2054 = vrot.lane.b32.xlu0 %v1887, 64
    %v2055 = vpop.permute.xlu0 %2054
    %2058 = vrot.lane.b32.xlu0 %v1888, 64
    %v2059 = vpop.permute.xlu0 %2058
    %2060 = vrot.lane.b32.xlu0 %v1889, 64
    %v2061 = vpop.permute.xlu0 %2060
    %v2063 = vsel %vm1175, %v2053, 0
    %v2066 = vsel %vm1175, %v2055, 0
    %v2069 = vsel %vm1175, %v2059, 0
    %v2072 = vsel %vm1175, %v2061, 0
    %2074 = vmatprep.subr.bf16.mxu0 0
    %2075 = vmatpush1.bf16.xpose.msra.mxu0 %v2069
    %2076 = vmatprep.subr.bf16.mxu0 0
    %2077 = vmatpush1.bf16.xpose.msra.mxu0 %v2072
    %2078 = vmatprep.subr.bf16.mxu0 0
    %2079 = vmatpush1.bf16.xpose.msra.mxu0 0
    %2080 = vmatprep.subr.bf16.mxu0 0
    %2081 = vmatpush1.bf16.xpose.msra.mxu0 0
    %2082 = vmatprep.subr.bf16.mxu0 0
    %2083 = vmatpush1.bf16.xpose.msra.mxu0 0
    %2084 = vmatprep.subr.bf16.mxu0 0
    %2085 = vmatpush1.bf16.xpose.msra.mxu0 0
    %2086 = vmatprep.subr.bf16.mxu0 0
    %2087 = vmatpush1.bf16.xpose.msra.mxu0 0
    %2088 = vmatprep.subr.bf16.mxu0 0
    %2089 = vmatpush1.bf16.xpose.msra.mxu0 0
    %2090 = vmatprep.subr.bf16.mxu0 0
    %2091 = vmatpush1.bf16.xpose.msra.mxu0 0
    %2092 = vmatprep.subr.bf16.mxu0 0
    %2093 = vmatpush1.bf16.xpose.msra.mxu0 0
    %2094 = vmatprep.subr.bf16.mxu0 0
    %2095 = vmatpush1.bf16.xpose.msra.mxu0 0
    %2096 = vmatprep.subr.bf16.mxu0 0
    %2097 = vmatpush1.bf16.xpose.msra.mxu0 0
    %2098 = vmatprep.subr.bf16.mxu0 0
    %2099 = vmatpush1.bf16.xpose.msra.mxu0 0
    %2100 = vmatprep.subr.bf16.mxu0 0
    %2101 = vmatpush1.bf16.xpose.msra.mxu0 0
    %2102 = vmatprep.subr.bf16.mxu0 0
    %2103 = vmatpush1.bf16.xpose.msra.mxu0 0
    %2104 = vmatprep.subr.bf16.mxu0 0
    %2105 = vmatpush1.bf16.xpose.msra.mxu0 0
    %2106 = vmatprep.mubr.bf16.mxu0 0
    %2107 = vmatmul.mubr.bf16.gmra.mrb[0].mxu0 %v2063
    %v2108 = vpop.f32.mrb[0].mxu0
    %v2109 = vadd.f32 0.0, %v2108
    %v2110 = vpop.f32.mrb[0].mxu0
    %v2111 = vpop.f32.mrb[0].mxu0
    %v2112 = vadd.f32 0.0, %v2111
    %v2113 = vpop.f32.mrb[0].mxu0
    %2114 = vmatprep.mubr.bf16.mxu0 0
    %2115 = vmatmul.mubr.bf16.gmra.mrb[0].mxu0 %v2066
    %v2116 = vpop.f32.mrb[0].mxu0
    %v2117 = vadd.f32 0.0, %v2116
    %v2118 = vpop.f32.mrb[0].mxu0
    %v2119 = vpop.f32.mrb[0].mxu0
    %v2120 = vpop.f32.mrb[0].mxu0
    %2121 = vdwg.mxu0
    %v2122 = vmul.f32 %v2109, 0.125
    %v2123 = vmul.f32 %v2112, 0.125
    %v2124 = vmul.f32 %v2117, 0.125
    %v2125 = vsel %vm1240, %v2122, -1e+30
    %v2126 = vsel %vm1240, %v2123, -1e+30
    %v2127 = vsel %vm1240, %v2124, -1e+30
    %v2128 = vsel %vm1244, %v2125, -inf
    %2129 = vmax.xlane.f32.xlu0 %v2128
    %v2130 = vpop.xlane.xlu0 %2129
    %v2131 = vsel %vm1244, %v2126, -inf
    %2132 = vmax.xlane.f32.xlu0 %v2131
    %v2133 = vpop.xlane.xlu0 %2132
    %v2134 = vsel %vm1244, %v2127, -inf
    %2135 = vmax.xlane.f32.xlu0 %v2134
    %v2136 = vpop.xlane.xlu0 %2135
    %v2137 = vsub.f32 %v2125, %v2130
    %v2138 = vsub.f32 %v2126, %v2133
    %v2139 = vsub.f32 %v2127, %v2136
    %v2140 = vmul.f32 %v2137, 1.442695
    %v2141 = vpow.pop %v2140
    %v2142 = vmul.f32 %v2138, 1.442695
    %v2143 = vpow.pop %v2142
    %v2144 = vmul.f32 %v2139, 1.442695
    %v2145 = vpow.pop %v2144
    %v2146 = vsel %vm1244, %v2141, 0.0
    %2147 = vadd.xlane.f32.xlu0 %v2146
    %v2148 = vpop.xlane.xlu0 %2147
    %v2149 = vsel %vm1244, %v2143, 0.0
    %2150 = vadd.xlane.f32.xlu0 %v2149
    %v2151 = vpop.xlane.xlu0 %2150
    %v2152 = vsel %vm1244, %v2145, 0.0
    %2153 = vadd.xlane.f32.xlu0 %v2152
    %v2154 = vpop.xlane.xlu0 %2153
    %v2155 = vrcp.pop %v2148
    %v2156 = vrcp.pop %v2151
    %v2157 = vrcp.pop %v2154
    %v2158 = vmul.f32 %v2141, %v2155
    %v2159 = vmul.f32 %v2143, %v2156
    %v2160 = vmul.f32 %v2145, %v2157
    %v2161 = vpack.c.bf16 %v2159, %v2158
    %v2162 = vpack.c.bf16 %v2160, %v2160
    %2165 = vrot.lane.b32.xlu0 %v1890, 64
    %v2166 = vpop.permute.xlu0 %2165
    %2167 = vrot.lane.b32.xlu0 %v1891, 64
    %v2168 = vpop.permute.xlu0 %2167
    %v2171 = vsel %vm1244, %v2161, 0
    %v2174 = vsel %vm1244, %v2162, 0
    %v2177 = vsel %vm1286, %v2168, 0
    %2179 = vmatprep.subr.bf16.mxu0 0
    %2180 = vmatpush1.bf16.msra.mxu0 %v2166
    %2181 = vmatprep.subr.bf16.mxu0 0
    %2182 = vmatpush1.bf16.msra.mxu0 %v2177
    %2183 = vmatprep.subr.bf16.mxu0 0
    %2184 = vmatpush1.bf16.msra.mxu0 0
    %2185 = vmatprep.subr.bf16.mxu0 0
    %2186 = vmatpush1.bf16.msra.mxu0 0
    %2187 = vmatprep.subr.bf16.mxu0 0
    %2188 = vmatpush1.bf16.msra.mxu0 0
    %2189 = vmatprep.subr.bf16.mxu0 0
    %2190 = vmatpush1.bf16.msra.mxu0 0
    %2191 = vmatprep.subr.bf16.mxu0 0
    %2192 = vmatpush1.bf16.msra.mxu0 0
    %2193 = vmatprep.subr.bf16.mxu0 0
    %2194 = vmatpush1.bf16.msra.mxu0 0
    %2195 = vmatprep.subr.bf16.mxu0 0
    %2196 = vmatpush1.bf16.msra.mxu0 0
    %2197 = vmatprep.subr.bf16.mxu0 0
    %2198 = vmatpush1.bf16.msra.mxu0 0
    %2199 = vmatprep.subr.bf16.mxu0 0
    %2200 = vmatpush1.bf16.msra.mxu0 0
    %2201 = vmatprep.subr.bf16.mxu0 0
    %2202 = vmatpush1.bf16.msra.mxu0 0
    %2203 = vmatprep.subr.bf16.mxu0 0
    %2204 = vmatpush1.bf16.msra.mxu0 0
    %2205 = vmatprep.subr.bf16.mxu0 0
    %2206 = vmatpush1.bf16.msra.mxu0 0
    %2207 = vmatprep.subr.bf16.mxu0 0
    %2208 = vmatpush1.bf16.msra.mxu0 0
    %2209 = vmatprep.subr.bf16.mxu0 0
    %2210 = vmatpush1.bf16.msra.mxu0 0
    %2211 = vmatprep.mubr.bf16.mxu0 0
    %2212 = vmatmul.mubr.bf16.gmra.mrb[0].mxu0 %v2171
    %v2213 = vpop.f32.mrb[0].mxu0
    %v2214 = vadd.f32 0.0, %v2213
    %v2215 = vpop.f32.mrb[0].mxu0
    %v2216 = vpop.f32.mrb[0].mxu0
    %v2217 = vadd.f32 0.0, %v2216
    %v2218 = vpop.f32.mrb[0].mxu0
    %2219 = vmatprep.mubr.bf16.mxu0 0
    %2220 = vmatmul.mubr.bf16.gmra.mrb[0].mxu0 %v2174
    %v2221 = vpop.f32.mrb[0].mxu0
    %v2222 = vadd.f32 0.0, %v2221
    %v2223 = vpop.f32.mrb[0].mxu0
    %v2224 = vpop.f32.mrb[0].mxu0
    %v2225 = vpop.f32.mrb[0].mxu0
    %2226 = vdwg.mxu0
    %v2227 = vpack.c.bf16 %v1034, %v1028
    %v2228 = vpack.c.bf16 %v1038, %v1038
    %v2229 = vpack.c.bf16 %v1097, %v1091
    %v2230 = vpack.c.bf16 %v1101, %v1101
    %v2231 = vpack.c.bf16 %v1160, %v1154
    %v2232 = vpack.c.bf16 %v1164, %v1164
    %v2234 = vsel %vm1175, %v2227, 0
    %v2237 = vsel %vm1175, %v2228, 0
    %v2240 = vsel %vm1175, %v2229, 0
    %v2243 = vsel %vm1175, %v2230, 0
    %2245 = vmatprep.subr.bf16.mxu0 0
    %2246 = vmatpush1.bf16.xpose.msra.mxu0 %v2240
    %2247 = vmatprep.subr.bf16.mxu0 0
    %2248 = vmatpush1.bf16.xpose.msra.mxu0 %v2243
    %2249 = vmatprep.subr.bf16.mxu0 0
    %2250 = vmatpush1.bf16.xpose.msra.mxu0 0
    %2251 = vmatprep.subr.bf16.mxu0 0
    %2252 = vmatpush1.bf16.xpose.msra.mxu0 0
    %2253 = vmatprep.subr.bf16.mxu0 0
    %2254 = vmatpush1.bf16.xpose.msra.mxu0 0
    %2255 = vmatprep.subr.bf16.mxu0 0
    %2256 = vmatpush1.bf16.xpose.msra.mxu0 0
    %2257 = vmatprep.subr.bf16.mxu0 0
    %2258 = vmatpush1.bf16.xpose.msra.mxu0 0
    %2259 = vmatprep.subr.bf16.mxu0 0
    %2260 = vmatpush1.bf16.xpose.msra.mxu0 0
    %2261 = vmatprep.subr.bf16.mxu0 0
    %2262 = vmatpush1.bf16.xpose.msra.mxu0 0
    %2263 = vmatprep.subr.bf16.mxu0 0
    %2264 = vmatpush1.bf16.xpose.msra.mxu0 0
    %2265 = vmatprep.subr.bf16.mxu0 0
    %2266 = vmatpush1.bf16.xpose.msra.mxu0 0
    %2267 = vmatprep.subr.bf16.mxu0 0
    %2268 = vmatpush1.bf16.xpose.msra.mxu0 0
    %2269 = vmatprep.subr.bf16.mxu0 0
    %2270 = vmatpush1.bf16.xpose.msra.mxu0 0
    %2271 = vmatprep.subr.bf16.mxu0 0
    %2272 = vmatpush1.bf16.xpose.msra.mxu0 0
    %2273 = vmatprep.subr.bf16.mxu0 0
    %2274 = vmatpush1.bf16.xpose.msra.mxu0 0
    %2275 = vmatprep.subr.bf16.mxu0 0
    %2276 = vmatpush1.bf16.xpose.msra.mxu0 0
    %2277 = vmatprep.mubr.bf16.mxu0 0
    %2278 = vmatmul.mubr.bf16.gmra.mrb[0].mxu0 %v2234
    %v2279 = vpop.f32.mrb[0].mxu0
    %v2280 = vadd.f32 0.0, %v2279
    %v2281 = vpop.f32.mrb[0].mxu0
    %v2282 = vpop.f32.mrb[0].mxu0
    %v2283 = vadd.f32 0.0, %v2282
    %v2284 = vpop.f32.mrb[0].mxu0
    %2285 = vmatprep.mubr.bf16.mxu0 0
    %2286 = vmatmul.mubr.bf16.gmra.mrb[0].mxu0 %v2237
    %v2287 = vpop.f32.mrb[0].mxu0
    %v2288 = vadd.f32 0.0, %v2287
    %v2289 = vpop.f32.mrb[0].mxu0
    %v2290 = vpop.f32.mrb[0].mxu0
    %v2291 = vpop.f32.mrb[0].mxu0
    %2292 = vdwg.mxu0
    %v2293 = vmul.f32 %v2280, 0.125
    %v2294 = vmul.f32 %v2283, 0.125
    %v2295 = vmul.f32 %v2288, 0.125
    %v2296 = vsel %vm1240, %v2293, -1e+30
    %v2297 = vsel %vm1240, %v2294, -1e+30
    %v2298 = vsel %vm1240, %v2295, -1e+30
    %v2299 = vsel %vm1244, %v2296, -inf
    %2300 = vmax.xlane.f32.xlu0 %v2299
    %v2301 = vpop.xlane.xlu0 %2300
    %v2302 = vsel %vm1244, %v2297, -inf
    %2303 = vmax.xlane.f32.xlu0 %v2302
    %v2304 = vpop.xlane.xlu0 %2303
    %v2305 = vsel %vm1244, %v2298, -inf
    %2306 = vmax.xlane.f32.xlu0 %v2305
    %v2307 = vpop.xlane.xlu0 %2306
    %v2308 = vsub.f32 %v2296, %v2301
    %v2309 = vsub.f32 %v2297, %v2304
    %v2310 = vsub.f32 %v2298, %v2307
    %v2311 = vmul.f32 %v2308, 1.442695
    %v2312 = vpow.pop %v2311
    %v2313 = vmul.f32 %v2309, 1.442695
    %v2314 = vpow.pop %v2313
    %v2315 = vmul.f32 %v2310, 1.442695
    %v2316 = vpow.pop %v2315
    %v2317 = vsel %vm1244, %v2312, 0.0
    %2318 = vadd.xlane.f32.xlu0 %v2317
    %v2319 = vpop.xlane.xlu0 %2318
    %v2320 = vsel %vm1244, %v2314, 0.0
    %2321 = vadd.xlane.f32.xlu0 %v2320
    %v2322 = vpop.xlane.xlu0 %2321
    %v2323 = vsel %vm1244, %v2316, 0.0
    %2324 = vadd.xlane.f32.xlu0 %v2323
    %v2325 = vpop.xlane.xlu0 %2324
    %v2326 = vrcp.pop %v2319
    %v2327 = vrcp.pop %v2322
    %v2328 = vrcp.pop %v2325
    %v2329 = vmul.f32 %v2312, %v2326
    %v2330 = vmul.f32 %v2314, %v2327
    %v2331 = vmul.f32 %v2316, %v2328
    %v2332 = vpack.c.bf16 %v2330, %v2329
    %v2333 = vpack.c.bf16 %v2331, %v2331
    %v2335 = vsel %vm1244, %v2332, 0
    %v2338 = vsel %vm1244, %v2333, 0
    %v2341 = vsel %vm1286, %v2232, 0
    %2343 = vmatprep.subr.bf16.mxu0 0
    %2344 = vmatpush1.bf16.msra.mxu0 %v2231
    %2345 = vmatprep.subr.bf16.mxu0 0
    %2346 = vmatpush1.bf16.msra.mxu0 %v2341
    %2347 = vmatprep.subr.bf16.mxu0 0
    %2348 = vmatpush1.bf16.msra.mxu0 0
    %2349 = vmatprep.subr.bf16.mxu0 0
    %2350 = vmatpush1.bf16.msra.mxu0 0
    %2351 = vmatprep.subr.bf16.mxu0 0
    %2352 = vmatpush1.bf16.msra.mxu0 0
    %2353 = vmatprep.subr.bf16.mxu0 0
    %2354 = vmatpush1.bf16.msra.mxu0 0
    %2355 = vmatprep.subr.bf16.mxu0 0
    %2356 = vmatpush1.bf16.msra.mxu0 0
    %2357 = vmatprep.subr.bf16.mxu0 0
    %2358 = vmatpush1.bf16.msra.mxu0 0
    %2359 = vmatprep.subr.bf16.mxu0 0
    %2360 = vmatpush1.bf16.msra.mxu0 0
    %2361 = vmatprep.subr.bf16.mxu0 0
    %2362 = vmatpush1.bf16.msra.mxu0 0
    %2363 = vmatprep.subr.bf16.mxu0 0
    %2364 = vmatpush1.bf16.msra.mxu0 0
    %2365 = vmatprep.subr.bf16.mxu0 0
    %2366 = vmatpush1.bf16.msra.mxu0 0
    %2367 = vmatprep.subr.bf16.mxu0 0
    %2368 = vmatpush1.bf16.msra.mxu0 0
    %2369 = vmatprep.subr.bf16.mxu0 0
    %2370 = vmatpush1.bf16.msra.mxu0 0
    %2371 = vmatprep.subr.bf16.mxu0 0
    %2372 = vmatpush1.bf16.msra.mxu0 0
    %2373 = vmatprep.subr.bf16.mxu0 0
    %2374 = vmatpush1.bf16.msra.mxu0 0
    %2375 = vmatprep.mubr.bf16.mxu0 0
    %2376 = vmatmul.mubr.bf16.gmra.mrb[0].mxu0 %v2335
    %v2377 = vpop.f32.mrb[0].mxu0
    %v2378 = vadd.f32 0.0, %v2377
    %v2379 = vpop.f32.mrb[0].mxu0
    %v2380 = vpop.f32.mrb[0].mxu0
    %v2381 = vadd.f32 0.0, %v2380
    %v2382 = vpop.f32.mrb[0].mxu0
    %2383 = vmatprep.mubr.bf16.mxu0 0
    %2384 = vmatmul.mubr.bf16.gmra.mrb[0].mxu0 %v2338
    %v2385 = vpop.f32.mrb[0].mxu0
    %v2386 = vadd.f32 0.0, %v2385
    %v2387 = vpop.f32.mrb[0].mxu0
    %v2388 = vpop.f32.mrb[0].mxu0
    %v2389 = vpop.f32.mrb[0].mxu0
    %2390 = vdwg.mxu0
    %2393 = vrot.lane.b32.xlu0 %v2227, 64
    %v2394 = vpop.permute.xlu0 %2393
    %2395 = vrot.lane.b32.xlu0 %v2228, 64
    %v2396 = vpop.permute.xlu0 %2395
    %2399 = vrot.lane.b32.xlu0 %v2229, 64
    %v2400 = vpop.permute.xlu0 %2399
    %2401 = vrot.lane.b32.xlu0 %v2230, 64
    %v2402 = vpop.permute.xlu0 %2401
    %v2404 = vsel %vm1175, %v2394, 0
    %v2407 = vsel %vm1175, %v2396, 0
    %v2410 = vsel %vm1175, %v2400, 0
    %v2413 = vsel %vm1175, %v2402, 0
    %2415 = vmatprep.subr.bf16.mxu0 0
    %2416 = vmatpush1.bf16.xpose.msra.mxu0 %v2410
    %2417 = vmatprep.subr.bf16.mxu0 0
    %2418 = vmatpush1.bf16.xpose.msra.mxu0 %v2413
    %2419 = vmatprep.subr.bf16.mxu0 0
    %2420 = vmatpush1.bf16.xpose.msra.mxu0 0
    %2421 = vmatprep.subr.bf16.mxu0 0
    %2422 = vmatpush1.bf16.xpose.msra.mxu0 0
    %2423 = vmatprep.subr.bf16.mxu0 0
    %2424 = vmatpush1.bf16.xpose.msra.mxu0 0
    %2425 = vmatprep.subr.bf16.mxu0 0
    %2426 = vmatpush1.bf16.xpose.msra.mxu0 0
    %2427 = vmatprep.subr.bf16.mxu0 0
    %2428 = vmatpush1.bf16.xpose.msra.mxu0 0
    %2429 = vmatprep.subr.bf16.mxu0 0
    %2430 = vmatpush1.bf16.xpose.msra.mxu0 0
    %2431 = vmatprep.subr.bf16.mxu0 0
    %2432 = vmatpush1.bf16.xpose.msra.mxu0 0
    %2433 = vmatprep.subr.bf16.mxu0 0
    %2434 = vmatpush1.bf16.xpose.msra.mxu0 0
    %2435 = vmatprep.subr.bf16.mxu0 0
    %2436 = vmatpush1.bf16.xpose.msra.mxu0 0
    %2437 = vmatprep.subr.bf16.mxu0 0
    %2438 = vmatpush1.bf16.xpose.msra.mxu0 0
    %2439 = vmatprep.subr.bf16.mxu0 0
    %2440 = vmatpush1.bf16.xpose.msra.mxu0 0
    %2441 = vmatprep.subr.bf16.mxu0 0
    %2442 = vmatpush1.bf16.xpose.msra.mxu0 0
    %2443 = vmatprep.subr.bf16.mxu0 0
    %2444 = vmatpush1.bf16.xpose.msra.mxu0 0
    %2445 = vmatprep.subr.bf16.mxu0 0
    %2446 = vmatpush1.bf16.xpose.msra.mxu0 0
    %2447 = vmatprep.mubr.bf16.mxu0 0
    %2448 = vmatmul.mubr.bf16.gmra.mrb[0].mxu0 %v2404
    %v2449 = vpop.f32.mrb[0].mxu0
    %v2450 = vadd.f32 0.0, %v2449
    %v2451 = vpop.f32.mrb[0].mxu0
    %v2452 = vpop.f32.mrb[0].mxu0
    %v2453 = vadd.f32 0.0, %v2452
    %v2454 = vpop.f32.mrb[0].mxu0
    %2455 = vmatprep.mubr.bf16.mxu0 0
    %2456 = vmatmul.mubr.bf16.gmra.mrb[0].mxu0 %v2407
    %v2457 = vpop.f32.mrb[0].mxu0
    %v2458 = vadd.f32 0.0, %v2457
    %v2459 = vpop.f32.mrb[0].mxu0
    %v2460 = vpop.f32.mrb[0].mxu0
    %v2461 = vpop.f32.mrb[0].mxu0
    %2462 = vdwg.mxu0
    %v2463 = vmul.f32 %v2450, 0.125
    %v2464 = vmul.f32 %v2453, 0.125
    %v2465 = vmul.f32 %v2458, 0.125
    %v2466 = vsel %vm1240, %v2463, -1e+30
    %v2467 = vsel %vm1240, %v2464, -1e+30
    %v2468 = vsel %vm1240, %v2465, -1e+30
    %v2469 = vsel %vm1244, %v2466, -inf
    %2470 = vmax.xlane.f32.xlu0 %v2469
    %v2471 = vpop.xlane.xlu0 %2470
    %v2472 = vsel %vm1244, %v2467, -inf
    %2473 = vmax.xlane.f32.xlu0 %v2472
    %v2474 = vpop.xlane.xlu0 %2473
    %v2475 = vsel %vm1244, %v2468, -inf
    %2476 = vmax.xlane.f32.xlu0 %v2475
    %v2477 = vpop.xlane.xlu0 %2476
    %v2478 = vsub.f32 %v2466, %v2471
    %v2479 = vsub.f32 %v2467, %v2474
    %v2480 = vsub.f32 %v2468, %v2477
    %v2481 = vmul.f32 %v2478, 1.442695
    %v2482 = vpow.pop %v2481
    %v2483 = vmul.f32 %v2479, 1.442695
    %v2484 = vpow.pop %v2483
    %v2485 = vmul.f32 %v2480, 1.442695
    %v2486 = vpow.pop %v2485
    %v2487 = vsel %vm1244, %v2482, 0.0
    %2488 = vadd.xlane.f32.xlu0 %v2487
    %v2489 = vpop.xlane.xlu0 %2488
    %v2490 = vsel %vm1244, %v2484, 0.0
    %2491 = vadd.xlane.f32.xlu0 %v2490
    %v2492 = vpop.xlane.xlu0 %2491
    %v2493 = vsel %vm1244, %v2486, 0.0
    %2494 = vadd.xlane.f32.xlu0 %v2493
    %v2495 = vpop.xlane.xlu0 %2494
    %v2496 = vrcp.pop %v2489
    %v2497 = vrcp.pop %v2492
    %v2498 = vrcp.pop %v2495
    %v2499 = vmul.f32 %v2482, %v2496
    %v2500 = vmul.f32 %v2484, %v2497
    %v2501 = vmul.f32 %v2486, %v2498
    %v2502 = vpack.c.bf16 %v2500, %v2499
    %v2503 = vpack.c.bf16 %v2501, %v2501
    %2506 = vrot.lane.b32.xlu0 %v2231, 64
    %v2507 = vpop.permute.xlu0 %2506
    %2508 = vrot.lane.b32.xlu0 %v2232, 64
    %v2509 = vpop.permute.xlu0 %2508
    %v2512 = vsel %vm1244, %v2502, 0
    %v2515 = vsel %vm1244, %v2503, 0
    %v2518 = vsel %vm1286, %v2509, 0
    %2520 = vmatprep.subr.bf16.mxu0 0
    %2521 = vmatpush1.bf16.msra.mxu0 %v2507
    %2522 = vmatprep.subr.bf16.mxu0 0
    %2523 = vmatpush1.bf16.msra.mxu0 %v2518
    %2524 = vmatprep.subr.bf16.mxu0 0
    %2525 = vmatpush1.bf16.msra.mxu0 0
    %2526 = vmatprep.subr.bf16.mxu0 0
    %2527 = vmatpush1.bf16.msra.mxu0 0
    %2528 = vmatprep.subr.bf16.mxu0 0
    %2529 = vmatpush1.bf16.msra.mxu0 0
    %2530 = vmatprep.subr.bf16.mxu0 0
    %2531 = vmatpush1.bf16.msra.mxu0 0
    %2532 = vmatprep.subr.bf16.mxu0 0
    %2533 = vmatpush1.bf16.msra.mxu0 0
    %2534 = vmatprep.subr.bf16.mxu0 0
    %2535 = vmatpush1.bf16.msra.mxu0 0
    %2536 = vmatprep.subr.bf16.mxu0 0
    %2537 = vmatpush1.bf16.msra.mxu0 0
    %2538 = vmatprep.subr.bf16.mxu0 0
    %2539 = vmatpush1.bf16.msra.mxu0 0
    %2540 = vmatprep.subr.bf16.mxu0 0
    %2541 = vmatpush1.bf16.msra.mxu0 0
    %2542 = vmatprep.subr.bf16.mxu0 0
    %2543 = vmatpush1.bf16.msra.mxu0 0
    %2544 = vmatprep.subr.bf16.mxu0 0
    %2545 = vmatpush1.bf16.msra.mxu0 0
    %2546 = vmatprep.subr.bf16.mxu0 0
    %2547 = vmatpush1.bf16.msra.mxu0 0
    %2548 = vmatprep.subr.bf16.mxu0 0
    %2549 = vmatpush1.bf16.msra.mxu0 0
    %2550 = vmatprep.subr.bf16.mxu0 0
    %2551 = vmatpush1.bf16.msra.mxu0 0
    %2552 = vmatprep.mubr.bf16.mxu0 0
    %2553 = vmatmul.mubr.bf16.gmra.mrb[0].mxu0 %v2512
    %v2554 = vpop.f32.mrb[0].mxu0
    %v2555 = vadd.f32 0.0, %v2554
    %v2556 = vpop.f32.mrb[0].mxu0
    %v2557 = vpop.f32.mrb[0].mxu0
    %v2558 = vadd.f32 0.0, %v2557
    %v2559 = vpop.f32.mrb[0].mxu0
    %2560 = vmatprep.mubr.bf16.mxu0 0
    %2561 = vmatmul.mubr.bf16.gmra.mrb[0].mxu0 %v2515
    %v2562 = vpop.f32.mrb[0].mxu0
    %v2563 = vadd.f32 0.0, %v2562
    %v2564 = vpop.f32.mrb[0].mxu0
    %v2565 = vpop.f32.mrb[0].mxu0
    %v2566 = vpop.f32.mrb[0].mxu0
    %2567 = vdwg.mxu0
    %2571 = vrot.lane.b32.xlu0 %v2214, 64
    %v2572 = vpop.permute.xlu0 %2571
    %2573 = vrot.lane.b32.xlu0 %v2217, 64
    %v2574 = vpop.permute.xlu0 %2573
    %2575 = vrot.lane.b32.xlu0 %v2222, 64
    %v2576 = vpop.permute.xlu0 %2575
    %2583 = vrot.lane.b32.xlu0 %v2555, 64
    %v2584 = vpop.permute.xlu0 %2583
    %2585 = vrot.lane.b32.xlu0 %v2558, 64
    %v2586 = vpop.permute.xlu0 %2585
    %2587 = vrot.lane.b32.xlu0 %v2563, 64
    %v2588 = vpop.permute.xlu0 %2587
    %v2592 = vsel %vm1175, %v2037, %v2572
    %v2593 = vsel %vm1175, %v2040, %v2574
    %v2594 = vsel %vm1175, %v2045, %v2576
    %v2595 = vsel %vm1175, %v2378, %v2584
    %v2596 = vsel %vm1175, %v2381, %v2586
    %v2597 = vsel %vm1175, %v2386, %v2588
    %v2598 = vpack.c.bf16 %v1881, %v1880
    %v2599 = vpack.c.bf16 %v1884, %v1883
    %v2600 = vpack.c.bf16 %v2592, %v1882
    %v2601 = vpack.c.bf16 %v2595, %v1885
    %v2602 = vpack.c.bf16 %v2594, %v2593
    %v2603 = vpack.c.bf16 %v2597, %v2596
    %v2604 = vld [vmem:[#allocation11] sm:$0xff]
    %v2605 = vld [vmem:[#allocation11 + $0x8] sm:$0xff]
    %v2606 = vld [vmem:[#allocation11 + $0x10] sm:$0xff]
    %v2607 = vld [vmem:[#allocation11 + $0x18] sm:$0xff]
    %v2608 = vld [vmem:[#allocation11 + $0x20] sm:$0xff]
    %v2609 = vld [vmem:[#allocation11 + $0x28] sm:$0xff]
    %v2610 = vld [vmem:[#allocation11 + $0x30] sm:$0xff]
    %v2611 = vld [vmem:[#allocation11 + $0x38] sm:$0xff]
    %v2612 = vld [vmem:[#allocation11 + $0x40] sm:$0xff]
    %v2613 = vld [vmem:[#allocation11 + $0x48] sm:$0xff]
    %v2614 = vld [vmem:[#allocation11 + $0x50] sm:$0xff]
    %v2615 = vld [vmem:[#allocation11 + $0x58] sm:$0xff]
    %v2616 = vld [vmem:[#allocation11 + $0x60] sm:$0xff]
    %v2617 = vld [vmem:[#allocation11 + $0x68] sm:$0xff]
    %v2618 = vld [vmem:[#allocation11 + $0x70] sm:$0xff]
    %v2619 = vld [vmem:[#allocation11 + $0x78] sm:$0xff]
    %v2620 = vld [vmem:[#allocation11 + $0x80] sm:$0xff]
    %v2621 = vld [vmem:[#allocation11 + $0x88] sm:$0xff]
    %v2622 = vld [vmem:[#allocation11 + $0x90] sm:$0xff]
    %v2623 = vld [vmem:[#allocation11 + $0x98] sm:$0xff]
    %v2624 = vld [vmem:[#allocation11 + $0xa0] sm:$0xff]
    %v2625 = vld [vmem:[#allocation11 + $0xa8] sm:$0xff]
    %v2626 = vld [vmem:[#allocation11 + $0xb0] sm:$0xff]
    %v2627 = vld [vmem:[#allocation11 + $0xb8] sm:$0xff]
    %v2628 = vld [vmem:[#allocation11 + $0xc0] sm:$0xff]
    %v2629 = vld [vmem:[#allocation11 + $0xc8] sm:$0xff]
    %v2630 = vld [vmem:[#allocation11 + $0xd0] sm:$0xff]
    %v2631 = vld [vmem:[#allocation11 + $0xd8] sm:$0xff]
    %v2632 = vld [vmem:[#allocation11 + $0xe0] sm:$0xff]
    %v2633 = vld [vmem:[#allocation11 + $0xe8] sm:$0xff]
    %v2634 = vld [vmem:[#allocation11 + $0xf0] sm:$0xff]
    %v2635 = vld [vmem:[#allocation11 + $0xf8] sm:$0xff]
    %v2636 = vld [vmem:[#allocation13] sm:$0x3]
    %v2638 = vlaneseq
    %v2639 = vshrl.u32 %v2638, 7
    %v2640 = vsub.s32 0, %v2639
    %v2641 = vrot.slane %v2636, %v2640
    %v2642 = vlaneseq
    %v2643 = vshrl.u32 %v2642, 7
    %v2644 = vsub.s32 1, %v2643
    %v2645 = vrot.slane %v2636, %v2644
    %v2680 = vunpack.c.l.b16 %v2604
    %v2681 = vunpack.c.h.b16 %v2604
    %v2682 = vunpack.c.l.b16 %v2605
    %v2683 = vunpack.c.h.b16 %v2605
    %v2684 = vunpack.c.l.b16 %v2606
    %v2685 = vunpack.c.h.b16 %v2606
    %v2686 = vunpack.c.l.b16 %v2607
    %v2687 = vunpack.c.h.b16 %v2607
    %v2688 = vunpack.c.l.b16 %v2608
    %v2689 = vunpack.c.h.b16 %v2608
    %v2690 = vunpack.c.l.b16 %v2609
    %v2691 = vunpack.c.h.b16 %v2609
    %v2692 = vunpack.c.l.b16 %v2610
    %v2693 = vunpack.c.h.b16 %v2610
    %v2694 = vunpack.c.l.b16 %v2611
    %v2695 = vunpack.c.h.b16 %v2611
    %v2696 = vunpack.c.l.b16 %v2612
    %v2697 = vunpack.c.h.b16 %v2612
    %v2698 = vunpack.c.l.b16 %v2613
    %v2699 = vunpack.c.h.b16 %v2613
    %v2700 = vunpack.c.l.b16 %v2614
    %v2701 = vunpack.c.h.b16 %v2614
    %v2702 = vunpack.c.l.b16 %v2615
    %v2703 = vunpack.c.h.b16 %v2615
    %v2704 = vunpack.c.l.b16 %v2616
    %v2705 = vunpack.c.h.b16 %v2616
    %v2706 = vunpack.c.l.b16 %v2617
    %v2707 = vunpack.c.h.b16 %v2617
    %v2708 = vunpack.c.l.b16 %v2618
    %v2709 = vunpack.c.h.b16 %v2618
    %v2710 = vunpack.c.l.b16 %v2619
    %v2711 = vunpack.c.h.b16 %v2619
    %v2712 = vunpack.c.l.b16 %v2620
    %v2713 = vunpack.c.h.b16 %v2620
    %v2714 = vunpack.c.l.b16 %v2621
    %v2715 = vunpack.c.h.b16 %v2621
    %v2716 = vunpack.c.l.b16 %v2622
    %v2717 = vunpack.c.h.b16 %v2622
    %v2718 = vunpack.c.l.b16 %v2623
    %v2719 = vunpack.c.h.b16 %v2623
    %v2720 = vunpack.c.l.b16 %v2624
    %v2721 = vunpack.c.h.b16 %v2624
    %v2722 = vunpack.c.l.b16 %v2625
    %v2723 = vunpack.c.h.b16 %v2625
    %v2724 = vunpack.c.l.b16 %v2626
    %v2725 = vunpack.c.h.b16 %v2626
    %v2726 = vunpack.c.l.b16 %v2627
    %v2727 = vunpack.c.h.b16 %v2627
    %v2728 = vunpack.c.l.b16 %v2628
    %v2729 = vunpack.c.h.b16 %v2628
    %v2730 = vunpack.c.l.b16 %v2629
    %v2731 = vunpack.c.h.b16 %v2629
    %v2732 = vunpack.c.l.b16 %v2630
    %v2733 = vunpack.c.h.b16 %v2630
    %v2734 = vunpack.c.l.b16 %v2631
    %v2735 = vunpack.c.h.b16 %v2631
    %v2736 = vunpack.c.l.b16 %v2632
    %v2737 = vunpack.c.h.b16 %v2632
    %v2738 = vunpack.c.l.b16 %v2633
    %v2739 = vunpack.c.h.b16 %v2633
    %v2740 = vunpack.c.l.b16 %v2634
    %v2741 = vunpack.c.h.b16 %v2634
    %v2742 = vunpack.c.l.b16 %v2635
    %v2743 = vunpack.c.h.b16 %v2635
    %v2744 = vpack.c.b16 %v2682, %v2680
    %v2745 = vpack.c.b16 %v2683, %v2681
    %v2746 = vpack.c.b16 %v2686, %v2684
    %v2747 = vpack.c.b16 %v2687, %v2685
    %v2748 = vpack.c.b16 %v2690, %v2688
    %v2749 = vpack.c.b16 %v2691, %v2689
    %v2750 = vpack.c.b16 %v2694, %v2692
    %v2751 = vpack.c.b16 %v2695, %v2693
    %v2752 = vpack.c.b16 %v2698, %v2696
    %v2753 = vpack.c.b16 %v2699, %v2697
    %v2754 = vpack.c.b16 %v2702, %v2700
    %v2755 = vpack.c.b16 %v2703, %v2701
    %v2756 = vpack.c.b16 %v2706, %v2704
    %v2757 = vpack.c.b16 %v2707, %v2705
    %v2758 = vpack.c.b16 %v2710, %v2708
    %v2759 = vpack.c.b16 %v2711, %v2709
    %v2760 = vpack.c.b16 %v2714, %v2712
    %v2761 = vpack.c.b16 %v2715, %v2713
    %v2762 = vpack.c.b16 %v2718, %v2716
    %v2763 = vpack.c.b16 %v2719, %v2717
    %v2764 = vpack.c.b16 %v2722, %v2720
    %v2765 = vpack.c.b16 %v2723, %v2721
    %v2766 = vpack.c.b16 %v2726, %v2724
    %v2767 = vpack.c.b16 %v2727, %v2725
    %v2768 = vpack.c.b16 %v2730, %v2728
    %v2769 = vpack.c.b16 %v2731, %v2729
    %v2770 = vpack.c.b16 %v2734, %v2732
    %v2771 = vpack.c.b16 %v2735, %v2733
    %v2772 = vpack.c.b16 %v2738, %v2736
    %v2773 = vpack.c.b16 %v2739, %v2737
    %v2774 = vpack.c.b16 %v2742, %v2740
    %v2775 = vpack.c.b16 %v2743, %v2741
    %2808 = vmatprep.subr.bf16.mxu0 %v2745
    %2809 = vmatpush1.bf16.msra.mxu0 %v2744
    %2810 = vmatprep.subr.bf16.mxu0 %v2747
    %2811 = vmatpush1.bf16.msra.mxu0 %v2746
    %2812 = vmatprep.subr.bf16.mxu0 %v2749
    %2813 = vmatpush1.bf16.msra.mxu0 %v2748
    %2814 = vmatprep.subr.bf16.mxu0 %v2751
    %2815 = vmatpush1.bf16.msra.mxu0 %v2750
    %2816 = vmatprep.subr.bf16.mxu0 %v2753
    %2817 = vmatpush1.bf16.msra.mxu0 %v2752
    %2818 = vmatprep.subr.bf16.mxu0 %v2755
    %2819 = vmatpush1.bf16.msra.mxu0 %v2754
    %2820 = vmatprep.subr.bf16.mxu0 %v2757
    %2821 = vmatpush1.bf16.msra.mxu0 %v2756
    %2822 = vmatprep.subr.bf16.mxu0 %v2759
    %2823 = vmatpush1.bf16.msra.mxu0 %v2758
    %2824 = vmatprep.subr.bf16.mxu0 %v2761
    %2825 = vmatpush1.bf16.msra.mxu0 %v2760
    %2826 = vmatprep.subr.bf16.mxu0 %v2763
    %2827 = vmatpush1.bf16.msra.mxu0 %v2762
    %2828 = vmatprep.subr.bf16.mxu0 %v2765
    %2829 = vmatpush1.bf16.msra.mxu0 %v2764
    %2830 = vmatprep.subr.bf16.mxu0 %v2767
    %2831 = vmatpush1.bf16.msra.mxu0 %v2766
    %2832 = vmatprep.subr.bf16.mxu0 %v2769
    %2833 = vmatpush1.bf16.msra.mxu0 %v2768
    %2834 = vmatprep.subr.bf16.mxu0 %v2771
    %2835 = vmatpush1.bf16.msra.mxu0 %v2770
    %2836 = vmatprep.subr.bf16.mxu0 %v2773
    %2837 = vmatpush1.bf16.msra.mxu0 %v2772
    %2838 = vmatprep.subr.bf16.mxu0 %v2775
    %2839 = vmatpush1.bf16.msra.mxu0 %v2774
    %2840 = vmatprep.mubr.bf16.mxu0 %v2599
    %2841 = vmatmul.mubr.bf16.gmra.mrb[0].mxu0 %v2598
    %v2842 = vpop.f32.mrb[0].mxu0
    %v2843 = vadd.f32 %v2641, %v2842
    %v2844 = vpop.f32.mrb[0].mxu0
    %v2845 = vadd.f32 %v2645, %v2844
    %v2846 = vpop.f32.mrb[0].mxu0
    %v2847 = vadd.f32 %v2641, %v2846
    %v2848 = vpop.f32.mrb[0].mxu0
    %v2849 = vadd.f32 %v2645, %v2848
    %2850 = vmatprep.mubr.bf16.mxu0 %v2601
    %2851 = vmatmul.mubr.bf16.gmra.mrb[0].mxu0 %v2600
    %v2852 = vpop.f32.mrb[0].mxu0
    %v2853 = vadd.f32 %v2641, %v2852
    %v2854 = vpop.f32.mrb[0].mxu0
    %v2855 = vadd.f32 %v2645, %v2854
    %v2856 = vpop.f32.mrb[0].mxu0
    %v2857 = vadd.f32 %v2641, %v2856
    %v2858 = vpop.f32.mrb[0].mxu0
    %v2859 = vadd.f32 %v2645, %v2858
    %2860 = vmatprep.mubr.bf16.mxu0 %v2603
    %2861 = vmatmul.mubr.bf16.gmra.mrb[0].mxu0 %v2602
    %v2862 = vpop.f32.mrb[0].mxu0
    %v2863 = vadd.f32 %v2641, %v2862
    %v2864 = vpop.f32.mrb[0].mxu0
    %v2865 = vadd.f32 %v2645, %v2864
    %v2866 = vpop.f32.mrb[0].mxu0
    %v2867 = vadd.f32 %v2641, %v2866
    %v2868 = vpop.f32.mrb[0].mxu0
    %v2869 = vadd.f32 %v2645, %v2868
    %2870 = vdwg.mxu0
    %v2871 = vadd.f32 %v206, %v2843
    %v2872 = vadd.f32 %v207, %v2845
    %v2873 = vadd.f32 %v208, %v2847
    %v2874 = vadd.f32 %v209, %v2849
    %v2875 = vadd.f32 %v210, %v2853
    %v2876 = vadd.f32 %v211, %v2855
    %v2877 = vadd.f32 %v212, %v2857
    %v2878 = vadd.f32 %v213, %v2859
    %v2879 = vadd.f32 %v214, %v2863
    %v2880 = vadd.f32 %v215, %v2865
    %v2881 = vadd.f32 %v216, %v2867
    %v2882 = vadd.f32 %v217, %v2869
    %v2883 = vld [vmem:[#allocation14] sm:$0x3]
    %v2884 = vld [vmem:[#allocation16] sm:$0x3]
    %v2885 = vadd.f32 %v2871, %v2872
    %2886 = vadd.xlane.f32.xlu0 %v2885
    %v2887 = vpop.xlane.xlu0 %2886
    %v2888 = vadd.f32 %v2873, %v2874
    %2889 = vadd.xlane.f32.xlu0 %v2888
    %v2890 = vpop.xlane.xlu0 %2889
    %v2891 = vadd.f32 %v2875, %v2876
    %2892 = vadd.xlane.f32.xlu0 %v2891
    %v2893 = vpop.xlane.xlu0 %2892
    %v2894 = vadd.f32 %v2877, %v2878
    %2895 = vadd.xlane.f32.xlu0 %v2894
    %v2896 = vpop.xlane.xlu0 %2895
    %v2897 = vadd.f32 %v2879, %v2880
    %2898 = vadd.xlane.f32.xlu0 %v2897
    %v2899 = vpop.xlane.xlu0 %2898
    %v2900 = vadd.f32 %v2881, %v2882
    %2901 = vadd.xlane.f32.xlu0 %v2900
    %v2902 = vpop.xlane.xlu0 %2901
    %v2903 = vmul.f32 %v2887, %v238
    %v2904 = vmul.f32 %v2890, %v238
    %v2905 = vmul.f32 %v2893, %v238
    %v2906 = vmul.f32 %v2896, %v238
    %v2907 = vmul.f32 %v2899, %v238
    %v2908 = vmul.f32 %v2902, %v238
    %v2909 = vsub.f32 %v2871, %v2903
    %v2910 = vsub.f32 %v2872, %v2903
    %v2911 = vsub.f32 %v2873, %v2904
    %v2912 = vsub.f32 %v2874, %v2904
    %v2913 = vsub.f32 %v2875, %v2905
    %v2914 = vsub.f32 %v2876, %v2905
    %v2915 = vsub.f32 %v2877, %v2906
    %v2916 = vsub.f32 %v2878, %v2906
    %v2917 = vsub.f32 %v2879, %v2907
    %v2918 = vsub.f32 %v2880, %v2907
    %v2919 = vsub.f32 %v2881, %v2908
    %v2920 = vsub.f32 %v2882, %v2908
    %v2921 = vmul.f32 %v2909, %v2909
    %v2922 = vmul.f32 %v2910, %v2910
    %v2923 = vmul.f32 %v2911, %v2911
    %v2924 = vmul.f32 %v2912, %v2912
    %v2925 = vmul.f32 %v2913, %v2913
    %v2926 = vmul.f32 %v2914, %v2914
    %v2927 = vmul.f32 %v2915, %v2915
    %v2928 = vmul.f32 %v2916, %v2916
    %v2929 = vmul.f32 %v2917, %v2917
    %v2930 = vmul.f32 %v2918, %v2918
    %v2931 = vmul.f32 %v2919, %v2919
    %v2932 = vmul.f32 %v2920, %v2920
    %v2933 = vadd.f32 %v2921, %v2922
    %2934 = vadd.xlane.f32.xlu0 %v2933
    %v2935 = vpop.xlane.xlu0 %2934
    %v2936 = vadd.f32 %v2923, %v2924
    %2937 = vadd.xlane.f32.xlu0 %v2936
    %v2938 = vpop.xlane.xlu0 %2937
    %v2939 = vadd.f32 %v2925, %v2926
    %2940 = vadd.xlane.f32.xlu0 %v2939
    %v2941 = vpop.xlane.xlu0 %2940
    %v2942 = vadd.f32 %v2927, %v2928
    %2943 = vadd.xlane.f32.xlu0 %v2942
    %v2944 = vpop.xlane.xlu0 %2943
    %v2945 = vadd.f32 %v2929, %v2930
    %2946 = vadd.xlane.f32.xlu0 %v2945
    %v2947 = vpop.xlane.xlu0 %2946
    %v2948 = vadd.f32 %v2931, %v2932
    %2949 = vadd.xlane.f32.xlu0 %v2948
    %v2950 = vpop.xlane.xlu0 %2949
    %v2951 = vmul.f32 %v2935, %v238
    %v2952 = vmul.f32 %v2938, %v238
    %v2953 = vmul.f32 %v2941, %v238
    %v2954 = vmul.f32 %v2944, %v238
    %v2955 = vmul.f32 %v2947, %v238
    %v2956 = vmul.f32 %v2950, %v238
    %v2957 = vadd.f32 %v2951, 1e-05
    %v2958 = vadd.f32 %v2952, 1e-05
    %v2959 = vadd.f32 %v2953, 1e-05
    %v2960 = vadd.f32 %v2954, 1e-05
    %v2961 = vadd.f32 %v2955, 1e-05
    %v2962 = vadd.f32 %v2956, 1e-05
    %v2963 = vrsqrt.pop %v2957
    %v2964 = vrsqrt.pop %v2958
    %v2965 = vrsqrt.pop %v2959
    %v2966 = vrsqrt.pop %v2960
    %v2967 = vrsqrt.pop %v2961
    %v2968 = vrsqrt.pop %v2962
    %v2969 = vmul.f32 %v2909, %v2963
    %v2970 = vmul.f32 %v2910, %v2963
    %v2971 = vmul.f32 %v2911, %v2964
    %v2972 = vmul.f32 %v2912, %v2964
    %v2973 = vmul.f32 %v2913, %v2965
    %v2974 = vmul.f32 %v2914, %v2965
    %v2975 = vmul.f32 %v2915, %v2966
    %v2976 = vmul.f32 %v2916, %v2966
    %v2977 = vmul.f32 %v2917, %v2967
    %v2978 = vmul.f32 %v2918, %v2967
    %v2979 = vmul.f32 %v2919, %v2968
    %v2980 = vmul.f32 %v2920, %v2968
    %v2982 = vlaneseq
    %v2983 = vshrl.u32 %v2982, 7
    %v2984 = vsub.s32 0, %v2983
    %v2985 = vrot.slane %v2883, %v2984
    %v2986 = vlaneseq
    %v2987 = vshrl.u32 %v2986, 7
    %v2988 = vsub.s32 1, %v2987
    %v2989 = vrot.slane %v2883, %v2988
    %v2992 = vmul.f32 %v2969, %v2985
    %v2993 = vmul.f32 %v2970, %v2989
    %v2994 = vmul.f32 %v2971, %v2985
    %v2995 = vmul.f32 %v2972, %v2989
    %v2996 = vmul.f32 %v2973, %v2985
    %v2997 = vmul.f32 %v2974, %v2989
    %v2998 = vmul.f32 %v2975, %v2985
    %v2999 = vmul.f32 %v2976, %v2989
    %v3000 = vmul.f32 %v2977, %v2985
    %v3001 = vmul.f32 %v2978, %v2989
    %v3002 = vmul.f32 %v2979, %v2985
    %v3003 = vmul.f32 %v2980, %v2989
    %v3005 = vlaneseq
    %v3006 = vshrl.u32 %v3005, 7
    %v3007 = vsub.s32 0, %v3006
    %v3008 = vrot.slane %v2884, %v3007
    %v3009 = vlaneseq
    %v3010 = vshrl.u32 %v3009, 7
    %v3011 = vsub.s32 1, %v3010
    %v3012 = vrot.slane %v2884, %v3011
    %v3015 = vadd.f32 %v2992, %v3008
    %v3016 = vadd.f32 %v2993, %v3012
    %v3017 = vadd.f32 %v2994, %v3008
    %v3018 = vadd.f32 %v2995, %v3012
    %v3019 = vadd.f32 %v2996, %v3008
    %v3020 = vadd.f32 %v2997, %v3012
    %v3021 = vadd.f32 %v2998, %v3008
    %v3022 = vadd.f32 %v2999, %v3012
    %v3023 = vadd.f32 %v3000, %v3008
    %v3024 = vadd.f32 %v3001, %v3012
    %v3025 = vadd.f32 %v3002, %v3008
    %v3026 = vadd.f32 %v3003, %v3012
    %v3027 = vpack.c.bf16 %v3017, %v3015
    %v3028 = vpack.c.bf16 %v3018, %v3016
    %v3029 = vpack.c.bf16 %v3021, %v3019
    %v3030 = vpack.c.bf16 %v3022, %v3020
    %v3031 = vpack.c.bf16 %v3025, %v3023
    %v3032 = vpack.c.bf16 %v3026, %v3024
    %v3033 = vld [vmem:[#allocation17] sm:$0xff]
    %v3034 = vld [vmem:[#allocation17 + $0x8] sm:$0xff]
    %v3035 = vld [vmem:[#allocation17 + $0x10] sm:$0xff]
    %v3036 = vld [vmem:[#allocation17 + $0x18] sm:$0xff]
    %v3037 = vld [vmem:[#allocation17 + $0x20] sm:$0xff]
    %v3038 = vld [vmem:[#allocation17 + $0x28] sm:$0xff]
    %v3039 = vld [vmem:[#allocation17 + $0x30] sm:$0xff]
    %v3040 = vld [vmem:[#allocation17 + $0x38] sm:$0xff]
    %v3041 = vld [vmem:[#allocation17 + $0x40] sm:$0xff]
    %v3042 = vld [vmem:[#allocation17 + $0x48] sm:$0xff]
    %v3043 = vld [vmem:[#allocation17 + $0x50] sm:$0xff]
    %v3044 = vld [vmem:[#allocation17 + $0x58] sm:$0xff]
    %v3045 = vld [vmem:[#allocation17 + $0x60] sm:$0xff]
    %v3046 = vld [vmem:[#allocation17 + $0x68] sm:$0xff]
    %v3047 = vld [vmem:[#allocation17 + $0x70] sm:$0xff]
    %v3048 = vld [vmem:[#allocation17 + $0x78] sm:$0xff]
    %v3049 = vld [vmem:[#allocation17 + $0x80] sm:$0xff]
    %v3050 = vld [vmem:[#allocation17 + $0x88] sm:$0xff]
    %v3051 = vld [vmem:[#allocation17 + $0x90] sm:$0xff]
    %v3052 = vld [vmem:[#allocation17 + $0x98] sm:$0xff]
    %v3053 = vld [vmem:[#allocation17 + $0xa0] sm:$0xff]
    %v3054 = vld [vmem:[#allocation17 + $0xa8] sm:$0xff]
    %v3055 = vld [vmem:[#allocation17 + $0xb0] sm:$0xff]
    %v3056 = vld [vmem:[#allocation17 + $0xb8] sm:$0xff]
    %v3057 = vld [vmem:[#allocation17 + $0xc0] sm:$0xff]
    %v3058 = vld [vmem:[#allocation17 + $0xc8] sm:$0xff]
    %v3059 = vld [vmem:[#allocation17 + $0xd0] sm:$0xff]
    %v3060 = vld [vmem:[#allocation17 + $0xd8] sm:$0xff]
    %v3061 = vld [vmem:[#allocation17 + $0xe0] sm:$0xff]
    %v3062 = vld [vmem:[#allocation17 + $0xe8] sm:$0xff]
    %v3063 = vld [vmem:[#allocation17 + $0xf0] sm:$0xff]
    %v3064 = vld [vmem:[#allocation17 + $0xf8] sm:$0xff]
    %v3065 = vld [vmem:[#allocation17 + $0x100] sm:$0xff]
    %v3066 = vld [vmem:[#allocation17 + $0x108] sm:$0xff]
    %v3067 = vld [vmem:[#allocation17 + $0x110] sm:$0xff]
    %v3068 = vld [vmem:[#allocation17 + $0x118] sm:$0xff]
    %v3069 = vld [vmem:[#allocation17 + $0x120] sm:$0xff]
    %v3070 = vld [vmem:[#allocation17 + $0x128] sm:$0xff]
    %v3071 = vld [vmem:[#allocation17 + $0x130] sm:$0xff]
    %v3072 = vld [vmem:[#allocation17 + $0x138] sm:$0xff]
    %v3073 = vld [vmem:[#allocation17 + $0x140] sm:$0xff]
    %v3074 = vld [vmem:[#allocation17 + $0x148] sm:$0xff]
    %v3075 = vld [vmem:[#allocation17 + $0x150] sm:$0xff]
    %v3076 = vld [vmem:[#allocation17 + $0x158] sm:$0xff]
    %v3077 = vld [vmem:[#allocation17 + $0x160] sm:$0xff]
    %v3078 = vld [vmem:[#allocation17 + $0x168] sm:$0xff]
    %v3079 = vld [vmem:[#allocation17 + $0x170] sm:$0xff]
    %v3080 = vld [vmem:[#allocation17 + $0x178] sm:$0xff]
    %v3081 = vld [vmem:[#allocation17 + $0x180] sm:$0xff]
    %v3082 = vld [vmem:[#allocation17 + $0x188] sm:$0xff]
    %v3083 = vld [vmem:[#allocation17 + $0x190] sm:$0xff]
    %v3084 = vld [vmem:[#allocation17 + $0x198] sm:$0xff]
    %v3085 = vld [vmem:[#allocation17 + $0x1a0] sm:$0xff]
    %v3086 = vld [vmem:[#allocation17 + $0x1a8] sm:$0xff]
    %v3087 = vld [vmem:[#allocation17 + $0x1b0] sm:$0xff]
    %v3088 = vld [vmem:[#allocation17 + $0x1b8] sm:$0xff]
    %v3089 = vld [vmem:[#allocation17 + $0x1c0] sm:$0xff]
    %v3090 = vld [vmem:[#allocation17 + $0x1c8] sm:$0xff]
    %v3091 = vld [vmem:[#allocation17 + $0x1d0] sm:$0xff]
    %v3092 = vld [vmem:[#allocation17 + $0x1d8] sm:$0xff]
    %v3093 = vld [vmem:[#allocation17 + $0x1e0] sm:$0xff]
    %v3094 = vld [vmem:[#allocation17 + $0x1e8] sm:$0xff]
    %v3095 = vld [vmem:[#allocation17 + $0x1f0] sm:$0xff]
    %v3096 = vld [vmem:[#allocation17 + $0x1f8] sm:$0xff]
    %v3097 = vld [vmem:[#allocation17 + $0x200] sm:$0xff]
    %v3098 = vld [vmem:[#allocation17 + $0x208] sm:$0xff]
    %v3099 = vld [vmem:[#allocation17 + $0x210] sm:$0xff]
    %v3100 = vld [vmem:[#allocation17 + $0x218] sm:$0xff]
    %v3101 = vld [vmem:[#allocation17 + $0x220] sm:$0xff]
    %v3102 = vld [vmem:[#allocation17 + $0x228] sm:$0xff]
    %v3103 = vld [vmem:[#allocation17 + $0x230] sm:$0xff]
    %v3104 = vld [vmem:[#allocation17 + $0x238] sm:$0xff]
    %v3105 = vld [vmem:[#allocation17 + $0x240] sm:$0xff]
    %v3106 = vld [vmem:[#allocation17 + $0x248] sm:$0xff]
    %v3107 = vld [vmem:[#allocation17 + $0x250] sm:$0xff]
    %v3108 = vld [vmem:[#allocation17 + $0x258] sm:$0xff]
    %v3109 = vld [vmem:[#allocation17 + $0x260] sm:$0xff]
    %v3110 = vld [vmem:[#allocation17 + $0x268] sm:$0xff]
    %v3111 = vld [vmem:[#allocation17 + $0x270] sm:$0xff]
    %v3112 = vld [vmem:[#allocation17 + $0x278] sm:$0xff]
    %v3113 = vld [vmem:[#allocation17 + $0x280] sm:$0xff]
    %v3114 = vld [vmem:[#allocation17 + $0x288] sm:$0xff]
    %v3115 = vld [vmem:[#allocation17 + $0x290] sm:$0xff]
    %v3116 = vld [vmem:[#allocation17 + $0x298] sm:$0xff]
    %v3117 = vld [vmem:[#allocation17 + $0x2a0] sm:$0xff]
    %v3118 = vld [vmem:[#allocation17 + $0x2a8] sm:$0xff]
    %v3119 = vld [vmem:[#allocation17 + $0x2b0] sm:$0xff]
    %v3120 = vld [vmem:[#allocation17 + $0x2b8] sm:$0xff]
    %v3121 = vld [vmem:[#allocation17 + $0x2c0] sm:$0xff]
    %v3122 = vld [vmem:[#allocation17 + $0x2c8] sm:$0xff]
    %v3123 = vld [vmem:[#allocation17 + $0x2d0] sm:$0xff]
    %v3124 = vld [vmem:[#allocation17 + $0x2d8] sm:$0xff]
    %v3125 = vld [vmem:[#allocation17 + $0x2e0] sm:$0xff]
    %v3126 = vld [vmem:[#allocation17 + $0x2e8] sm:$0xff]
    %v3127 = vld [vmem:[#allocation17 + $0x2f0] sm:$0xff]
    %v3128 = vld [vmem:[#allocation17 + $0x2f8] sm:$0xff]
    %v3129 = vld [vmem:[#allocation17 + $0x300] sm:$0xff]
    %v3130 = vld [vmem:[#allocation17 + $0x308] sm:$0xff]
    %v3131 = vld [vmem:[#allocation17 + $0x310] sm:$0xff]
    %v3132 = vld [vmem:[#allocation17 + $0x318] sm:$0xff]
    %v3133 = vld [vmem:[#allocation17 + $0x320] sm:$0xff]
    %v3134 = vld [vmem:[#allocation17 + $0x328] sm:$0xff]
    %v3135 = vld [vmem:[#allocation17 + $0x330] sm:$0xff]
    %v3136 = vld [vmem:[#allocation17 + $0x338] sm:$0xff]
    %v3137 = vld [vmem:[#allocation17 + $0x340] sm:$0xff]
    %v3138 = vld [vmem:[#allocation17 + $0x348] sm:$0xff]
    %v3139 = vld [vmem:[#allocation17 + $0x350] sm:$0xff]
    %v3140 = vld [vmem:[#allocation17 + $0x358] sm:$0xff]
    %v3141 = vld [vmem:[#allocation17 + $0x360] sm:$0xff]
    %v3142 = vld [vmem:[#allocation17 + $0x368] sm:$0xff]
    %v3143 = vld [vmem:[#allocation17 + $0x370] sm:$0xff]
    %v3144 = vld [vmem:[#allocation17 + $0x378] sm:$0xff]
    %v3145 = vld [vmem:[#allocation17 + $0x380] sm:$0xff]
    %v3146 = vld [vmem:[#allocation17 + $0x388] sm:$0xff]
    %v3147 = vld [vmem:[#allocation17 + $0x390] sm:$0xff]
    %v3148 = vld [vmem:[#allocation17 + $0x398] sm:$0xff]
    %v3149 = vld [vmem:[#allocation17 + $0x3a0] sm:$0xff]
    %v3150 = vld [vmem:[#allocation17 + $0x3a8] sm:$0xff]
    %v3151 = vld [vmem:[#allocation17 + $0x3b0] sm:$0xff]
    %v3152 = vld [vmem:[#allocation17 + $0x3b8] sm:$0xff]
    %v3153 = vld [vmem:[#allocation17 + $0x3c0] sm:$0xff]
    %v3154 = vld [vmem:[#allocation17 + $0x3c8] sm:$0xff]
    %v3155 = vld [vmem:[#allocation17 + $0x3d0] sm:$0xff]
    %v3156 = vld [vmem:[#allocation17 + $0x3d8] sm:$0xff]
    %v3157 = vld [vmem:[#allocation17 + $0x3e0] sm:$0xff]
    %v3158 = vld [vmem:[#allocation17 + $0x3e8] sm:$0xff]
    %v3159 = vld [vmem:[#allocation17 + $0x3f0] sm:$0xff]
    %v3160 = vld [vmem:[#allocation17 + $0x3f8] sm:$0xff]
    %v3161 = vld [vmem:[#allocation19] sm:$0xff]
    %v3163 = vlaneseq
    %v3164 = vshrl.u32 %v3163, 7
    %v3165 = vsub.s32 0, %v3164
    %v3166 = vrot.slane %v3161, %v3165
    %v3167 = vlaneseq
    %v3168 = vshrl.u32 %v3167, 7
    %v3169 = vsub.s32 1, %v3168
    %v3170 = vrot.slane %v3161, %v3169
    %v3171 = vlaneseq
    %v3172 = vshrl.u32 %v3171, 7
    %v3173 = vsub.s32 2, %v3172
    %v3174 = vrot.slane %v3161, %v3173
    %v3175 = vlaneseq
    %v3176 = vshrl.u32 %v3175, 7
    %v3177 = vsub.s32 3, %v3176
    %v3178 = vrot.slane %v3161, %v3177
    %v3179 = vlaneseq
    %v3180 = vshrl.u32 %v3179, 7
    %v3181 = vsub.s32 4, %v3180
    %v3182 = vrot.slane %v3161, %v3181
    %v3183 = vlaneseq
    %v3184 = vshrl.u32 %v3183, 7
    %v3185 = vsub.s32 5, %v3184
    %v3186 = vrot.slane %v3161, %v3185
    %v3187 = vlaneseq
    %v3188 = vshrl.u32 %v3187, 7
    %v3189 = vsub.s32 6, %v3188
    %v3190 = vrot.slane %v3161, %v3189
    %v3191 = vlaneseq
    %v3192 = vshrl.u32 %v3191, 7
    %v3193 = vsub.s32 7, %v3192
    %v3194 = vrot.slane %v3161, %v3193
    %v3331 = vunpack.c.l.b16 %v3033
    %v3332 = vunpack.c.h.b16 %v3033
    %v3333 = vunpack.c.l.b16 %v3034
    %v3334 = vunpack.c.h.b16 %v3034
    %v3335 = vunpack.c.l.b16 %v3035
    %v3336 = vunpack.c.h.b16 %v3035
    %v3337 = vunpack.c.l.b16 %v3036
    %v3338 = vunpack.c.h.b16 %v3036
    %v3339 = vunpack.c.l.b16 %v3037
    %v3340 = vunpack.c.h.b16 %v3037
    %v3341 = vunpack.c.l.b16 %v3038
    %v3342 = vunpack.c.h.b16 %v3038
    %v3343 = vunpack.c.l.b16 %v3039
    %v3344 = vunpack.c.h.b16 %v3039
    %v3345 = vunpack.c.l.b16 %v3040
    %v3346 = vunpack.c.h.b16 %v3040
    %v3347 = vunpack.c.l.b16 %v3041
    %v3348 = vunpack.c.h.b16 %v3041
    %v3349 = vunpack.c.l.b16 %v3042
    %v3350 = vunpack.c.h.b16 %v3042
    %v3351 = vunpack.c.l.b16 %v3043
    %v3352 = vunpack.c.h.b16 %v3043
    %v3353 = vunpack.c.l.b16 %v3044
    %v3354 = vunpack.c.h.b16 %v3044
    %v3355 = vunpack.c.l.b16 %v3045
    %v3356 = vunpack.c.h.b16 %v3045
    %v3357 = vunpack.c.l.b16 %v3046
    %v3358 = vunpack.c.h.b16 %v3046
    %v3359 = vunpack.c.l.b16 %v3047
    %v3360 = vunpack.c.h.b16 %v3047
    %v3361 = vunpack.c.l.b16 %v3048
    %v3362 = vunpack.c.h.b16 %v3048
    %v3363 = vunpack.c.l.b16 %v3049
    %v3364 = vunpack.c.h.b16 %v3049
    %v3365 = vunpack.c.l.b16 %v3050
    %v3366 = vunpack.c.h.b16 %v3050
    %v3367 = vunpack.c.l.b16 %v3051
    %v3368 = vunpack.c.h.b16 %v3051
    %v3369 = vunpack.c.l.b16 %v3052
    %v3370 = vunpack.c.h.b16 %v3052
    %v3371 = vunpack.c.l.b16 %v3053
    %v3372 = vunpack.c.h.b16 %v3053
    %v3373 = vunpack.c.l.b16 %v3054
    %v3374 = vunpack.c.h.b16 %v3054
    %v3375 = vunpack.c.l.b16 %v3055
    %v3376 = vunpack.c.h.b16 %v3055
    %v3377 = vunpack.c.l.b16 %v3056
    %v3378 = vunpack.c.h.b16 %v3056
    %v3379 = vunpack.c.l.b16 %v3057
    %v3380 = vunpack.c.h.b16 %v3057
    %v3381 = vunpack.c.l.b16 %v3058
    %v3382 = vunpack.c.h.b16 %v3058
    %v3383 = vunpack.c.l.b16 %v3059
    %v3384 = vunpack.c.h.b16 %v3059
    %v3385 = vunpack.c.l.b16 %v3060
    %v3386 = vunpack.c.h.b16 %v3060
    %v3387 = vunpack.c.l.b16 %v3061
    %v3388 = vunpack.c.h.b16 %v3061
    %v3389 = vunpack.c.l.b16 %v3062
    %v3390 = vunpack.c.h.b16 %v3062
    %v3391 = vunpack.c.l.b16 %v3063
    %v3392 = vunpack.c.h.b16 %v3063
    %v3393 = vunpack.c.l.b16 %v3064
    %v3394 = vunpack.c.h.b16 %v3064
    %v3395 = vunpack.c.l.b16 %v3065
    %v3396 = vunpack.c.h.b16 %v3065
    %v3397 = vunpack.c.l.b16 %v3066
    %v3398 = vunpack.c.h.b16 %v3066
    %v3399 = vunpack.c.l.b16 %v3067
    %v3400 = vunpack.c.h.b16 %v3067
    %v3401 = vunpack.c.l.b16 %v3068
    %v3402 = vunpack.c.h.b16 %v3068
    %v3403 = vunpack.c.l.b16 %v3069
    %v3404 = vunpack.c.h.b16 %v3069
    %v3405 = vunpack.c.l.b16 %v3070
    %v3406 = vunpack.c.h.b16 %v3070
    %v3407 = vunpack.c.l.b16 %v3071
    %v3408 = vunpack.c.h.b16 %v3071
    %v3409 = vunpack.c.l.b16 %v3072
    %v3410 = vunpack.c.h.b16 %v3072
    %v3411 = vunpack.c.l.b16 %v3073
    %v3412 = vunpack.c.h.b16 %v3073
    %v3413 = vunpack.c.l.b16 %v3074
    %v3414 = vunpack.c.h.b16 %v3074
    %v3415 = vunpack.c.l.b16 %v3075
    %v3416 = vunpack.c.h.b16 %v3075
    %v3417 = vunpack.c.l.b16 %v3076
    %v3418 = vunpack.c.h.b16 %v3076
    %v3419 = vunpack.c.l.b16 %v3077
    %v3420 = vunpack.c.h.b16 %v3077
    %v3421 = vunpack.c.l.b16 %v3078
    %v3422 = vunpack.c.h.b16 %v3078
    %v3423 = vunpack.c.l.b16 %v3079
    %v3424 = vunpack.c.h.b16 %v3079
    %v3425 = vunpack.c.l.b16 %v3080
    %v3426 = vunpack.c.h.b16 %v3080
    %v3427 = vunpack.c.l.b16 %v3081
    %v3428 = vunpack.c.h.b16 %v3081
    %v3429 = vunpack.c.l.b16 %v3082
    %v3430 = vunpack.c.h.b16 %v3082
    %v3431 = vunpack.c.l.b16 %v3083
    %v3432 = vunpack.c.h.b16 %v3083
    %v3433 = vunpack.c.l.b16 %v3084
    %v3434 = vunpack.c.h.b16 %v3084
    %v3435 = vunpack.c.l.b16 %v3085
    %v3436 = vunpack.c.h.b16 %v3085
    %v3437 = vunpack.c.l.b16 %v3086
    %v3438 = vunpack.c.h.b16 %v3086
    %v3439 = vunpack.c.l.b16 %v3087
    %v3440 = vunpack.c.h.b16 %v3087
    %v3441 = vunpack.c.l.b16 %v3088
    %v3442 = vunpack.c.h.b16 %v3088
    %v3443 = vunpack.c.l.b16 %v3089
    %v3444 = vunpack.c.h.b16 %v3089
    %v3445 = vunpack.c.l.b16 %v3090
    %v3446 = vunpack.c.h.b16 %v3090
    %v3447 = vunpack.c.l.b16 %v3091
    %v3448 = vunpack.c.h.b16 %v3091
    %v3449 = vunpack.c.l.b16 %v3092
    %v3450 = vunpack.c.h.b16 %v3092
    %v3451 = vunpack.c.l.b16 %v3093
    %v3452 = vunpack.c.h.b16 %v3093
    %v3453 = vunpack.c.l.b16 %v3094
    %v3454 = vunpack.c.h.b16 %v3094
    %v3455 = vunpack.c.l.b16 %v3095
    %v3456 = vunpack.c.h.b16 %v3095
    %v3457 = vunpack.c.l.b16 %v3096
    %v3458 = vunpack.c.h.b16 %v3096
    %v3459 = vunpack.c.l.b16 %v3097
    %v3460 = vunpack.c.h.b16 %v3097
    %v3461 = vunpack.c.l.b16 %v3098
    %v3462 = vunpack.c.h.b16 %v3098
    %v3463 = vunpack.c.l.b16 %v3099
    %v3464 = vunpack.c.h.b16 %v3099
    %v3465 = vunpack.c.l.b16 %v3100
    %v3466 = vunpack.c.h.b16 %v3100
    %v3467 = vunpack.c.l.b16 %v3101
    %v3468 = vunpack.c.h.b16 %v3101
    %v3469 = vunpack.c.l.b16 %v3102
    %v3470 = vunpack.c.h.b16 %v3102
    %v3471 = vunpack.c.l.b16 %v3103
    %v3472 = vunpack.c.h.b16 %v3103
    %v3473 = vunpack.c.l.b16 %v3104
    %v3474 = vunpack.c.h.b16 %v3104
    %v3475 = vunpack.c.l.b16 %v3105
    %v3476 = vunpack.c.h.b16 %v3105
    %v3477 = vunpack.c.l.b16 %v3106
    %v3478 = vunpack.c.h.b16 %v3106
    %v3479 = vunpack.c.l.b16 %v3107
    %v3480 = vunpack.c.h.b16 %v3107
    %v3481 = vunpack.c.l.b16 %v3108
    %v3482 = vunpack.c.h.b16 %v3108
    %v3483 = vunpack.c.l.b16 %v3109
    %v3484 = vunpack.c.h.b16 %v3109
    %v3485 = vunpack.c.l.b16 %v3110
    %v3486 = vunpack.c.h.b16 %v3110
    %v3487 = vunpack.c.l.b16 %v3111
    %v3488 = vunpack.c.h.b16 %v3111
    %v3489 = vunpack.c.l.b16 %v3112
    %v3490 = vunpack.c.h.b16 %v3112
    %v3491 = vunpack.c.l.b16 %v3113
    %v3492 = vunpack.c.h.b16 %v3113
    %v3493 = vunpack.c.l.b16 %v3114
    %v3494 = vunpack.c.h.b16 %v3114
    %v3495 = vunpack.c.l.b16 %v3115
    %v3496 = vunpack.c.h.b16 %v3115
    %v3497 = vunpack.c.l.b16 %v3116
    %v3498 = vunpack.c.h.b16 %v3116
    %v3499 = vunpack.c.l.b16 %v3117
    %v3500 = vunpack.c.h.b16 %v3117
    %v3501 = vunpack.c.l.b16 %v3118
    %v3502 = vunpack.c.h.b16 %v3118
    %v3503 = vunpack.c.l.b16 %v3119
    %v3504 = vunpack.c.h.b16 %v3119
    %v3505 = vunpack.c.l.b16 %v3120
    %v3506 = vunpack.c.h.b16 %v3120
    %v3507 = vunpack.c.l.b16 %v3121
    %v3508 = vunpack.c.h.b16 %v3121
    %v3509 = vunpack.c.l.b16 %v3122
    %v3510 = vunpack.c.h.b16 %v3122
    %v3511 = vunpack.c.l.b16 %v3123
    %v3512 = vunpack.c.h.b16 %v3123
    %v3513 = vunpack.c.l.b16 %v3124
    %v3514 = vunpack.c.h.b16 %v3124
    %v3515 = vunpack.c.l.b16 %v3125
    %v3516 = vunpack.c.h.b16 %v3125
    %v3517 = vunpack.c.l.b16 %v3126
    %v3518 = vunpack.c.h.b16 %v3126
    %v3519 = vunpack.c.l.b16 %v3127
    %v3520 = vunpack.c.h.b16 %v3127
    %v3521 = vunpack.c.l.b16 %v3128
    %v3522 = vunpack.c.h.b16 %v3128
    %v3523 = vunpack.c.l.b16 %v3129
    %v3524 = vunpack.c.h.b16 %v3129
    %v3525 = vunpack.c.l.b16 %v3130
    %v3526 = vunpack.c.h.b16 %v3130
    %v3527 = vunpack.c.l.b16 %v3131
    %v3528 = vunpack.c.h.b16 %v3131
    %v3529 = vunpack.c.l.b16 %v3132
    %v3530 = vunpack.c.h.b16 %v3132
    %v3531 = vunpack.c.l.b16 %v3133
    %v3532 = vunpack.c.h.b16 %v3133
    %v3533 = vunpack.c.l.b16 %v3134
    %v3534 = vunpack.c.h.b16 %v3134
    %v3535 = vunpack.c.l.b16 %v3135
    %v3536 = vunpack.c.h.b16 %v3135
    %v3537 = vunpack.c.l.b16 %v3136
    %v3538 = vunpack.c.h.b16 %v3136
    %v3539 = vunpack.c.l.b16 %v3137
    %v3540 = vunpack.c.h.b16 %v3137
    %v3541 = vunpack.c.l.b16 %v3138
    %v3542 = vunpack.c.h.b16 %v3138
    %v3543 = vunpack.c.l.b16 %v3139
    %v3544 = vunpack.c.h.b16 %v3139
    %v3545 = vunpack.c.l.b16 %v3140
    %v3546 = vunpack.c.h.b16 %v3140
    %v3547 = vunpack.c.l.b16 %v3141
    %v3548 = vunpack.c.h.b16 %v3141
    %v3549 = vunpack.c.l.b16 %v3142
    %v3550 = vunpack.c.h.b16 %v3142
    %v3551 = vunpack.c.l.b16 %v3143
    %v3552 = vunpack.c.h.b16 %v3143
    %v3553 = vunpack.c.l.b16 %v3144
    %v3554 = vunpack.c.h.b16 %v3144
    %v3555 = vunpack.c.l.b16 %v3145
    %v3556 = vunpack.c.h.b16 %v3145
    %v3557 = vunpack.c.l.b16 %v3146
    %v3558 = vunpack.c.h.b16 %v3146
    %v3559 = vunpack.c.l.b16 %v3147
    %v3560 = vunpack.c.h.b16 %v3147
    %v3561 = vunpack.c.l.b16 %v3148
    %v3562 = vunpack.c.h.b16 %v3148
    %v3563 = vunpack.c.l.b16 %v3149
    %v3564 = vunpack.c.h.b16 %v3149
    %v3565 = vunpack.c.l.b16 %v3150
    %v3566 = vunpack.c.h.b16 %v3150
    %v3567 = vunpack.c.l.b16 %v3151
    %v3568 = vunpack.c.h.b16 %v3151
    %v3569 = vunpack.c.l.b16 %v3152
    %v3570 = vunpack.c.h.b16 %v3152
    %v3571 = vunpack.c.l.b16 %v3153
    %v3572 = vunpack.c.h.b16 %v3153
    %v3573 = vunpack.c.l.b16 %v3154
    %v3574 = vunpack.c.h.b16 %v3154
    %v3575 = vunpack.c.l.b16 %v3155
    %v3576 = vunpack.c.h.b16 %v3155
    %v3577 = vunpack.c.l.b16 %v3156
    %v3578 = vunpack.c.h.b16 %v3156
    %v3579 = vunpack.c.l.b16 %v3157
    %v3580 = vunpack.c.h.b16 %v3157
    %v3581 = vunpack.c.l.b16 %v3158
    %v3582 = vunpack.c.h.b16 %v3158
    %v3583 = vunpack.c.l.b16 %v3159
    %v3584 = vunpack.c.h.b16 %v3159
    %v3585 = vunpack.c.l.b16 %v3160
    %v3586 = vunpack.c.h.b16 %v3160
    %v3587 = vpack.c.b16 %v3339, %v3331
    %v3588 = vpack.c.b16 %v3340, %v3332
    %v3589 = vpack.c.b16 %v3341, %v3333
    %v3590 = vpack.c.b16 %v3342, %v3334
    %v3591 = vpack.c.b16 %v3343, %v3335
    %v3592 = vpack.c.b16 %v3344, %v3336
    %v3593 = vpack.c.b16 %v3345, %v3337
    %v3594 = vpack.c.b16 %v3346, %v3338
    %v3595 = vpack.c.b16 %v3355, %v3347
    %v3596 = vpack.c.b16 %v3356, %v3348
    %v3597 = vpack.c.b16 %v3357, %v3349
    %v3598 = vpack.c.b16 %v3358, %v3350
    %v3599 = vpack.c.b16 %v3359, %v3351
    %v3600 = vpack.c.b16 %v3360, %v3352
    %v3601 = vpack.c.b16 %v3361, %v3353
    %v3602 = vpack.c.b16 %v3362, %v3354
    %v3603 = vpack.c.b16 %v3371, %v3363
    %v3604 = vpack.c.b16 %v3372, %v3364
    %v3605 = vpack.c.b16 %v3373, %v3365
    %v3606 = vpack.c.b16 %v3374, %v3366
    %v3607 = vpack.c.b16 %v3375, %v3367
    %v3608 = vpack.c.b16 %v3376, %v3368
    %v3609 = vpack.c.b16 %v3377, %v3369
    %v3610 = vpack.c.b16 %v3378, %v3370
    %v3611 = vpack.c.b16 %v3387, %v3379
    %v3612 = vpack.c.b16 %v3388, %v3380
    %v3613 = vpack.c.b16 %v3389, %v3381
    %v3614 = vpack.c.b16 %v3390, %v3382
    %v3615 = vpack.c.b16 %v3391, %v3383
    %v3616 = vpack.c.b16 %v3392, %v3384
    %v3617 = vpack.c.b16 %v3393, %v3385
    %v3618 = vpack.c.b16 %v3394, %v3386
    %v3619 = vpack.c.b16 %v3403, %v3395
    %v3620 = vpack.c.b16 %v3404, %v3396
    %v3621 = vpack.c.b16 %v3405, %v3397
    %v3622 = vpack.c.b16 %v3406, %v3398
    %v3623 = vpack.c.b16 %v3407, %v3399
    %v3624 = vpack.c.b16 %v3408, %v3400
    %v3625 = vpack.c.b16 %v3409, %v3401
    %v3626 = vpack.c.b16 %v3410, %v3402
    %v3627 = vpack.c.b16 %v3419, %v3411
    %v3628 = vpack.c.b16 %v3420, %v3412
    %v3629 = vpack.c.b16 %v3421, %v3413
    %v3630 = vpack.c.b16 %v3422, %v3414
    %v3631 = vpack.c.b16 %v3423, %v3415
    %v3632 = vpack.c.b16 %v3424, %v3416
    %v3633 = vpack.c.b16 %v3425, %v3417
    %v3634 = vpack.c.b16 %v3426, %v3418
    %v3635 = vpack.c.b16 %v3435, %v3427
    %v3636 = vpack.c.b16 %v3436, %v3428
    %v3637 = vpack.c.b16 %v3437, %v3429
    %v3638 = vpack.c.b16 %v3438, %v3430
    %v3639 = vpack.c.b16 %v3439, %v3431
    %v3640 = vpack.c.b16 %v3440, %v3432
    %v3641 = vpack.c.b16 %v3441, %v3433
    %v3642 = vpack.c.b16 %v3442, %v3434
    %v3643 = vpack.c.b16 %v3451, %v3443
    %v3644 = vpack.c.b16 %v3452, %v3444
    %v3645 = vpack.c.b16 %v3453, %v3445
    %v3646 = vpack.c.b16 %v3454, %v3446
    %v3647 = vpack.c.b16 %v3455, %v3447
    %v3648 = vpack.c.b16 %v3456, %v3448
    %v3649 = vpack.c.b16 %v3457, %v3449
    %v3650 = vpack.c.b16 %v3458, %v3450
    %v3651 = vpack.c.b16 %v3467, %v3459
    %v3652 = vpack.c.b16 %v3468, %v3460
    %v3653 = vpack.c.b16 %v3469, %v3461
    %v3654 = vpack.c.b16 %v3470, %v3462
    %v3655 = vpack.c.b16 %v3471, %v3463
    %v3656 = vpack.c.b16 %v3472, %v3464
    %v3657 = vpack.c.b16 %v3473, %v3465
    %v3658 = vpack.c.b16 %v3474, %v3466
    %v3659 = vpack.c.b16 %v3483, %v3475
    %v3660 = vpack.c.b16 %v3484, %v3476
    %v3661 = vpack.c.b16 %v3485, %v3477
    %v3662 = vpack.c.b16 %v3486, %v3478
    %v3663 = vpack.c.b16 %v3487, %v3479
    %v3664 = vpack.c.b16 %v3488, %v3480
    %v3665 = vpack.c.b16 %v3489, %v3481
    %v3666 = vpack.c.b16 %v3490, %v3482
    %v3667 = vpack.c.b16 %v3499, %v3491
    %v3668 = vpack.c.b16 %v3500, %v3492
    %v3669 = vpack.c.b16 %v3501, %v3493
    %v3670 = vpack.c.b16 %v3502, %v3494
    %v3671 = vpack.c.b16 %v3503, %v3495
    %v3672 = vpack.c.b16 %v3504, %v3496
    %v3673 = vpack.c.b16 %v3505, %v3497
    %v3674 = vpack.c.b16 %v3506, %v3498
    %v3675 = vpack.c.b16 %v3515, %v3507
    %v3676 = vpack.c.b16 %v3516, %v3508
    %v3677 = vpack.c.b16 %v3517, %v3509
    %v3678 = vpack.c.b16 %v3518, %v3510
    %v3679 = vpack.c.b16 %v3519, %v3511
    %v3680 = vpack.c.b16 %v3520, %v3512
    %v3681 = vpack.c.b16 %v3521, %v3513
    %v3682 = vpack.c.b16 %v3522, %v3514
    %v3683 = vpack.c.b16 %v3531, %v3523
    %v3684 = vpack.c.b16 %v3532, %v3524
    %v3685 = vpack.c.b16 %v3533, %v3525
    %v3686 = vpack.c.b16 %v3534, %v3526
    %v3687 = vpack.c.b16 %v3535, %v3527
    %v3688 = vpack.c.b16 %v3536, %v3528
    %v3689 = vpack.c.b16 %v3537, %v3529
    %v3690 = vpack.c.b16 %v3538, %v3530
    %v3691 = vpack.c.b16 %v3547, %v3539
    %v3692 = vpack.c.b16 %v3548, %v3540
    %v3693 = vpack.c.b16 %v3549, %v3541
    %v3694 = vpack.c.b16 %v3550, %v3542
    %v3695 = vpack.c.b16 %v3551, %v3543
    %v3696 = vpack.c.b16 %v3552, %v3544
    %v3697 = vpack.c.b16 %v3553, %v3545
    %v3698 = vpack.c.b16 %v3554, %v3546
    %v3699 = vpack.c.b16 %v3563, %v3555
    %v3700 = vpack.c.b16 %v3564, %v3556
    %v3701 = vpack.c.b16 %v3565, %v3557
    %v3702 = vpack.c.b16 %v3566, %v3558
    %v3703 = vpack.c.b16 %v3567, %v3559
    %v3704 = vpack.c.b16 %v3568, %v3560
    %v3705 = vpack.c.b16 %v3569, %v3561
    %v3706 = vpack.c.b16 %v3570, %v3562
    %v3707 = vpack.c.b16 %v3579, %v3571
    %v3708 = vpack.c.b16 %v3580, %v3572
    %v3709 = vpack.c.b16 %v3581, %v3573
    %v3710 = vpack.c.b16 %v3582, %v3574
    %v3711 = vpack.c.b16 %v3583, %v3575
    %v3712 = vpack.c.b16 %v3584, %v3576
    %v3713 = vpack.c.b16 %v3585, %v3577
    %v3714 = vpack.c.b16 %v3586, %v3578
    %3843 = vmatprep.subr.bf16.mxu0 %v3588
    %3844 = vmatpush1.bf16.msra.mxu0 %v3587
    %3845 = vmatprep.subr.bf16.mxu0 %v3596
    %3846 = vmatpush1.bf16.msra.mxu0 %v3595
    %3847 = vmatprep.subr.bf16.mxu0 %v3604
    %3848 = vmatpush1.bf16.msra.mxu0 %v3603
    %3849 = vmatprep.subr.bf16.mxu0 %v3612
    %3850 = vmatpush1.bf16.msra.mxu0 %v3611
    %3851 = vmatprep.subr.bf16.mxu0 %v3620
    %3852 = vmatpush1.bf16.msra.mxu0 %v3619
    %3853 = vmatprep.subr.bf16.mxu0 %v3628
    %3854 = vmatpush1.bf16.msra.mxu0 %v3627
    %3855 = vmatprep.subr.bf16.mxu0 %v3636
    %3856 = vmatpush1.bf16.msra.mxu0 %v3635
    %3857 = vmatprep.subr.bf16.mxu0 %v3644
    %3858 = vmatpush1.bf16.msra.mxu0 %v3643
    %3859 = vmatprep.subr.bf16.mxu0 %v3652
    %3860 = vmatpush1.bf16.msra.mxu0 %v3651
    %3861 = vmatprep.subr.bf16.mxu0 %v3660
    %3862 = vmatpush1.bf16.msra.mxu0 %v3659
    %3863 = vmatprep.subr.bf16.mxu0 %v3668
    %3864 = vmatpush1.bf16.msra.mxu0 %v3667
    %3865 = vmatprep.subr.bf16.mxu0 %v3676
    %3866 = vmatpush1.bf16.msra.mxu0 %v3675
    %3867 = vmatprep.subr.bf16.mxu0 %v3684
    %3868 = vmatpush1.bf16.msra.mxu0 %v3683
    %3869 = vmatprep.subr.bf16.mxu0 %v3692
    %3870 = vmatpush1.bf16.msra.mxu0 %v3691
    %3871 = vmatprep.subr.bf16.mxu0 %v3700
    %3872 = vmatpush1.bf16.msra.mxu0 %v3699
    %3873 = vmatprep.subr.bf16.mxu0 %v3708
    %3874 = vmatpush1.bf16.msra.mxu0 %v3707
    %3875 = vmatprep.mubr.bf16.mxu0 %v3028
    %3876 = vmatmul.mubr.bf16.gmra.mrb[0].mxu0 %v3027
    %v3877 = vpop.f32.mrb[0].mxu0
    %v3878 = vadd.f32 %v3166, %v3877
    %v3879 = vpop.f32.mrb[0].mxu0
    %v3880 = vadd.f32 %v3170, %v3879
    %v3881 = vpop.f32.mrb[0].mxu0
    %v3882 = vadd.f32 %v3166, %v3881
    %v3883 = vpop.f32.mrb[0].mxu0
    %v3884 = vadd.f32 %v3170, %v3883
    %3885 = vmatprep.mubr.bf16.mxu0 %v3030
    %3886 = vmatmul.mubr.bf16.gmra.mrb[0].mxu0 %v3029
    %v3887 = vpop.f32.mrb[0].mxu0
    %v3888 = vadd.f32 %v3166, %v3887
    %v3889 = vpop.f32.mrb[0].mxu0
    %v3890 = vadd.f32 %v3170, %v3889
    %v3891 = vpop.f32.mrb[0].mxu0
    %v3892 = vadd.f32 %v3166, %v3891
    %v3893 = vpop.f32.mrb[0].mxu0
    %v3894 = vadd.f32 %v3170, %v3893
    %3895 = vmatprep.mubr.bf16.mxu0 %v3032
    %3896 = vmatmul.mubr.bf16.gmra.mrb[0].mxu0 %v3031
    %v3897 = vpop.f32.mrb[0].mxu0
    %v3898 = vadd.f32 %v3166, %v3897
    %v3899 = vpop.f32.mrb[0].mxu0
    %v3900 = vadd.f32 %v3170, %v3899
    %v3901 = vpop.f32.mrb[0].mxu0
    %v3902 = vadd.f32 %v3166, %v3901
    %v3903 = vpop.f32.mrb[0].mxu0
    %v3904 = vadd.f32 %v3170, %v3903
    %3905 = vdwg.mxu0
    %3906 = vmatprep.subr.bf16.mxu0 %v3590
    %3907 = vmatpush1.bf16.msra.mxu0 %v3589
    %3908 = vmatprep.subr.bf16.mxu0 %v3598
    %3909 = vmatpush1.bf16.msra.mxu0 %v3597
    %3910 = vmatprep.subr.bf16.mxu0 %v3606
    %3911 = vmatpush1.bf16.msra.mxu0 %v3605
    %3912 = vmatprep.subr.bf16.mxu0 %v3614
    %3913 = vmatpush1.bf16.msra.mxu0 %v3613
    %3914 = vmatprep.subr.bf16.mxu0 %v3622
    %3915 = vmatpush1.bf16.msra.mxu0 %v3621
    %3916 = vmatprep.subr.bf16.mxu0 %v3630
    %3917 = vmatpush1.bf16.msra.mxu0 %v3629
    %3918 = vmatprep.subr.bf16.mxu0 %v3638
    %3919 = vmatpush1.bf16.msra.mxu0 %v3637
    %3920 = vmatprep.subr.bf16.mxu0 %v3646
    %3921 = vmatpush1.bf16.msra.mxu0 %v3645
    %3922 = vmatprep.subr.bf16.mxu0 %v3654
    %3923 = vmatpush1.bf16.msra.mxu0 %v3653
    %3924 = vmatprep.subr.bf16.mxu0 %v3662
    %3925 = vmatpush1.bf16.msra.mxu0 %v3661
    %3926 = vmatprep.subr.bf16.mxu0 %v3670
    %3927 = vmatpush1.bf16.msra.mxu0 %v3669
    %3928 = vmatprep.subr.bf16.mxu0 %v3678
    %3929 = vmatpush1.bf16.msra.mxu0 %v3677
    %3930 = vmatprep.subr.bf16.mxu0 %v3686
    %3931 = vmatpush1.bf16.msra.mxu0 %v3685
    %3932 = vmatprep.subr.bf16.mxu0 %v3694
    %3933 = vmatpush1.bf16.msra.mxu0 %v3693
    %3934 = vmatprep.subr.bf16.mxu0 %v3702
    %3935 = vmatpush1.bf16.msra.mxu0 %v3701
    %3936 = vmatprep.subr.bf16.mxu0 %v3710
    %3937 = vmatpush1.bf16.msra.mxu0 %v3709
    %3938 = vmatprep.mubr.bf16.mxu0 %v3028
    %3939 = vmatmul.mubr.bf16.gmra.mrb[0].mxu0 %v3027
    %v3940 = vpop.f32.mrb[0].mxu0
    %v3941 = vadd.f32 %v3174, %v3940
    %v3942 = vpop.f32.mrb[0].mxu0
    %v3943 = vadd.f32 %v3178, %v3942
    %v3944 = vpop.f32.mrb[0].mxu0
    %v3945 = vadd.f32 %v3174, %v3944
    %v3946 = vpop.f32.mrb[0].mxu0
    %v3947 = vadd.f32 %v3178, %v3946
    %3948 = vmatprep.mubr.bf16.mxu0 %v3030
    %3949 = vmatmul.mubr.bf16.gmra.mrb[0].mxu0 %v3029
    %v3950 = vpop.f32.mrb[0].mxu0
    %v3951 = vadd.f32 %v3174, %v3950
    %v3952 = vpop.f32.mrb[0].mxu0
    %v3953 = vadd.f32 %v3178, %v3952
    %v3954 = vpop.f32.mrb[0].mxu0
    %v3955 = vadd.f32 %v3174, %v3954
    %v3956 = vpop.f32.mrb[0].mxu0
    %v3957 = vadd.f32 %v3178, %v3956
    %3958 = vmatprep.mubr.bf16.mxu0 %v3032
    %3959 = vmatmul.mubr.bf16.gmra.mrb[0].mxu0 %v3031
    %v3960 = vpop.f32.mrb[0].mxu0
    %v3961 = vadd.f32 %v3174, %v3960
    %v3962 = vpop.f32.mrb[0].mxu0
    %v3963 = vadd.f32 %v3178, %v3962
    %v3964 = vpop.f32.mrb[0].mxu0
    %v3965 = vadd.f32 %v3174, %v3964
    %v3966 = vpop.f32.mrb[0].mxu0
    %v3967 = vadd.f32 %v3178, %v3966
    %3968 = vdwg.mxu0
    %3969 = vmatprep.subr.bf16.mxu0 %v3592
    %3970 = vmatpush1.bf16.msra.mxu0 %v3591
    %3971 = vmatprep.subr.bf16.mxu0 %v3600
    %3972 = vmatpush1.bf16.msra.mxu0 %v3599
    %3973 = vmatprep.subr.bf16.mxu0 %v3608
    %3974 = vmatpush1.bf16.msra.mxu0 %v3607
    %3975 = vmatprep.subr.bf16.mxu0 %v3616
    %3976 = vmatpush1.bf16.msra.mxu0 %v3615
    %3977 = vmatprep.subr.bf16.mxu0 %v3624
    %3978 = vmatpush1.bf16.msra.mxu0 %v3623
    %3979 = vmatprep.subr.bf16.mxu0 %v3632
    %3980 = vmatpush1.bf16.msra.mxu0 %v3631
    %3981 = vmatprep.subr.bf16.mxu0 %v3640
    %3982 = vmatpush1.bf16.msra.mxu0 %v3639
    %3983 = vmatprep.subr.bf16.mxu0 %v3648
    %3984 = vmatpush1.bf16.msra.mxu0 %v3647
    %3985 = vmatprep.subr.bf16.mxu0 %v3656
    %3986 = vmatpush1.bf16.msra.mxu0 %v3655
    %3987 = vmatprep.subr.bf16.mxu0 %v3664
    %3988 = vmatpush1.bf16.msra.mxu0 %v3663
    %3989 = vmatprep.subr.bf16.mxu0 %v3672
    %3990 = vmatpush1.bf16.msra.mxu0 %v3671
    %3991 = vmatprep.subr.bf16.mxu0 %v3680
    %3992 = vmatpush1.bf16.msra.mxu0 %v3679
    %3993 = vmatprep.subr.bf16.mxu0 %v3688
    %3994 = vmatpush1.bf16.msra.mxu0 %v3687
    %3995 = vmatprep.subr.bf16.mxu0 %v3696
    %3996 = vmatpush1.bf16.msra.mxu0 %v3695
    %3997 = vmatprep.subr.bf16.mxu0 %v3704
    %3998 = vmatpush1.bf16.msra.mxu0 %v3703
    %3999 = vmatprep.subr.bf16.mxu0 %v3712
    %4000 = vmatpush1.bf16.msra.mxu0 %v3711
    %4001 = vmatprep.mubr.bf16.mxu0 %v3028
    %4002 = vmatmul.mubr.bf16.gmra.mrb[0].mxu0 %v3027
    %v4003 = vpop.f32.mrb[0].mxu0
    %v4004 = vadd.f32 %v3182, %v4003
    %v4005 = vpop.f32.mrb[0].mxu0
    %v4006 = vadd.f32 %v3186, %v4005
    %v4007 = vpop.f32.mrb[0].mxu0
    %v4008 = vadd.f32 %v3182, %v4007
    %v4009 = vpop.f32.mrb[0].mxu0
    %v4010 = vadd.f32 %v3186, %v4009
    %4011 = vmatprep.mubr.bf16.mxu0 %v3030
    %4012 = vmatmul.mubr.bf16.gmra.mrb[0].mxu0 %v3029
    %v4013 = vpop.f32.mrb[0].mxu0
    %v4014 = vadd.f32 %v3182, %v4013
    %v4015 = vpop.f32.mrb[0].mxu0
    %v4016 = vadd.f32 %v3186, %v4015
    %v4017 = vpop.f32.mrb[0].mxu0
    %v4018 = vadd.f32 %v3182, %v4017
    %v4019 = vpop.f32.mrb[0].mxu0
    %v4020 = vadd.f32 %v3186, %v4019
    %4021 = vmatprep.mubr.bf16.mxu0 %v3032
    %4022 = vmatmul.mubr.bf16.gmra.mrb[0].mxu0 %v3031
    %v4023 = vpop.f32.mrb[0].mxu0
    %v4024 = vadd.f32 %v3182, %v4023
    %v4025 = vpop.f32.mrb[0].mxu0
    %v4026 = vadd.f32 %v3186, %v4025
    %v4027 = vpop.f32.mrb[0].mxu0
    %v4028 = vadd.f32 %v3182, %v4027
    %v4029 = vpop.f32.mrb[0].mxu0
    %v4030 = vadd.f32 %v3186, %v4029
    %4031 = vdwg.mxu0
    %4032 = vmatprep.subr.bf16.mxu0 %v3594
    %4033 = vmatpush1.bf16.msra.mxu0 %v3593
    %4034 = vmatprep.subr.bf16.mxu0 %v3602
    %4035 = vmatpush1.bf16.msra.mxu0 %v3601
    %4036 = vmatprep.subr.bf16.mxu0 %v3610
    %4037 = vmatpush1.bf16.msra.mxu0 %v3609
    %4038 = vmatprep.subr.bf16.mxu0 %v3618
    %4039 = vmatpush1.bf16.msra.mxu0 %v3617
    %4040 = vmatprep.subr.bf16.mxu0 %v3626
    %4041 = vmatpush1.bf16.msra.mxu0 %v3625
    %4042 = vmatprep.subr.bf16.mxu0 %v3634
    %4043 = vmatpush1.bf16.msra.mxu0 %v3633
    %4044 = vmatprep.subr.bf16.mxu0 %v3642
    %4045 = vmatpush1.bf16.msra.mxu0 %v3641
    %4046 = vmatprep.subr.bf16.mxu0 %v3650
    %4047 = vmatpush1.bf16.msra.mxu0 %v3649
    %4048 = vmatprep.subr.bf16.mxu0 %v3658
    %4049 = vmatpush1.bf16.msra.mxu0 %v3657
    %4050 = vmatprep.subr.bf16.mxu0 %v3666
    %4051 = vmatpush1.bf16.msra.mxu0 %v3665
    %4052 = vmatprep.subr.bf16.mxu0 %v3674
    %4053 = vmatpush1.bf16.msra.mxu0 %v3673
    %4054 = vmatprep.subr.bf16.mxu0 %v3682
    %4055 = vmatpush1.bf16.msra.mxu0 %v3681
    %4056 = vmatprep.subr.bf16.mxu0 %v3690
    %4057 = vmatpush1.bf16.msra.mxu0 %v3689
    %4058 = vmatprep.subr.bf16.mxu0 %v3698
    %4059 = vmatpush1.bf16.msra.mxu0 %v3697
    %4060 = vmatprep.subr.bf16.mxu0 %v3706
    %4061 = vmatpush1.bf16.msra.mxu0 %v3705
    %4062 = vmatprep.subr.bf16.mxu0 %v3714
    %4063 = vmatpush1.bf16.msra.mxu0 %v3713
    %4064 = vmatprep.mubr.bf16.mxu0 %v3028
    %4065 = vmatmul.mubr.bf16.gmra.mrb[0].mxu0 %v3027
    %v4066 = vpop.f32.mrb[0].mxu0
    %v4067 = vadd.f32 %v3190, %v4066
    %v4068 = vpop.f32.mrb[0].mxu0
    %v4069 = vadd.f32 %v3194, %v4068
    %v4070 = vpop.f32.mrb[0].mxu0
    %v4071 = vadd.f32 %v3190, %v4070
    %v4072 = vpop.f32.mrb[0].mxu0
    %v4073 = vadd.f32 %v3194, %v4072
    %4074 = vmatprep.mubr.bf16.mxu0 %v3030
    %4075 = vmatmul.mubr.bf16.gmra.mrb[0].mxu0 %v3029
    %v4076 = vpop.f32.mrb[0].mxu0
    %v4077 = vadd.f32 %v3190, %v4076
    %v4078 = vpop.f32.mrb[0].mxu0
    %v4079 = vadd.f32 %v3194, %v4078
    %v4080 = vpop.f32.mrb[0].mxu0
    %v4081 = vadd.f32 %v3190, %v4080
    %v4082 = vpop.f32.mrb[0].mxu0
    %v4083 = vadd.f32 %v3194, %v4082
    %4084 = vmatprep.mubr.bf16.mxu0 %v3032
    %4085 = vmatmul.mubr.bf16.gmra.mrb[0].mxu0 %v3031
    %v4086 = vpop.f32.mrb[0].mxu0
    %v4087 = vadd.f32 %v3190, %v4086
    %v4088 = vpop.f32.mrb[0].mxu0
    %v4089 = vadd.f32 %v3194, %v4088
    %v4090 = vpop.f32.mrb[0].mxu0
    %v4091 = vadd.f32 %v3190, %v4090
    %v4092 = vpop.f32.mrb[0].mxu0
    %v4093 = vadd.f32 %v3194, %v4092
    %4094 = vdwg.mxu0
    %v4095 = vmul.f32 %v3878, 1.702
    %v4096 = vmul.f32 %v3880, 1.702
    %v4097 = vmul.f32 %v3941, 1.702
    %v4098 = vmul.f32 %v3943, 1.702
    %v4099 = vmul.f32 %v4004, 1.702
    %v4100 = vmul.f32 %v4006, 1.702
    %v4101 = vmul.f32 %v4067, 1.702
    %v4102 = vmul.f32 %v4069, 1.702
    %v4103 = vmul.f32 %v3882, 1.702
    %v4104 = vmul.f32 %v3884, 1.702
    %v4105 = vmul.f32 %v3945, 1.702
    %v4106 = vmul.f32 %v3947, 1.702
    %v4107 = vmul.f32 %v4008, 1.702
    %v4108 = vmul.f32 %v4010, 1.702
    %v4109 = vmul.f32 %v4071, 1.702
    %v4110 = vmul.f32 %v4073, 1.702
    %v4111 = vmul.f32 %v3888, 1.702
    %v4112 = vmul.f32 %v3890, 1.702
    %v4113 = vmul.f32 %v3951, 1.702
    %v4114 = vmul.f32 %v3953, 1.702
    %v4115 = vmul.f32 %v4014, 1.702
    %v4116 = vmul.f32 %v4016, 1.702
    %v4117 = vmul.f32 %v4077, 1.702
    %v4118 = vmul.f32 %v4079, 1.702
    %v4119 = vmul.f32 %v3892, 1.702
    %v4120 = vmul.f32 %v3894, 1.702
    %v4121 = vmul.f32 %v3955, 1.702
    %v4122 = vmul.f32 %v3957, 1.702
    %v4123 = vmul.f32 %v4018, 1.702
    %v4124 = vmul.f32 %v4020, 1.702
    %v4125 = vmul.f32 %v4081, 1.702
    %v4126 = vmul.f32 %v4083, 1.702
    %v4127 = vmul.f32 %v3898, 1.702
    %v4128 = vmul.f32 %v3900, 1.702
    %v4129 = vmul.f32 %v3961, 1.702
    %v4130 = vmul.f32 %v3963, 1.702
    %v4131 = vmul.f32 %v4024, 1.702
    %v4132 = vmul.f32 %v4026, 1.702
    %v4133 = vmul.f32 %v4087, 1.702
    %v4134 = vmul.f32 %v4089, 1.702
    %v4135 = vmul.f32 %v3902, 1.702
    %v4136 = vmul.f32 %v3904, 1.702
    %v4137 = vmul.f32 %v3965, 1.702
    %v4138 = vmul.f32 %v3967, 1.702
    %v4139 = vmul.f32 %v4028, 1.702
    %v4140 = vmul.f32 %v4030, 1.702
    %v4141 = vmul.f32 %v4091, 1.702
    %v4142 = vmul.f32 %v4093, 1.702
    %v4143 = vxor.u32 %v4095, 2147483648
    %v4144 = vxor.u32 %v4096, 2147483648
    %v4145 = vxor.u32 %v4097, 2147483648
    %v4146 = vxor.u32 %v4098, 2147483648
    %v4147 = vxor.u32 %v4099, 2147483648
    %v4148 = vxor.u32 %v4100, 2147483648
    %v4149 = vxor.u32 %v4101, 2147483648
    %v4150 = vxor.u32 %v4102, 2147483648
    %v4151 = vxor.u32 %v4103, 2147483648
    %v4152 = vxor.u32 %v4104, 2147483648
    %v4153 = vxor.u32 %v4105, 2147483648
    %v4154 = vxor.u32 %v4106, 2147483648
    %v4155 = vxor.u32 %v4107, 2147483648
    %v4156 = vxor.u32 %v4108, 2147483648
    %v4157 = vxor.u32 %v4109, 2147483648
    %v4158 = vxor.u32 %v4110, 2147483648
    %v4159 = vxor.u32 %v4111, 2147483648
    %v4160 = vxor.u32 %v4112, 2147483648
    %v4161 = vxor.u32 %v4113, 2147483648
    %v4162 = vxor.u32 %v4114, 2147483648
    %v4163 = vxor.u32 %v4115, 2147483648
    %v4164 = vxor.u32 %v4116, 2147483648
    %v4165 = vxor.u32 %v4117, 2147483648
    %v4166 = vxor.u32 %v4118, 2147483648
    %v4167 = vxor.u32 %v4119, 2147483648
    %v4168 = vxor.u32 %v4120, 2147483648
    %v4169 = vxor.u32 %v4121, 2147483648
    %v4170 = vxor.u32 %v4122, 2147483648
    %v4171 = vxor.u32 %v4123, 2147483648
    %v4172 = vxor.u32 %v4124, 2147483648
    %v4173 = vxor.u32 %v4125, 2147483648
    %v4174 = vxor.u32 %v4126, 2147483648
    %v4175 = vxor.u32 %v4127, 2147483648
    %v4176 = vxor.u32 %v4128, 2147483648
    %v4177 = vxor.u32 %v4129, 2147483648
    %v4178 = vxor.u32 %v4130, 2147483648
    %v4179 = vxor.u32 %v4131, 2147483648
    %v4180 = vxor.u32 %v4132, 2147483648
    %v4181 = vxor.u32 %v4133, 2147483648
    %v4182 = vxor.u32 %v4134, 2147483648
    %v4183 = vxor.u32 %v4135, 2147483648
    %v4184 = vxor.u32 %v4136, 2147483648
    %v4185 = vxor.u32 %v4137, 2147483648
    %v4186 = vxor.u32 %v4138, 2147483648
    %v4187 = vxor.u32 %v4139, 2147483648
    %v4188 = vxor.u32 %v4140, 2147483648
    %v4189 = vxor.u32 %v4141, 2147483648
    %v4190 = vxor.u32 %v4142, 2147483648
    %v4191 = vmul.f32 %v4143, 1.442695
    %v4192 = vpow.pop %v4191
    %v4193 = vmul.f32 %v4144, 1.442695
    %v4194 = vpow.pop %v4193
    %v4195 = vmul.f32 %v4145, 1.442695
    %v4196 = vpow.pop %v4195
    %v4197 = vmul.f32 %v4146, 1.442695
    %v4198 = vpow.pop %v4197
    %v4199 = vmul.f32 %v4147, 1.442695
    %v4200 = vpow.pop %v4199
    %v4201 = vmul.f32 %v4148, 1.442695
    %v4202 = vpow.pop %v4201
    %v4203 = vmul.f32 %v4149, 1.442695
    %v4204 = vpow.pop %v4203
    %v4205 = vmul.f32 %v4150, 1.442695
    %v4206 = vpow.pop %v4205
    %v4207 = vmul.f32 %v4151, 1.442695
    %v4208 = vpow.pop %v4207
    %v4209 = vmul.f32 %v4152, 1.442695
    %v4210 = vpow.pop %v4209
    %v4211 = vmul.f32 %v4153, 1.442695
    %v4212 = vpow.pop %v4211
    %v4213 = vmul.f32 %v4154, 1.442695
    %v4214 = vpow.pop %v4213
    %v4215 = vmul.f32 %v4155, 1.442695
    %v4216 = vpow.pop %v4215
    %v4217 = vmul.f32 %v4156, 1.442695
    %v4218 = vpow.pop %v4217
    %v4219 = vmul.f32 %v4157, 1.442695
    %v4220 = vpow.pop %v4219
    %v4221 = vmul.f32 %v4158, 1.442695
    %v4222 = vpow.pop %v4221
    %v4223 = vmul.f32 %v4159, 1.442695
    %v4224 = vpow.pop %v4223
    %v4225 = vmul.f32 %v4160, 1.442695
    %v4226 = vpow.pop %v4225
    %v4227 = vmul.f32 %v4161, 1.442695
    %v4228 = vpow.pop %v4227
    %v4229 = vmul.f32 %v4162, 1.442695
    %v4230 = vpow.pop %v4229
    %v4231 = vmul.f32 %v4163, 1.442695
    %v4232 = vpow.pop %v4231
    %v4233 = vmul.f32 %v4164, 1.442695
    %v4234 = vpow.pop %v4233
    %v4235 = vmul.f32 %v4165, 1.442695
    %v4236 = vpow.pop %v4235
    %v4237 = vmul.f32 %v4166, 1.442695
    %v4238 = vpow.pop %v4237
    %v4239 = vmul.f32 %v4167, 1.442695
    %v4240 = vpow.pop %v4239
    %v4241 = vmul.f32 %v4168, 1.442695
    %v4242 = vpow.pop %v4241
    %v4243 = vmul.f32 %v4169, 1.442695
    %v4244 = vpow.pop %v4243
    %v4245 = vmul.f32 %v4170, 1.442695
    %v4246 = vpow.pop %v4245
    %v4247 = vmul.f32 %v4171, 1.442695
    %v4248 = vpow.pop %v4247
    %v4249 = vmul.f32 %v4172, 1.442695
    %v4250 = vpow.pop %v4249
    %v4251 = vmul.f32 %v4173, 1.442695
    %v4252 = vpow.pop %v4251
    %v4253 = vmul.f32 %v4174, 1.442695
    %v4254 = vpow.pop %v4253
    %v4255 = vmul.f32 %v4175, 1.442695
    %v4256 = vpow.pop %v4255
    %v4257 = vmul.f32 %v4176, 1.442695
    %v4258 = vpow.pop %v4257
    %v4259 = vmul.f32 %v4177, 1.442695
    %v4260 = vpow.pop %v4259
    %v4261 = vmul.f32 %v4178, 1.442695
    %v4262 = vpow.pop %v4261
    %v4263 = vmul.f32 %v4179, 1.442695
    %v4264 = vpow.pop %v4263
    %v4265 = vmul.f32 %v4180, 1.442695
    %v4266 = vpow.pop %v4265
    %v4267 = vmul.f32 %v4181, 1.442695
    %v4268 = vpow.pop %v4267
    %v4269 = vmul.f32 %v4182, 1.442695
    %v4270 = vpow.pop %v4269
    %v4271 = vmul.f32 %v4183, 1.442695
    %v4272 = vpow.pop %v4271
    %v4273 = vmul.f32 %v4184, 1.442695
    %v4274 = vpow.pop %v4273
    %v4275 = vmul.f32 %v4185, 1.442695
    %v4276 = vpow.pop %v4275
    %v4277 = vmul.f32 %v4186, 1.442695
    %v4278 = vpow.pop %v4277
    %v4279 = vmul.f32 %v4187, 1.442695
    %v4280 = vpow.pop %v4279
    %v4281 = vmul.f32 %v4188, 1.442695
    %v4282 = vpow.pop %v4281
    %v4283 = vmul.f32 %v4189, 1.442695
    %v4284 = vpow.pop %v4283
    %v4285 = vmul.f32 %v4190, 1.442695
    %v4286 = vpow.pop %v4285
    %v4287 = vadd.f32 %v4192, 1.0
    %v4288 = vadd.f32 %v4194, 1.0
    %v4289 = vadd.f32 %v4196, 1.0
    %v4290 = vadd.f32 %v4198, 1.0
    %v4291 = vadd.f32 %v4200, 1.0
    %v4292 = vadd.f32 %v4202, 1.0
    %v4293 = vadd.f32 %v4204, 1.0
    %v4294 = vadd.f32 %v4206, 1.0
    %v4295 = vadd.f32 %v4208, 1.0
    %v4296 = vadd.f32 %v4210, 1.0
    %v4297 = vadd.f32 %v4212, 1.0
    %v4298 = vadd.f32 %v4214, 1.0
    %v4299 = vadd.f32 %v4216, 1.0
    %v4300 = vadd.f32 %v4218, 1.0
    %v4301 = vadd.f32 %v4220, 1.0
    %v4302 = vadd.f32 %v4222, 1.0
    %v4303 = vadd.f32 %v4224, 1.0
    %v4304 = vadd.f32 %v4226, 1.0
    %v4305 = vadd.f32 %v4228, 1.0
    %v4306 = vadd.f32 %v4230, 1.0
    %v4307 = vadd.f32 %v4232, 1.0
    %v4308 = vadd.f32 %v4234, 1.0
    %v4309 = vadd.f32 %v4236, 1.0
    %v4310 = vadd.f32 %v4238, 1.0
    %v4311 = vadd.f32 %v4240, 1.0
    %v4312 = vadd.f32 %v4242, 1.0
    %v4313 = vadd.f32 %v4244, 1.0
    %v4314 = vadd.f32 %v4246, 1.0
    %v4315 = vadd.f32 %v4248, 1.0
    %v4316 = vadd.f32 %v4250, 1.0
    %v4317 = vadd.f32 %v4252, 1.0
    %v4318 = vadd.f32 %v4254, 1.0
    %v4319 = vadd.f32 %v4256, 1.0
    %v4320 = vadd.f32 %v4258, 1.0
    %v4321 = vadd.f32 %v4260, 1.0
    %v4322 = vadd.f32 %v4262, 1.0
    %v4323 = vadd.f32 %v4264, 1.0
    %v4324 = vadd.f32 %v4266, 1.0
    %v4325 = vadd.f32 %v4268, 1.0
    %v4326 = vadd.f32 %v4270, 1.0
    %v4327 = vadd.f32 %v4272, 1.0
    %v4328 = vadd.f32 %v4274, 1.0
    %v4329 = vadd.f32 %v4276, 1.0
    %v4330 = vadd.f32 %v4278, 1.0
    %v4331 = vadd.f32 %v4280, 1.0
    %v4332 = vadd.f32 %v4282, 1.0
    %v4333 = vadd.f32 %v4284, 1.0
    %v4334 = vadd.f32 %v4286, 1.0
    %v4335 = vrcp.pop %v4287
    %v4336 = vmul.f32 1.0, %v4335
    %v4337 = vrcp.pop %v4288
    %v4338 = vmul.f32 1.0, %v4337
    %v4339 = vrcp.pop %v4289
    %v4340 = vmul.f32 1.0, %v4339
    %v4341 = vrcp.pop %v4290
    %v4342 = vmul.f32 1.0, %v4341
    %v4343 = vrcp.pop %v4291
    %v4344 = vmul.f32 1.0, %v4343
    %v4345 = vrcp.pop %v4292
    %v4346 = vmul.f32 1.0, %v4345
    %v4347 = vrcp.pop %v4293
    %v4348 = vmul.f32 1.0, %v4347
    %v4349 = vrcp.pop %v4294
    %v4350 = vmul.f32 1.0, %v4349
    %v4351 = vrcp.pop %v4295
    %v4352 = vmul.f32 1.0, %v4351
    %v4353 = vrcp.pop %v4296
    %v4354 = vmul.f32 1.0, %v4353
    %v4355 = vrcp.pop %v4297
    %v4356 = vmul.f32 1.0, %v4355
    %v4357 = vrcp.pop %v4298
    %v4358 = vmul.f32 1.0, %v4357
    %v4359 = vrcp.pop %v4299
    %v4360 = vmul.f32 1.0, %v4359
    %v4361 = vrcp.pop %v4300
    %v4362 = vmul.f32 1.0, %v4361
    %v4363 = vrcp.pop %v4301
    %v4364 = vmul.f32 1.0, %v4363
    %v4365 = vrcp.pop %v4302
    %v4366 = vmul.f32 1.0, %v4365
    %v4367 = vrcp.pop %v4303
    %v4368 = vmul.f32 1.0, %v4367
    %v4369 = vrcp.pop %v4304
    %v4370 = vmul.f32 1.0, %v4369
    %v4371 = vrcp.pop %v4305
    %v4372 = vmul.f32 1.0, %v4371
    %v4373 = vrcp.pop %v4306
    %v4374 = vmul.f32 1.0, %v4373
    %v4375 = vrcp.pop %v4307
    %v4376 = vmul.f32 1.0, %v4375
    %v4377 = vrcp.pop %v4308
    %v4378 = vmul.f32 1.0, %v4377
    %v4379 = vrcp.pop %v4309
    %v4380 = vmul.f32 1.0, %v4379
    %v4381 = vrcp.pop %v4310
    %v4382 = vmul.f32 1.0, %v4381
    %v4383 = vrcp.pop %v4311
    %v4384 = vmul.f32 1.0, %v4383
    %v4385 = vrcp.pop %v4312
    %v4386 = vmul.f32 1.0, %v4385
    %v4387 = vrcp.pop %v4313
    %v4388 = vmul.f32 1.0, %v4387
    %v4389 = vrcp.pop %v4314
    %v4390 = vmul.f32 1.0, %v4389
    %v4391 = vrcp.pop %v4315
    %v4392 = vmul.f32 1.0, %v4391
    %v4393 = vrcp.pop %v4316
    %v4394 = vmul.f32 1.0, %v4393
    %v4395 = vrcp.pop %v4317
    %v4396 = vmul.f32 1.0, %v4395
    %v4397 = vrcp.pop %v4318
    %v4398 = vmul.f32 1.0, %v4397
    %v4399 = vrcp.pop %v4319
    %v4400 = vmul.f32 1.0, %v4399
    %v4401 = vrcp.pop %v4320
    %v4402 = vmul.f32 1.0, %v4401
    %v4403 = vrcp.pop %v4321
    %v4404 = vmul.f32 1.0, %v4403
    %v4405 = vrcp.pop %v4322
    %v4406 = vmul.f32 1.0, %v4405
    %v4407 = vrcp.pop %v4323
    %v4408 = vmul.f32 1.0, %v4407
    %v4409 = vrcp.pop %v4324
    %v4410 = vmul.f32 1.0, %v4409
    %v4411 = vrcp.pop %v4325
    %v4412 = vmul.f32 1.0, %v4411
    %v4413 = vrcp.pop %v4326
    %v4414 = vmul.f32 1.0, %v4413
    %v4415 = vrcp.pop %v4327
    %v4416 = vmul.f32 1.0, %v4415
    %v4417 = vrcp.pop %v4328
    %v4418 = vmul.f32 1.0, %v4417
    %v4419 = vrcp.pop %v4329
    %v4420 = vmul.f32 1.0, %v4419
    %v4421 = vrcp.pop %v4330
    %v4422 = vmul.f32 1.0, %v4421
    %v4423 = vrcp.pop %v4331
    %v4424 = vmul.f32 1.0, %v4423
    %v4425 = vrcp.pop %v4332
    %v4426 = vmul.f32 1.0, %v4425
    %v4427 = vrcp.pop %v4333
    %v4428 = vmul.f32 1.0, %v4427
    %v4429 = vrcp.pop %v4334
    %v4430 = vmul.f32 1.0, %v4429
    %v4431 = vmul.f32 %v3878, %v4336
    %v4432 = vmul.f32 %v3880, %v4338
    %v4433 = vmul.f32 %v3941, %v4340
    %v4434 = vmul.f32 %v3943, %v4342
    %v4435 = vmul.f32 %v4004, %v4344
    %v4436 = vmul.f32 %v4006, %v4346
    %v4437 = vmul.f32 %v4067, %v4348
    %v4438 = vmul.f32 %v4069, %v4350
    %v4439 = vmul.f32 %v3882, %v4352
    %v4440 = vmul.f32 %v3884, %v4354
    %v4441 = vmul.f32 %v3945, %v4356
    %v4442 = vmul.f32 %v3947, %v4358
    %v4443 = vmul.f32 %v4008, %v4360
    %v4444 = vmul.f32 %v4010, %v4362
    %v4445 = vmul.f32 %v4071, %v4364
    %v4446 = vmul.f32 %v4073, %v4366
    %v4447 = vmul.f32 %v3888, %v4368
    %v4448 = vmul.f32 %v3890, %v4370
    %v4449 = vmul.f32 %v3951, %v4372
    %v4450 = vmul.f32 %v3953, %v4374
    %v4451 = vmul.f32 %v4014, %v4376
    %v4452 = vmul.f32 %v4016, %v4378
    %v4453 = vmul.f32 %v4077, %v4380
    %v4454 = vmul.f32 %v4079, %v4382
    %v4455 = vmul.f32 %v3892, %v4384
    %v4456 = vmul.f32 %v3894, %v4386
    %v4457 = vmul.f32 %v3955, %v4388
    %v4458 = vmul.f32 %v3957, %v4390
    %v4459 = vmul.f32 %v4018, %v4392
    %v4460 = vmul.f32 %v4020, %v4394
    %v4461 = vmul.f32 %v4081, %v4396
    %v4462 = vmul.f32 %v4083, %v4398
    %v4463 = vmul.f32 %v3898, %v4400
    %v4464 = vmul.f32 %v3900, %v4402
    %v4465 = vmul.f32 %v3961, %v4404
    %v4466 = vmul.f32 %v3963, %v4406
    %v4467 = vmul.f32 %v4024, %v4408
    %v4468 = vmul.f32 %v4026, %v4410
    %v4469 = vmul.f32 %v4087, %v4412
    %v4470 = vmul.f32 %v4089, %v4414
    %v4471 = vmul.f32 %v3902, %v4416
    %v4472 = vmul.f32 %v3904, %v4418
    %v4473 = vmul.f32 %v3965, %v4420
    %v4474 = vmul.f32 %v3967, %v4422
    %v4475 = vmul.f32 %v4028, %v4424
    %v4476 = vmul.f32 %v4030, %v4426
    %v4477 = vmul.f32 %v4091, %v4428
    %v4478 = vmul.f32 %v4093, %v4430
    %v4479 = vpack.c.bf16 %v4439, %v4431
    %v4480 = vpack.c.bf16 %v4440, %v4432
    %v4481 = vpack.c.bf16 %v4441, %v4433
    %v4482 = vpack.c.bf16 %v4442, %v4434
    %v4483 = vpack.c.bf16 %v4443, %v4435
    %v4484 = vpack.c.bf16 %v4444, %v4436
    %v4485 = vpack.c.bf16 %v4445, %v4437
    %v4486 = vpack.c.bf16 %v4446, %v4438
    %v4487 = vpack.c.bf16 %v4455, %v4447
    %v4488 = vpack.c.bf16 %v4456, %v4448
    %v4489 = vpack.c.bf16 %v4457, %v4449
    %v4490 = vpack.c.bf16 %v4458, %v4450
    %v4491 = vpack.c.bf16 %v4459, %v4451
    %v4492 = vpack.c.bf16 %v4460, %v4452
    %v4493 = vpack.c.bf16 %v4461, %v4453
    %v4494 = vpack.c.bf16 %v4462, %v4454
    %v4495 = vpack.c.bf16 %v4471, %v4463
    %v4496 = vpack.c.bf16 %v4472, %v4464
    %v4497 = vpack.c.bf16 %v4473, %v4465
    %v4498 = vpack.c.bf16 %v4474, %v4466
    %v4499 = vpack.c.bf16 %v4475, %v4467
    %v4500 = vpack.c.bf16 %v4476, %v4468
    %v4501 = vpack.c.bf16 %v4477, %v4469
    %v4502 = vpack.c.bf16 %v4478, %v4470
    %v4503 = vld [vmem:[#allocation20] sm:$0xff]
    %v4504 = vld [vmem:[#allocation20 + $0x8] sm:$0xff]
    %v4505 = vld [vmem:[#allocation20 + $0x10] sm:$0xff]
    %v4506 = vld [vmem:[#allocation20 + $0x18] sm:$0xff]
    %v4507 = vld [vmem:[#allocation20 + $0x20] sm:$0xff]
    %v4508 = vld [vmem:[#allocation20 + $0x28] sm:$0xff]
    %v4509 = vld [vmem:[#allocation20 + $0x30] sm:$0xff]
    %v4510 = vld [vmem:[#allocation20 + $0x38] sm:$0xff]
    %v4511 = vld [vmem:[#allocation20 + $0x40] sm:$0xff]
    %v4512 = vld [vmem:[#allocation20 + $0x48] sm:$0xff]
    %v4513 = vld [vmem:[#allocation20 + $0x50] sm:$0xff]
    %v4514 = vld [vmem:[#allocation20 + $0x58] sm:$0xff]
    %v4515 = vld [vmem:[#allocation20 + $0x60] sm:$0xff]
    %v4516 = vld [vmem:[#allocation20 + $0x68] sm:$0xff]
    %v4517 = vld [vmem:[#allocation20 + $0x70] sm:$0xff]
    %v4518 = vld [vmem:[#allocation20 + $0x78] sm:$0xff]
    %v4519 = vld [vmem:[#allocation20 + $0x80] sm:$0xff]
    %v4520 = vld [vmem:[#allocation20 + $0x88] sm:$0xff]
    %v4521 = vld [vmem:[#allocation20 + $0x90] sm:$0xff]
    %v4522 = vld [vmem:[#allocation20 + $0x98] sm:$0xff]
    %v4523 = vld [vmem:[#allocation20 + $0xa0] sm:$0xff]
    %v4524 = vld [vmem:[#allocation20 + $0xa8] sm:$0xff]
    %v4525 = vld [vmem:[#allocation20 + $0xb0] sm:$0xff]
    %v4526 = vld [vmem:[#allocation20 + $0xb8] sm:$0xff]
    %v4527 = vld [vmem:[#allocation20 + $0xc0] sm:$0xff]
    %v4528 = vld [vmem:[#allocation20 + $0xc8] sm:$0xff]
    %v4529 = vld [vmem:[#allocation20 + $0xd0] sm:$0xff]
    %v4530 = vld [vmem:[#allocation20 + $0xd8] sm:$0xff]
    %v4531 = vld [vmem:[#allocation20 + $0xe0] sm:$0xff]
    %v4532 = vld [vmem:[#allocation20 + $0xe8] sm:$0xff]
    %v4533 = vld [vmem:[#allocation20 + $0xf0] sm:$0xff]
    %v4534 = vld [vmem:[#allocation20 + $0xf8] sm:$0xff]
    %v4535 = vld [vmem:[#allocation20 + $0x100] sm:$0xff]
    %v4536 = vld [vmem:[#allocation20 + $0x108] sm:$0xff]
    %v4537 = vld [vmem:[#allocation20 + $0x110] sm:$0xff]
    %v4538 = vld [vmem:[#allocation20 + $0x118] sm:$0xff]
    %v4539 = vld [vmem:[#allocation20 + $0x120] sm:$0xff]
    %v4540 = vld [vmem:[#allocation20 + $0x128] sm:$0xff]
    %v4541 = vld [vmem:[#allocation20 + $0x130] sm:$0xff]
    %v4542 = vld [vmem:[#allocation20 + $0x138] sm:$0xff]
    %v4543 = vld [vmem:[#allocation20 + $0x140] sm:$0xff]
    %v4544 = vld [vmem:[#allocation20 + $0x148] sm:$0xff]
    %v4545 = vld [vmem:[#allocation20 + $0x150] sm:$0xff]
    %v4546 = vld [vmem:[#allocation20 + $0x158] sm:$0xff]
    %v4547 = vld [vmem:[#allocation20 + $0x160] sm:$0xff]
    %v4548 = vld [vmem:[#allocation20 + $0x168] sm:$0xff]
    %v4549 = vld [vmem:[#allocation20 + $0x170] sm:$0xff]
    %v4550 = vld [vmem:[#allocation20 + $0x178] sm:$0xff]
    %v4551 = vld [vmem:[#allocation20 + $0x180] sm:$0xff]
    %v4552 = vld [vmem:[#allocation20 + $0x188] sm:$0xff]
    %v4553 = vld [vmem:[#allocation20 + $0x190] sm:$0xff]
    %v4554 = vld [vmem:[#allocation20 + $0x198] sm:$0xff]
    %v4555 = vld [vmem:[#allocation20 + $0x1a0] sm:$0xff]
    %v4556 = vld [vmem:[#allocation20 + $0x1a8] sm:$0xff]
    %v4557 = vld [vmem:[#allocation20 + $0x1b0] sm:$0xff]
    %v4558 = vld [vmem:[#allocation20 + $0x1b8] sm:$0xff]
    %v4559 = vld [vmem:[#allocation20 + $0x1c0] sm:$0xff]
    %v4560 = vld [vmem:[#allocation20 + $0x1c8] sm:$0xff]
    %v4561 = vld [vmem:[#allocation20 + $0x1d0] sm:$0xff]
    %v4562 = vld [vmem:[#allocation20 + $0x1d8] sm:$0xff]
    %v4563 = vld [vmem:[#allocation20 + $0x1e0] sm:$0xff]
    %v4564 = vld [vmem:[#allocation20 + $0x1e8] sm:$0xff]
    %v4565 = vld [vmem:[#allocation20 + $0x1f0] sm:$0xff]
    %v4566 = vld [vmem:[#allocation20 + $0x1f8] sm:$0xff]
    %v4567 = vld [vmem:[#allocation20 + $0x200] sm:$0xff]
    %v4568 = vld [vmem:[#allocation20 + $0x208] sm:$0xff]
    %v4569 = vld [vmem:[#allocation20 + $0x210] sm:$0xff]
    %v4570 = vld [vmem:[#allocation20 + $0x218] sm:$0xff]
    %v4571 = vld [vmem:[#allocation20 + $0x220] sm:$0xff]
    %v4572 = vld [vmem:[#allocation20 + $0x228] sm:$0xff]
    %v4573 = vld [vmem:[#allocation20 + $0x230] sm:$0xff]
    %v4574 = vld [vmem:[#allocation20 + $0x238] sm:$0xff]
    %v4575 = vld [vmem:[#allocation20 + $0x240] sm:$0xff]
    %v4576 = vld [vmem:[#allocation20 + $0x248] sm:$0xff]
    %v4577 = vld [vmem:[#allocation20 + $0x250] sm:$0xff]
    %v4578 = vld [vmem:[#allocation20 + $0x258] sm:$0xff]
    %v4579 = vld [vmem:[#allocation20 + $0x260] sm:$0xff]
    %v4580 = vld [vmem:[#allocation20 + $0x268] sm:$0xff]
    %v4581 = vld [vmem:[#allocation20 + $0x270] sm:$0xff]
    %v4582 = vld [vmem:[#allocation20 + $0x278] sm:$0xff]
    %v4583 = vld [vmem:[#allocation20 + $0x280] sm:$0xff]
    %v4584 = vld [vmem:[#allocation20 + $0x288] sm:$0xff]
    %v4585 = vld [vmem:[#allocation20 + $0x290] sm:$0xff]
    %v4586 = vld [vmem:[#allocation20 + $0x298] sm:$0xff]
    %v4587 = vld [vmem:[#allocation20 + $0x2a0] sm:$0xff]
    %v4588 = vld [vmem:[#allocation20 + $0x2a8] sm:$0xff]
    %v4589 = vld [vmem:[#allocation20 + $0x2b0] sm:$0xff]
    %v4590 = vld [vmem:[#allocation20 + $0x2b8] sm:$0xff]
    %v4591 = vld [vmem:[#allocation20 + $0x2c0] sm:$0xff]
    %v4592 = vld [vmem:[#allocation20 + $0x2c8] sm:$0xff]
    %v4593 = vld [vmem:[#allocation20 + $0x2d0] sm:$0xff]
    %v4594 = vld [vmem:[#allocation20 + $0x2d8] sm:$0xff]
    %v4595 = vld [vmem:[#allocation20 + $0x2e0] sm:$0xff]
    %v4596 = vld [vmem:[#allocation20 + $0x2e8] sm:$0xff]
    %v4597 = vld [vmem:[#allocation20 + $0x2f0] sm:$0xff]
    %v4598 = vld [vmem:[#allocation20 + $0x2f8] sm:$0xff]
    %v4599 = vld [vmem:[#allocation20 + $0x300] sm:$0xff]
    %v4600 = vld [vmem:[#allocation20 + $0x308] sm:$0xff]
    %v4601 = vld [vmem:[#allocation20 + $0x310] sm:$0xff]
    %v4602 = vld [vmem:[#allocation20 + $0x318] sm:$0xff]
    %v4603 = vld [vmem:[#allocation20 + $0x320] sm:$0xff]
    %v4604 = vld [vmem:[#allocation20 + $0x328] sm:$0xff]
    %v4605 = vld [vmem:[#allocation20 + $0x330] sm:$0xff]
    %v4606 = vld [vmem:[#allocation20 + $0x338] sm:$0xff]
    %v4607 = vld [vmem:[#allocation20 + $0x340] sm:$0xff]
    %v4608 = vld [vmem:[#allocation20 + $0x348] sm:$0xff]
    %v4609 = vld [vmem:[#allocation20 + $0x350] sm:$0xff]
    %v4610 = vld [vmem:[#allocation20 + $0x358] sm:$0xff]
    %v4611 = vld [vmem:[#allocation20 + $0x360] sm:$0xff]
    %v4612 = vld [vmem:[#allocation20 + $0x368] sm:$0xff]
    %v4613 = vld [vmem:[#allocation20 + $0x370] sm:$0xff]
    %v4614 = vld [vmem:[#allocation20 + $0x378] sm:$0xff]
    %v4615 = vld [vmem:[#allocation20 + $0x380] sm:$0xff]
    %v4616 = vld [vmem:[#allocation20 + $0x388] sm:$0xff]
    %v4617 = vld [vmem:[#allocation20 + $0x390] sm:$0xff]
    %v4618 = vld [vmem:[#allocation20 + $0x398] sm:$0xff]
    %v4619 = vld [vmem:[#allocation20 + $0x3a0] sm:$0xff]
    %v4620 = vld [vmem:[#allocation20 + $0x3a8] sm:$0xff]
    %v4621 = vld [vmem:[#allocation20 + $0x3b0] sm:$0xff]
    %v4622 = vld [vmem:[#allocation20 + $0x3b8] sm:$0xff]
    %v4623 = vld [vmem:[#allocation20 + $0x3c0] sm:$0xff]
    %v4624 = vld [vmem:[#allocation20 + $0x3c8] sm:$0xff]
    %v4625 = vld [vmem:[#allocation20 + $0x3d0] sm:$0xff]
    %v4626 = vld [vmem:[#allocation20 + $0x3d8] sm:$0xff]
    %v4627 = vld [vmem:[#allocation20 + $0x3e0] sm:$0xff]
    %v4628 = vld [vmem:[#allocation20 + $0x3e8] sm:$0xff]
    %v4629 = vld [vmem:[#allocation20 + $0x3f0] sm:$0xff]
    %v4630 = vld [vmem:[#allocation20 + $0x3f8] sm:$0xff]
    %v4631 = vld [vmem:[#allocation22] sm:$0x3]
    %v4633 = vlaneseq
    %v4634 = vshrl.u32 %v4633, 7
    %v4635 = vsub.s32 0, %v4634
    %v4636 = vrot.slane %v4631, %v4635
    %v4637 = vlaneseq
    %v4638 = vshrl.u32 %v4637, 7
    %v4639 = vsub.s32 1, %v4638
    %v4640 = vrot.slane %v4631, %v4639
    %v4771 = vunpack.c.l.b16 %v4503
    %v4772 = vunpack.c.h.b16 %v4503
    %v4773 = vunpack.c.l.b16 %v4504
    %v4774 = vunpack.c.h.b16 %v4504
    %v4775 = vunpack.c.l.b16 %v4505
    %v4776 = vunpack.c.h.b16 %v4505
    %v4777 = vunpack.c.l.b16 %v4506
    %v4778 = vunpack.c.h.b16 %v4506
    %v4779 = vunpack.c.l.b16 %v4507
    %v4780 = vunpack.c.h.b16 %v4507
    %v4781 = vunpack.c.l.b16 %v4508
    %v4782 = vunpack.c.h.b16 %v4508
    %v4783 = vunpack.c.l.b16 %v4509
    %v4784 = vunpack.c.h.b16 %v4509
    %v4785 = vunpack.c.l.b16 %v4510
    %v4786 = vunpack.c.h.b16 %v4510
    %v4787 = vunpack.c.l.b16 %v4511
    %v4788 = vunpack.c.h.b16 %v4511
    %v4789 = vunpack.c.l.b16 %v4512
    %v4790 = vunpack.c.h.b16 %v4512
    %v4791 = vunpack.c.l.b16 %v4513
    %v4792 = vunpack.c.h.b16 %v4513
    %v4793 = vunpack.c.l.b16 %v4514
    %v4794 = vunpack.c.h.b16 %v4514
    %v4795 = vunpack.c.l.b16 %v4515
    %v4796 = vunpack.c.h.b16 %v4515
    %v4797 = vunpack.c.l.b16 %v4516
    %v4798 = vunpack.c.h.b16 %v4516
    %v4799 = vunpack.c.l.b16 %v4517
    %v4800 = vunpack.c.h.b16 %v4517
    %v4801 = vunpack.c.l.b16 %v4518
    %v4802 = vunpack.c.h.b16 %v4518
    %v4803 = vunpack.c.l.b16 %v4519
    %v4804 = vunpack.c.h.b16 %v4519
    %v4805 = vunpack.c.l.b16 %v4520
    %v4806 = vunpack.c.h.b16 %v4520
    %v4807 = vunpack.c.l.b16 %v4521
    %v4808 = vunpack.c.h.b16 %v4521
    %v4809 = vunpack.c.l.b16 %v4522
    %v4810 = vunpack.c.h.b16 %v4522
    %v4811 = vunpack.c.l.b16 %v4523
    %v4812 = vunpack.c.h.b16 %v4523
    %v4813 = vunpack.c.l.b16 %v4524
    %v4814 = vunpack.c.h.b16 %v4524
    %v4815 = vunpack.c.l.b16 %v4525
    %v4816 = vunpack.c.h.b16 %v4525
    %v4817 = vunpack.c.l.b16 %v4526
    %v4818 = vunpack.c.h.b16 %v4526
    %v4819 = vunpack.c.l.b16 %v4527
    %v4820 = vunpack.c.h.b16 %v4527
    %v4821 = vunpack.c.l.b16 %v4528
    %v4822 = vunpack.c.h.b16 %v4528
    %v4823 = vunpack.c.l.b16 %v4529
    %v4824 = vunpack.c.h.b16 %v4529
    %v4825 = vunpack.c.l.b16 %v4530
    %v4826 = vunpack.c.h.b16 %v4530
    %v4827 = vunpack.c.l.b16 %v4531
    %v4828 = vunpack.c.h.b16 %v4531
    %v4829 = vunpack.c.l.b16 %v4532
    %v4830 = vunpack.c.h.b16 %v4532
    %v4831 = vunpack.c.l.b16 %v4533
    %v4832 = vunpack.c.h.b16 %v4533
    %v4833 = vunpack.c.l.b16 %v4534
    %v4834 = vunpack.c.h.b16 %v4534
    %v4835 = vunpack.c.l.b16 %v4535
    %v4836 = vunpack.c.h.b16 %v4535
    %v4837 = vunpack.c.l.b16 %v4536
    %v4838 = vunpack.c.h.b16 %v4536
    %v4839 = vunpack.c.l.b16 %v4537
    %v4840 = vunpack.c.h.b16 %v4537
    %v4841 = vunpack.c.l.b16 %v4538
    %v4842 = vunpack.c.h.b16 %v4538
    %v4843 = vunpack.c.l.b16 %v4539
    %v4844 = vunpack.c.h.b16 %v4539
    %v4845 = vunpack.c.l.b16 %v4540
    %v4846 = vunpack.c.h.b16 %v4540
    %v4847 = vunpack.c.l.b16 %v4541
    %v4848 = vunpack.c.h.b16 %v4541
    %v4849 = vunpack.c.l.b16 %v4542
    %v4850 = vunpack.c.h.b16 %v4542
    %v4851 = vunpack.c.l.b16 %v4543
    %v4852 = vunpack.c.h.b16 %v4543
    %v4853 = vunpack.c.l.b16 %v4544
    %v4854 = vunpack.c.h.b16 %v4544
    %v4855 = vunpack.c.l.b16 %v4545
    %v4856 = vunpack.c.h.b16 %v4545
    %v4857 = vunpack.c.l.b16 %v4546
    %v4858 = vunpack.c.h.b16 %v4546
    %v4859 = vunpack.c.l.b16 %v4547
    %v4860 = vunpack.c.h.b16 %v4547
    %v4861 = vunpack.c.l.b16 %v4548
    %v4862 = vunpack.c.h.b16 %v4548
    %v4863 = vunpack.c.l.b16 %v4549
    %v4864 = vunpack.c.h.b16 %v4549
    %v4865 = vunpack.c.l.b16 %v4550
    %v4866 = vunpack.c.h.b16 %v4550
    %v4867 = vunpack.c.l.b16 %v4551
    %v4868 = vunpack.c.h.b16 %v4551
    %v4869 = vunpack.c.l.b16 %v4552
    %v4870 = vunpack.c.h.b16 %v4552
    %v4871 = vunpack.c.l.b16 %v4553
    %v4872 = vunpack.c.h.b16 %v4553
    %v4873 = vunpack.c.l.b16 %v4554
    %v4874 = vunpack.c.h.b16 %v4554
    %v4875 = vunpack.c.l.b16 %v4555
    %v4876 = vunpack.c.h.b16 %v4555
    %v4877 = vunpack.c.l.b16 %v4556
    %v4878 = vunpack.c.h.b16 %v4556
    %v4879 = vunpack.c.l.b16 %v4557
    %v4880 = vunpack.c.h.b16 %v4557
    %v4881 = vunpack.c.l.b16 %v4558
    %v4882 = vunpack.c.h.b16 %v4558
    %v4883 = vunpack.c.l.b16 %v4559
    %v4884 = vunpack.c.h.b16 %v4559
    %v4885 = vunpack.c.l.b16 %v4560
    %v4886 = vunpack.c.h.b16 %v4560
    %v4887 = vunpack.c.l.b16 %v4561
    %v4888 = vunpack.c.h.b16 %v4561
    %v4889 = vunpack.c.l.b16 %v4562
    %v4890 = vunpack.c.h.b16 %v4562
    %v4891 = vunpack.c.l.b16 %v4563
    %v4892 = vunpack.c.h.b16 %v4563
    %v4893 = vunpack.c.l.b16 %v4564
    %v4894 = vunpack.c.h.b16 %v4564
    %v4895 = vunpack.c.l.b16 %v4565
    %v4896 = vunpack.c.h.b16 %v4565
    %v4897 = vunpack.c.l.b16 %v4566
    %v4898 = vunpack.c.h.b16 %v4566
    %v4899 = vunpack.c.l.b16 %v4567
    %v4900 = vunpack.c.h.b16 %v4567
    %v4901 = vunpack.c.l.b16 %v4568
    %v4902 = vunpack.c.h.b16 %v4568
    %v4903 = vunpack.c.l.b16 %v4569
    %v4904 = vunpack.c.h.b16 %v4569
    %v4905 = vunpack.c.l.b16 %v4570
    %v4906 = vunpack.c.h.b16 %v4570
    %v4907 = vunpack.c.l.b16 %v4571
    %v4908 = vunpack.c.h.b16 %v4571
    %v4909 = vunpack.c.l.b16 %v4572
    %v4910 = vunpack.c.h.b16 %v4572
    %v4911 = vunpack.c.l.b16 %v4573
    %v4912 = vunpack.c.h.b16 %v4573
    %v4913 = vunpack.c.l.b16 %v4574
    %v4914 = vunpack.c.h.b16 %v4574
    %v4915 = vunpack.c.l.b16 %v4575
    %v4916 = vunpack.c.h.b16 %v4575
    %v4917 = vunpack.c.l.b16 %v4576
    %v4918 = vunpack.c.h.b16 %v4576
    %v4919 = vunpack.c.l.b16 %v4577
    %v4920 = vunpack.c.h.b16 %v4577
    %v4921 = vunpack.c.l.b16 %v4578
    %v4922 = vunpack.c.h.b16 %v4578
    %v4923 = vunpack.c.l.b16 %v4579
    %v4924 = vunpack.c.h.b16 %v4579
    %v4925 = vunpack.c.l.b16 %v4580
    %v4926 = vunpack.c.h.b16 %v4580
    %v4927 = vunpack.c.l.b16 %v4581
    %v4928 = vunpack.c.h.b16 %v4581
    %v4929 = vunpack.c.l.b16 %v4582
    %v4930 = vunpack.c.h.b16 %v4582
    %v4931 = vunpack.c.l.b16 %v4583
    %v4932 = vunpack.c.h.b16 %v4583
    %v4933 = vunpack.c.l.b16 %v4584
    %v4934 = vunpack.c.h.b16 %v4584
    %v4935 = vunpack.c.l.b16 %v4585
    %v4936 = vunpack.c.h.b16 %v4585
    %v4937 = vunpack.c.l.b16 %v4586
    %v4938 = vunpack.c.h.b16 %v4586
    %v4939 = vunpack.c.l.b16 %v4587
    %v4940 = vunpack.c.h.b16 %v4587
    %v4941 = vunpack.c.l.b16 %v4588
    %v4942 = vunpack.c.h.b16 %v4588
    %v4943 = vunpack.c.l.b16 %v4589
    %v4944 = vunpack.c.h.b16 %v4589
    %v4945 = vunpack.c.l.b16 %v4590
    %v4946 = vunpack.c.h.b16 %v4590
    %v4947 = vunpack.c.l.b16 %v4591
    %v4948 = vunpack.c.h.b16 %v4591
    %v4949 = vunpack.c.l.b16 %v4592
    %v4950 = vunpack.c.h.b16 %v4592
    %v4951 = vunpack.c.l.b16 %v4593
    %v4952 = vunpack.c.h.b16 %v4593
    %v4953 = vunpack.c.l.b16 %v4594
    %v4954 = vunpack.c.h.b16 %v4594
    %v4955 = vunpack.c.l.b16 %v4595
    %v4956 = vunpack.c.h.b16 %v4595
    %v4957 = vunpack.c.l.b16 %v4596
    %v4958 = vunpack.c.h.b16 %v4596
    %v4959 = vunpack.c.l.b16 %v4597
    %v4960 = vunpack.c.h.b16 %v4597
    %v4961 = vunpack.c.l.b16 %v4598
    %v4962 = vunpack.c.h.b16 %v4598
    %v4963 = vunpack.c.l.b16 %v4599
    %v4964 = vunpack.c.h.b16 %v4599
    %v4965 = vunpack.c.l.b16 %v4600
    %v4966 = vunpack.c.h.b16 %v4600
    %v4967 = vunpack.c.l.b16 %v4601
    %v4968 = vunpack.c.h.b16 %v4601
    %v4969 = vunpack.c.l.b16 %v4602
    %v4970 = vunpack.c.h.b16 %v4602
    %v4971 = vunpack.c.l.b16 %v4603
    %v4972 = vunpack.c.h.b16 %v4603
    %v4973 = vunpack.c.l.b16 %v4604
    %v4974 = vunpack.c.h.b16 %v4604
    %v4975 = vunpack.c.l.b16 %v4605
    %v4976 = vunpack.c.h.b16 %v4605
    %v4977 = vunpack.c.l.b16 %v4606
    %v4978 = vunpack.c.h.b16 %v4606
    %v4979 = vunpack.c.l.b16 %v4607
    %v4980 = vunpack.c.h.b16 %v4607
    %v4981 = vunpack.c.l.b16 %v4608
    %v4982 = vunpack.c.h.b16 %v4608
    %v4983 = vunpack.c.l.b16 %v4609
    %v4984 = vunpack.c.h.b16 %v4609
    %v4985 = vunpack.c.l.b16 %v4610
    %v4986 = vunpack.c.h.b16 %v4610
    %v4987 = vunpack.c.l.b16 %v4611
    %v4988 = vunpack.c.h.b16 %v4611
    %v4989 = vunpack.c.l.b16 %v4612
    %v4990 = vunpack.c.h.b16 %v4612
    %v4991 = vunpack.c.l.b16 %v4613
    %v4992 = vunpack.c.h.b16 %v4613
    %v4993 = vunpack.c.l.b16 %v4614
    %v4994 = vunpack.c.h.b16 %v4614
    %v4995 = vunpack.c.l.b16 %v4615
    %v4996 = vunpack.c.h.b16 %v4615
    %v4997 = vunpack.c.l.b16 %v4616
    %v4998 = vunpack.c.h.b16 %v4616
    %v4999 = vunpack.c.l.b16 %v4617
    %v5000 = vunpack.c.h.b16 %v4617
    %v5001 = vunpack.c.l.b16 %v4618
    %v5002 = vunpack.c.h.b16 %v4618
    %v5003 = vunpack.c.l.b16 %v4619
    %v5004 = vunpack.c.h.b16 %v4619
    %v5005 = vunpack.c.l.b16 %v4620
    %v5006 = vunpack.c.h.b16 %v4620
    %v5007 = vunpack.c.l.b16 %v4621
    %v5008 = vunpack.c.h.b16 %v4621
    %v5009 = vunpack.c.l.b16 %v4622
    %v5010 = vunpack.c.h.b16 %v4622
    %v5011 = vunpack.c.l.b16 %v4623
    %v5012 = vunpack.c.h.b16 %v4623
    %v5013 = vunpack.c.l.b16 %v4624
    %v5014 = vunpack.c.h.b16 %v4624
    %v5015 = vunpack.c.l.b16 %v4625
    %v5016 = vunpack.c.h.b16 %v4625
    %v5017 = vunpack.c.l.b16 %v4626
    %v5018 = vunpack.c.h.b16 %v4626
    %v5019 = vunpack.c.l.b16 %v4627
    %v5020 = vunpack.c.h.b16 %v4627
    %v5021 = vunpack.c.l.b16 %v4628
    %v5022 = vunpack.c.h.b16 %v4628
    %v5023 = vunpack.c.l.b16 %v4629
    %v5024 = vunpack.c.h.b16 %v4629
    %v5025 = vunpack.c.l.b16 %v4630
    %v5026 = vunpack.c.h.b16 %v4630
    %v5027 = vpack.c.b16 %v4773, %v4771
    %v5028 = vpack.c.b16 %v4774, %v4772
    %v5029 = vpack.c.b16 %v4777, %v4775
    %v5030 = vpack.c.b16 %v4778, %v4776
    %v5031 = vpack.c.b16 %v4781, %v4779
    %v5032 = vpack.c.b16 %v4782, %v4780
    %v5033 = vpack.c.b16 %v4785, %v4783
    %v5034 = vpack.c.b16 %v4786, %v4784
    %v5035 = vpack.c.b16 %v4789, %v4787
    %v5036 = vpack.c.b16 %v4790, %v4788
    %v5037 = vpack.c.b16 %v4793, %v4791
    %v5038 = vpack.c.b16 %v4794, %v4792
    %v5039 = vpack.c.b16 %v4797, %v4795
    %v5040 = vpack.c.b16 %v4798, %v4796
    %v5041 = vpack.c.b16 %v4801, %v4799
    %v5042 = vpack.c.b16 %v4802, %v4800
    %v5043 = vpack.c.b16 %v4805, %v4803
    %v5044 = vpack.c.b16 %v4806, %v4804
    %v5045 = vpack.c.b16 %v4809, %v4807
    %v5046 = vpack.c.b16 %v4810, %v4808
    %v5047 = vpack.c.b16 %v4813, %v4811
    %v5048 = vpack.c.b16 %v4814, %v4812
    %v5049 = vpack.c.b16 %v4817, %v4815
    %v5050 = vpack.c.b16 %v4818, %v4816
    %v5051 = vpack.c.b16 %v4821, %v4819
    %v5052 = vpack.c.b16 %v4822, %v4820
    %v5053 = vpack.c.b16 %v4825, %v4823
    %v5054 = vpack.c.b16 %v4826, %v4824
    %v5055 = vpack.c.b16 %v4829, %v4827
    %v5056 = vpack.c.b16 %v4830, %v4828
    %v5057 = vpack.c.b16 %v4833, %v4831
    %v5058 = vpack.c.b16 %v4834, %v4832
    %v5059 = vpack.c.b16 %v4837, %v4835
    %v5060 = vpack.c.b16 %v4838, %v4836
    %v5061 = vpack.c.b16 %v4841, %v4839
    %v5062 = vpack.c.b16 %v4842, %v4840
    %v5063 = vpack.c.b16 %v4845, %v4843
    %v5064 = vpack.c.b16 %v4846, %v4844
    %v5065 = vpack.c.b16 %v4849, %v4847
    %v5066 = vpack.c.b16 %v4850, %v4848
    %v5067 = vpack.c.b16 %v4853, %v4851
    %v5068 = vpack.c.b16 %v4854, %v4852
    %v5069 = vpack.c.b16 %v4857, %v4855
    %v5070 = vpack.c.b16 %v4858, %v4856
    %v5071 = vpack.c.b16 %v4861, %v4859
    %v5072 = vpack.c.b16 %v4862, %v4860
    %v5073 = vpack.c.b16 %v4865, %v4863
    %v5074 = vpack.c.b16 %v4866, %v4864
    %v5075 = vpack.c.b16 %v4869, %v4867
    %v5076 = vpack.c.b16 %v4870, %v4868
    %v5077 = vpack.c.b16 %v4873, %v4871
    %v5078 = vpack.c.b16 %v4874, %v4872
    %v5079 = vpack.c.b16 %v4877, %v4875
    %v5080 = vpack.c.b16 %v4878, %v4876
    %v5081 = vpack.c.b16 %v4881, %v4879
    %v5082 = vpack.c.b16 %v4882, %v4880
    %v5083 = vpack.c.b16 %v4885, %v4883
    %v5084 = vpack.c.b16 %v4886, %v4884
    %v5085 = vpack.c.b16 %v4889, %v4887
    %v5086 = vpack.c.b16 %v4890, %v4888
    %v5087 = vpack.c.b16 %v4893, %v4891
    %v5088 = vpack.c.b16 %v4894, %v4892
    %v5089 = vpack.c.b16 %v4897, %v4895
    %v5090 = vpack.c.b16 %v4898, %v4896
    %v5091 = vpack.c.b16 %v4901, %v4899
    %v5092 = vpack.c.b16 %v4902, %v4900
    %v5093 = vpack.c.b16 %v4905, %v4903
    %v5094 = vpack.c.b16 %v4906, %v4904
    %v5095 = vpack.c.b16 %v4909, %v4907
    %v5096 = vpack.c.b16 %v4910, %v4908
    %v5097 = vpack.c.b16 %v4913, %v4911
    %v5098 = vpack.c.b16 %v4914, %v4912
    %v5099 = vpack.c.b16 %v4917, %v4915
    %v5100 = vpack.c.b16 %v4918, %v4916
    %v5101 = vpack.c.b16 %v4921, %v4919
    %v5102 = vpack.c.b16 %v4922, %v4920
    %v5103 = vpack.c.b16 %v4925, %v4923
    %v5104 = vpack.c.b16 %v4926, %v4924
    %v5105 = vpack.c.b16 %v4929, %v4927
    %v5106 = vpack.c.b16 %v4930, %v4928
    %v5107 = vpack.c.b16 %v4933, %v4931
    %v5108 = vpack.c.b16 %v4934, %v4932
    %v5109 = vpack.c.b16 %v4937, %v4935
    %v5110 = vpack.c.b16 %v4938, %v4936
    %v5111 = vpack.c.b16 %v4941, %v4939
    %v5112 = vpack.c.b16 %v4942, %v4940
    %v5113 = vpack.c.b16 %v4945, %v4943
    %v5114 = vpack.c.b16 %v4946, %v4944
    %v5115 = vpack.c.b16 %v4949, %v4947
    %v5116 = vpack.c.b16 %v4950, %v4948
    %v5117 = vpack.c.b16 %v4953, %v4951
    %v5118 = vpack.c.b16 %v4954, %v4952
    %v5119 = vpack.c.b16 %v4957, %v4955
    %v5120 = vpack.c.b16 %v4958, %v4956
    %v5121 = vpack.c.b16 %v4961, %v4959
    %v5122 = vpack.c.b16 %v4962, %v4960
    %v5123 = vpack.c.b16 %v4965, %v4963
    %v5124 = vpack.c.b16 %v4966, %v4964
    %v5125 = vpack.c.b16 %v4969, %v4967
    %v5126 = vpack.c.b16 %v4970, %v4968
    %v5127 = vpack.c.b16 %v4973, %v4971
    %v5128 = vpack.c.b16 %v4974, %v4972
    %v5129 = vpack.c.b16 %v4977, %v4975
    %v5130 = vpack.c.b16 %v4978, %v4976
    %v5131 = vpack.c.b16 %v4981, %v4979
    %v5132 = vpack.c.b16 %v4982, %v4980
    %v5133 = vpack.c.b16 %v4985, %v4983
    %v5134 = vpack.c.b16 %v4986, %v4984
    %v5135 = vpack.c.b16 %v4989, %v4987
    %v5136 = vpack.c.b16 %v4990, %v4988
    %v5137 = vpack.c.b16 %v4993, %v4991
    %v5138 = vpack.c.b16 %v4994, %v4992
    %v5139 = vpack.c.b16 %v4997, %v4995
    %v5140 = vpack.c.b16 %v4998, %v4996
    %v5141 = vpack.c.b16 %v5001, %v4999
    %v5142 = vpack.c.b16 %v5002, %v5000
    %v5143 = vpack.c.b16 %v5005, %v5003
    %v5144 = vpack.c.b16 %v5006, %v5004
    %v5145 = vpack.c.b16 %v5009, %v5007
    %v5146 = vpack.c.b16 %v5010, %v5008
    %v5147 = vpack.c.b16 %v5013, %v5011
    %v5148 = vpack.c.b16 %v5014, %v5012
    %v5149 = vpack.c.b16 %v5017, %v5015
    %v5150 = vpack.c.b16 %v5018, %v5016
    %v5151 = vpack.c.b16 %v5021, %v5019
    %v5152 = vpack.c.b16 %v5022, %v5020
    %v5153 = vpack.c.b16 %v5025, %v5023
    %v5154 = vpack.c.b16 %v5026, %v5024
    %5283 = vmatprep.subr.bf16.mxu0 %v5028
    %5284 = vmatpush1.bf16.msra.mxu0 %v5027
    %5285 = vmatprep.subr.bf16.mxu0 %v5030
    %5286 = vmatpush1.bf16.msra.mxu0 %v5029
    %5287 = vmatprep.subr.bf16.mxu0 %v5032
    %5288 = vmatpush1.bf16.msra.mxu0 %v5031
    %5289 = vmatprep.subr.bf16.mxu0 %v5034
    %5290 = vmatpush1.bf16.msra.mxu0 %v5033
    %5291 = vmatprep.subr.bf16.mxu0 %v5036
    %5292 = vmatpush1.bf16.msra.mxu0 %v5035
    %5293 = vmatprep.subr.bf16.mxu0 %v5038
    %5294 = vmatpush1.bf16.msra.mxu0 %v5037
    %5295 = vmatprep.subr.bf16.mxu0 %v5040
    %5296 = vmatpush1.bf16.msra.mxu0 %v5039
    %5297 = vmatprep.subr.bf16.mxu0 %v5042
    %5298 = vmatpush1.bf16.msra.mxu0 %v5041
    %5299 = vmatprep.subr.bf16.mxu0 %v5044
    %5300 = vmatpush1.bf16.msra.mxu0 %v5043
    %5301 = vmatprep.subr.bf16.mxu0 %v5046
    %5302 = vmatpush1.bf16.msra.mxu0 %v5045
    %5303 = vmatprep.subr.bf16.mxu0 %v5048
    %5304 = vmatpush1.bf16.msra.mxu0 %v5047
    %5305 = vmatprep.subr.bf16.mxu0 %v5050
    %5306 = vmatpush1.bf16.msra.mxu0 %v5049
    %5307 = vmatprep.subr.bf16.mxu0 %v5052
    %5308 = vmatpush1.bf16.msra.mxu0 %v5051
    %5309 = vmatprep.subr.bf16.mxu0 %v5054
    %5310 = vmatpush1.bf16.msra.mxu0 %v5053
    %5311 = vmatprep.subr.bf16.mxu0 %v5056
    %5312 = vmatpush1.bf16.msra.mxu0 %v5055
    %5313 = vmatprep.subr.bf16.mxu0 %v5058
    %5314 = vmatpush1.bf16.msra.mxu0 %v5057
    %5315 = vmatprep.mubr.bf16.mxu0 %v4480
    %5316 = vmatmul.mubr.bf16.gmra.mrb[0].mxu0 %v4479
    %v5317 = vpop.f32.mrb[0].mxu0
    %v5318 = vadd.f32 %v4636, %v5317
    %v5319 = vpop.f32.mrb[0].mxu0
    %v5320 = vadd.f32 %v4640, %v5319
    %v5321 = vpop.f32.mrb[0].mxu0
    %v5322 = vadd.f32 %v4636, %v5321
    %v5323 = vpop.f32.mrb[0].mxu0
    %v5324 = vadd.f32 %v4640, %v5323
    %5325 = vmatprep.mubr.bf16.mxu0 %v4488
    %5326 = vmatmul.mubr.bf16.gmra.mrb[0].mxu0 %v4487
    %v5327 = vpop.f32.mrb[0].mxu0
    %v5328 = vadd.f32 %v4636, %v5327
    %v5329 = vpop.f32.mrb[0].mxu0
    %v5330 = vadd.f32 %v4640, %v5329
    %v5331 = vpop.f32.mrb[0].mxu0
    %v5332 = vadd.f32 %v4636, %v5331
    %v5333 = vpop.f32.mrb[0].mxu0
    %v5334 = vadd.f32 %v4640, %v5333
    %5335 = vmatprep.mubr.bf16.mxu0 %v4496
    %5336 = vmatmul.mubr.bf16.gmra.mrb[0].mxu0 %v4495
    %v5337 = vpop.f32.mrb[0].mxu0
    %v5338 = vadd.f32 %v4636, %v5337
    %v5339 = vpop.f32.mrb[0].mxu0
    %v5340 = vadd.f32 %v4640, %v5339
    %v5341 = vpop.f32.mrb[0].mxu0
    %v5342 = vadd.f32 %v4636, %v5341
    %v5343 = vpop.f32.mrb[0].mxu0
    %v5344 = vadd.f32 %v4640, %v5343
    %5345 = vdwg.mxu0
    %5346 = vmatprep.subr.bf16.mxu0 %v5060
    %5347 = vmatpush1.bf16.msra.mxu0 %v5059
    %5348 = vmatprep.subr.bf16.mxu0 %v5062
    %5349 = vmatpush1.bf16.msra.mxu0 %v5061
    %5350 = vmatprep.subr.bf16.mxu0 %v5064
    %5351 = vmatpush1.bf16.msra.mxu0 %v5063
    %5352 = vmatprep.subr.bf16.mxu0 %v5066
    %5353 = vmatpush1.bf16.msra.mxu0 %v5065
    %5354 = vmatprep.subr.bf16.mxu0 %v5068
    %5355 = vmatpush1.bf16.msra.mxu0 %v5067
    %5356 = vmatprep.subr.bf16.mxu0 %v5070
    %5357 = vmatpush1.bf16.msra.mxu0 %v5069
    %5358 = vmatprep.subr.bf16.mxu0 %v5072
    %5359 = vmatpush1.bf16.msra.mxu0 %v5071
    %5360 = vmatprep.subr.bf16.mxu0 %v5074
    %5361 = vmatpush1.bf16.msra.mxu0 %v5073
    %5362 = vmatprep.subr.bf16.mxu0 %v5076
    %5363 = vmatpush1.bf16.msra.mxu0 %v5075
    %5364 = vmatprep.subr.bf16.mxu0 %v5078
    %5365 = vmatpush1.bf16.msra.mxu0 %v5077
    %5366 = vmatprep.subr.bf16.mxu0 %v5080
    %5367 = vmatpush1.bf16.msra.mxu0 %v5079
    %5368 = vmatprep.subr.bf16.mxu0 %v5082
    %5369 = vmatpush1.bf16.msra.mxu0 %v5081
    %5370 = vmatprep.subr.bf16.mxu0 %v5084
    %5371 = vmatpush1.bf16.msra.mxu0 %v5083
    %5372 = vmatprep.subr.bf16.mxu0 %v5086
    %5373 = vmatpush1.bf16.msra.mxu0 %v5085
    %5374 = vmatprep.subr.bf16.mxu0 %v5088
    %5375 = vmatpush1.bf16.msra.mxu0 %v5087
    %5376 = vmatprep.subr.bf16.mxu0 %v5090
    %5377 = vmatpush1.bf16.msra.mxu0 %v5089
    %5378 = vmatprep.mubr.bf16.mxu0 %v4482
    %5379 = vmatmul.mubr.bf16.gmra.mrb[0].mxu0 %v4481
    %v5380 = vpop.f32.mrb[0].mxu0
    %v5381 = vadd.f32 %v5318, %v5380
    %v5382 = vpop.f32.mrb[0].mxu0
    %v5383 = vadd.f32 %v5320, %v5382
    %v5384 = vpop.f32.mrb[0].mxu0
    %v5385 = vadd.f32 %v5322, %v5384
    %v5386 = vpop.f32.mrb[0].mxu0
    %v5387 = vadd.f32 %v5324, %v5386
    %5388 = vmatprep.mubr.bf16.mxu0 %v4490
    %5389 = vmatmul.mubr.bf16.gmra.mrb[0].mxu0 %v4489
    %v5390 = vpop.f32.mrb[0].mxu0
    %v5391 = vadd.f32 %v5328, %v5390
    %v5392 = vpop.f32.mrb[0].mxu0
    %v5393 = vadd.f32 %v5330, %v5392
    %v5394 = vpop.f32.mrb[0].mxu0
    %v5395 = vadd.f32 %v5332, %v5394
    %v5396 = vpop.f32.mrb[0].mxu0
    %v5397 = vadd.f32 %v5334, %v5396
    %5398 = vmatprep.mubr.bf16.mxu0 %v4498
    %5399 = vmatmul.mubr.bf16.gmra.mrb[0].mxu0 %v4497
    %v5400 = vpop.f32.mrb[0].mxu0
    %v5401 = vadd.f32 %v5338, %v5400
    %v5402 = vpop.f32.mrb[0].mxu0
    %v5403 = vadd.f32 %v5340, %v5402
    %v5404 = vpop.f32.mrb[0].mxu0
    %v5405 = vadd.f32 %v5342, %v5404
    %v5406 = vpop.f32.mrb[0].mxu0
    %v5407 = vadd.f32 %v5344, %v5406
    %5408 = vdwg.mxu0
    %5409 = vmatprep.subr.bf16.mxu0 %v5092
    %5410 = vmatpush1.bf16.msra.mxu0 %v5091
    %5411 = vmatprep.subr.bf16.mxu0 %v5094
    %5412 = vmatpush1.bf16.msra.mxu0 %v5093
    %5413 = vmatprep.subr.bf16.mxu0 %v5096
    %5414 = vmatpush1.bf16.msra.mxu0 %v5095
    %5415 = vmatprep.subr.bf16.mxu0 %v5098
    %5416 = vmatpush1.bf16.msra.mxu0 %v5097
    %5417 = vmatprep.subr.bf16.mxu0 %v5100
    %5418 = vmatpush1.bf16.msra.mxu0 %v5099
    %5419 = vmatprep.subr.bf16.mxu0 %v5102
    %5420 = vmatpush1.bf16.msra.mxu0 %v5101
    %5421 = vmatprep.subr.bf16.mxu0 %v5104
    %5422 = vmatpush1.bf16.msra.mxu0 %v5103
    %5423 = vmatprep.subr.bf16.mxu0 %v5106
    %5424 = vmatpush1.bf16.msra.mxu0 %v5105
    %5425 = vmatprep.subr.bf16.mxu0 %v5108
    %5426 = vmatpush1.bf16.msra.mxu0 %v5107
    %5427 = vmatprep.subr.bf16.mxu0 %v5110
    %5428 = vmatpush1.bf16.msra.mxu0 %v5109
    %5429 = vmatprep.subr.bf16.mxu0 %v5112
    %5430 = vmatpush1.bf16.msra.mxu0 %v5111
    %5431 = vmatprep.subr.bf16.mxu0 %v5114
    %5432 = vmatpush1.bf16.msra.mxu0 %v5113
    %5433 = vmatprep.subr.bf16.mxu0 %v5116
    %5434 = vmatpush1.bf16.msra.mxu0 %v5115
    %5435 = vmatprep.subr.bf16.mxu0 %v5118
    %5436 = vmatpush1.bf16.msra.mxu0 %v5117
    %5437 = vmatprep.subr.bf16.mxu0 %v5120
    %5438 = vmatpush1.bf16.msra.mxu0 %v5119
    %5439 = vmatprep.subr.bf16.mxu0 %v5122
    %5440 = vmatpush1.bf16.msra.mxu0 %v5121
    %5441 = vmatprep.mubr.bf16.mxu0 %v4484
    %5442 = vmatmul.mubr.bf16.gmra.mrb[0].mxu0 %v4483
    %v5443 = vpop.f32.mrb[0].mxu0
    %v5444 = vadd.f32 %v5381, %v5443
    %v5445 = vpop.f32.mrb[0].mxu0
    %v5446 = vadd.f32 %v5383, %v5445
    %v5447 = vpop.f32.mrb[0].mxu0
    %v5448 = vadd.f32 %v5385, %v5447
    %v5449 = vpop.f32.mrb[0].mxu0
    %v5450 = vadd.f32 %v5387, %v5449
    %5451 = vmatprep.mubr.bf16.mxu0 %v4492
    %5452 = vmatmul.mubr.bf16.gmra.mrb[0].mxu0 %v4491
    %v5453 = vpop.f32.mrb[0].mxu0
    %v5454 = vadd.f32 %v5391, %v5453
    %v5455 = vpop.f32.mrb[0].mxu0
    %v5456 = vadd.f32 %v5393, %v5455
    %v5457 = vpop.f32.mrb[0].mxu0
    %v5458 = vadd.f32 %v5395, %v5457
    %v5459 = vpop.f32.mrb[0].mxu0
    %v5460 = vadd.f32 %v5397, %v5459
    %5461 = vmatprep.mubr.bf16.mxu0 %v4500
    %5462 = vmatmul.mubr.bf16.gmra.mrb[0].mxu0 %v4499
    %v5463 = vpop.f32.mrb[0].mxu0
    %v5464 = vadd.f32 %v5401, %v5463
    %v5465 = vpop.f32.mrb[0].mxu0
    %v5466 = vadd.f32 %v5403, %v5465
    %v5467 = vpop.f32.mrb[0].mxu0
    %v5468 = vadd.f32 %v5405, %v5467
    %v5469 = vpop.f32.mrb[0].mxu0
    %v5470 = vadd.f32 %v5407, %v5469
    %5471 = vdwg.mxu0
    %5472 = vmatprep.subr.bf16.mxu0 %v5124
    %5473 = vmatpush1.bf16.msra.mxu0 %v5123
    %5474 = vmatprep.subr.bf16.mxu0 %v5126
    %5475 = vmatpush1.bf16.msra.mxu0 %v5125
    %5476 = vmatprep.subr.bf16.mxu0 %v5128
    %5477 = vmatpush1.bf16.msra.mxu0 %v5127
    %5478 = vmatprep.subr.bf16.mxu0 %v5130
    %5479 = vmatpush1.bf16.msra.mxu0 %v5129
    %5480 = vmatprep.subr.bf16.mxu0 %v5132
    %5481 = vmatpush1.bf16.msra.mxu0 %v5131
    %5482 = vmatprep.subr.bf16.mxu0 %v5134
    %5483 = vmatpush1.bf16.msra.mxu0 %v5133
    %5484 = vmatprep.subr.bf16.mxu0 %v5136
    %5485 = vmatpush1.bf16.msra.mxu0 %v5135
    %5486 = vmatprep.subr.bf16.mxu0 %v5138
    %5487 = vmatpush1.bf16.msra.mxu0 %v5137
    %5488 = vmatprep.subr.bf16.mxu0 %v5140
    %5489 = vmatpush1.bf16.msra.mxu0 %v5139
    %5490 = vmatprep.subr.bf16.mxu0 %v5142
    %5491 = vmatpush1.bf16.msra.mxu0 %v5141
    %5492 = vmatprep.subr.bf16.mxu0 %v5144
    %5493 = vmatpush1.bf16.msra.mxu0 %v5143
    %5494 = vmatprep.subr.bf16.mxu0 %v5146
    %5495 = vmatpush1.bf16.msra.mxu0 %v5145
    %5496 = vmatprep.subr.bf16.mxu0 %v5148
    %5497 = vmatpush1.bf16.msra.mxu0 %v5147
    %5498 = vmatprep.subr.bf16.mxu0 %v5150
    %5499 = vmatpush1.bf16.msra.mxu0 %v5149
    %5500 = vmatprep.subr.bf16.mxu0 %v5152
    %5501 = vmatpush1.bf16.msra.mxu0 %v5151
    %5502 = vmatprep.subr.bf16.mxu0 %v5154
    %5503 = vmatpush1.bf16.msra.mxu0 %v5153
    %5504 = vmatprep.mubr.bf16.mxu0 %v4486
    %5505 = vmatmul.mubr.bf16.gmra.mrb[0].mxu0 %v4485
    %v5506 = vpop.f32.mrb[0].mxu0
    %v5507 = vadd.f32 %v5444, %v5506
    %v5508 = vpop.f32.mrb[0].mxu0
    %v5509 = vadd.f32 %v5446, %v5508
    %v5510 = vpop.f32.mrb[0].mxu0
    %v5511 = vadd.f32 %v5448, %v5510
    %v5512 = vpop.f32.mrb[0].mxu0
    %v5513 = vadd.f32 %v5450, %v5512
    %5514 = vmatprep.mubr.bf16.mxu0 %v4494
    %5515 = vmatmul.mubr.bf16.gmra.mrb[0].mxu0 %v4493
    %v5516 = vpop.f32.mrb[0].mxu0
    %v5517 = vadd.f32 %v5454, %v5516
    %v5518 = vpop.f32.mrb[0].mxu0
    %v5519 = vadd.f32 %v5456, %v5518
    %v5520 = vpop.f32.mrb[0].mxu0
    %v5521 = vadd.f32 %v5458, %v5520
    %v5522 = vpop.f32.mrb[0].mxu0
    %v5523 = vadd.f32 %v5460, %v5522
    %5524 = vmatprep.mubr.bf16.mxu0 %v4502
    %5525 = vmatmul.mubr.bf16.gmra.mrb[0].mxu0 %v4501
    %v5526 = vpop.f32.mrb[0].mxu0
    %v5527 = vadd.f32 %v5464, %v5526
    %v5528 = vpop.f32.mrb[0].mxu0
    %v5529 = vadd.f32 %v5466, %v5528
    %v5530 = vpop.f32.mrb[0].mxu0
    %v5531 = vadd.f32 %v5468, %v5530
    %v5532 = vpop.f32.mrb[0].mxu0
    %v5533 = vadd.f32 %v5470, %v5532
    %5534 = vdwg.mxu0
    %v5535 = vadd.f32 %v2871, %v5507
    %v5536 = vadd.f32 %v2872, %v5509
    %v5537 = vadd.f32 %v2873, %v5511
    %v5538 = vadd.f32 %v2874, %v5513
    %v5539 = vadd.f32 %v2875, %v5517
    %v5540 = vadd.f32 %v2876, %v5519
    %v5541 = vadd.f32 %v2877, %v5521
    %v5542 = vadd.f32 %v2878, %v5523
    %v5543 = vadd.f32 %v2879, %v5527
    %v5544 = vadd.f32 %v2880, %v5529
    %v5545 = vadd.f32 %v2881, %v5531
    %v5546 = vadd.f32 %v2882, %v5533
    %5547 = vst [vmem:[#allocation23] sm:$0xff] %v5535
    %5548 = vst [vmem:[#allocation23 + $0x8] sm:$0xff] %v5536
    %5549 = vst [vmem:[#allocation23 + $0x10] sm:$0xff] %v5537
    %5550 = vst [vmem:[#allocation23 + $0x18] sm:$0xff] %v5538
    %5551 = vst [vmem:[#allocation23 + $0x20] sm:$0xff] %v5539
    %5552 = vst [vmem:[#allocation23 + $0x28] sm:$0xff] %v5540
    %5553 = vst [vmem:[#allocation23 + $0x30] sm:$0xff] %v5541
    %5554 = vst [vmem:[#allocation23 + $0x38] sm:$0xff] %v5542
    %5555 = vst [vmem:[#allocation23 + $0x40] sm:$0xff] %v5543
    %5556 = vst [vmem:[#allocation23 + $0x48] sm:$0xff] %v5544
    %5557 = vst [vmem:[#allocation23 + $0x50] sm:$0xff] %v5545
    %5558 = vst [vmem:[#allocation23 + $0x58] sm:$0xff] %v5546
    // Predicated region
    $region106: #{_encode_image.2} parent=1 // pred_check
      _
    $region107: #{_encode_image.2} parent=1 // pred_check_branch
      %5560 = sbr.rel (0) target = $region109
    $region108: #{_encode_image.2} parent=1 // pred_region
      %s5562 = ssub.s32 1536, 1536
      %5563 = vsyncadd [#allocation4], %s5562
      %s5564 = sshll.u32 [#allocation23], 4
      %s5565 = int_to_ptr.vmem [resolvable:$true] %s5564
      %5570 = dma.vmem_to_hbm [thread:$0]  %s5565, 1536, %s13, [#allocation4], 256, 256, 16
    $region109: #{_encode_image.2} parent=1 // pred_fallthru
      _
    // Predicated region
    $region110: #{_encode_image.2} parent=1 // pred_check
      _
    $region111: #{_encode_image.2} parent=1 // pred_check_branch
      %5572 = sbr.rel (0) target = $region113
    $region112: #{_encode_image.2} parent=1 // pred_region
      %5573 = dma.done [#allocation4], 1536
    $region113: #{_encode_image.2} parent=1 // pred_fallthru
      _
    %5574 = vsyncpa [#allocation3], 1
    %5575 = vsyncpa [#allocation6], 1
    %5576 = vsyncpa [#allocation9], 1
    %5577 = vsyncpa [#allocation12], 1
    %5578 = vsyncpa [#allocation15], 1
    %5579 = vsyncpa [#allocation18], 1
    %5580 = vsyncpa [#allocation21], 1
    %5581 = vsyncpa [#allocation4], 1

</llo_original>
